<compile_context>
chip_gen: v7x
topology: tpu7x:2x2x1
jax: 0.10.0
libtpu: 0.0.40
codegen_flags: <defaults>
</compile_context>

<pallas_src>
import functools

import jax
import jax.numpy as jnp
from jax.experimental import pallas as pl
from jax.experimental.pallas import tpu as pltpu


def _round_up(a, m):
    return -(-a // m) * m


# ---------------------------------------------------------------------------
# Fused depthwise(kxk) + pointwise(1x1) kernel.
#   x_ref  : (1, Cin, Hp, Wp)   whole padded NCHW image (VMEM-resident across row tiles)
#   wd_ref : (k*k, Cin, 1, 1)   depthwise taps, tap index = dh*k + dw
#   wp_ref : (Cout, Cin)        pointwise weight
#   b_ref  : (Cout, 1)          pointwise bias with the depthwise bias folded in
#   o_ref  : (1, Cout, th, Wo)  NCHW output row tile (channels on sublanes, W on lanes)
# ---------------------------------------------------------------------------
def _dw_pw_kernel(x_ref, wd_ref, wp_ref, b_ref, o_ref, *,
                  k, stride, th, wo, cin, mxu_dtype):
    i = pl.program_id(1)
    r0 = i * (th * stride)                       # first padded input row of this tile
    if (th * stride) % 8 == 0:
        r0 = pl.multiple_of(r0, 8)

    # Depthwise conv on the VPU, f32 accumulator in (Cin, th, Wo) layout
    # (pixels on lanes, rows on sublanes, channels on the outer dim).
    acc = jnp.zeros((cin, th, wo), jnp.float32)
    if stride == 1:
        # One aligned window read per tile; taps are static slices of the window.
        win = x_ref[0, :, pl.ds(r0, th + k - 1), :].astype(jnp.float32)  # (Cin, th+k-1, Wp)
        for dh in range(k):
            for dw in range(k):
                acc = acc + win[:, dh:dh + th, dw:dw + wo] * wd_ref[dh * k + dw]
    else:
        # TODO(synk): strided VMEM reads on sublane/lane dims may lower to slow gathers;
        # only the stride==1 path (the module default) is tuned.
        for dh in range(k):
            for dw in range(k):
                tap = x_ref[0, :, pl.ds(r0 + dh, th, stride), pl.ds(dw, wo, stride)]
                acc = acc + tap.astype(jnp.float32) * wd_ref[dh * k + dw]

    # Pointwise 1x1 conv on the MXU, NN form per output row:
    #   y[o, w] = sum_c wp[o, c] * acc[c, r, w]   -> (Cout, Wo), already NCHW-layout.
    w = wp_ref[...].astype(mxu_dtype)            # (Cout, Cin)
    b = b_ref[...]                               # (Cout, 1)  broadcast over lanes
    for r in range(th):
        rhs = acc[:, r, :].astype(mxu_dtype)     # (Cin, Wo)
        y = jnp.dot(w, rhs, preferred_element_type=jnp.float32)
        o_ref[0, :, r, :] = (y + b).astype(o_ref.dtype)


# ---------------------------------------------------------------------------
# Wrapper: NCHW in, NCHW out (PyTorch convention).
# ---------------------------------------------------------------------------
def depthwise_conv2d_pallas(x_nchw, wd, bd, wp, bp, *, kernel_size, padding=0, stride=1,
                            target_pixels_per_tile=2048,
                            mxu_dtype=jnp.bfloat16, image_dtype=None):
    N, Cin, H, W = x_nchw.shape
    k = kernel_size
    Cout = wp.shape[0]
    assert wd.shape == (Cin, 1, k, k) and wp.shape[:2] == (Cout, Cin)

    Ho = (H + 2 * padding - k) // stride + 1
    Wo = (W + 2 * padding - k) // stride + 1
    assert Ho > 0 and Wo > 0

    # ---- row-tile selection: multiple of 8, prefer a divisor of Ho (no tail copy),
    #      capped so the f32 accumulator stays within a sane vreg budget. ----
    lane_groups = -(-Wo // 128)
    if Ho <= 8:
        th = Ho
    else:
        cap_rows = 8 * max(1, 16 // max(1, Cin * lane_groups))
        desired = max(8, min(Ho, max(1, target_pixels_per_tile // Wo), cap_rows))
        desired = (desired // 8) * 8
        th = desired
        for cand in range(desired, 7, -8):
            if Ho % cand == 0:
                th = cand
                break
    n_tiles = -(-Ho // th)                      # cdiv: no silently dropped rows
    Ho_pad = n_tiles * th

    # ---- pad once (conv halo + tail rows); stay in NCHW: no layout transpose ----
    Hp = max(H + 2 * padding, (Ho_pad - 1) * stride + k)
    Wp = max(W + 2 * padding, (Wo - 1) * stride + k)
    xp = jnp.pad(x_nchw, ((0, 0), (0, 0),
                          (padding, Hp - H - padding),
                          (padding, Wp - W - padding)))
    if image_dtype is not None:
        xp = xp.astype(image_dtype)

    # ---- parameter prep: taps (k*k, Cin, 1, 1); pointwise (Cout, Cin);
    #      depthwise bias folded into the pointwise bias: wp @ bd + bp ----
    wd_taps = jnp.transpose(wd.reshape(Cin, k * k), (1, 0)).reshape(k * k, Cin, 1, 1)
    wd_taps = wd_taps.astype(jnp.float32)
    wp_mat = wp.reshape(Cout, Cin).astype(jnp.float32)
    b_fold = (wp_mat @ bd.astype(jnp.float32) + bp.astype(jnp.float32)).reshape(Cout, 1)

    # ---- VMEM budget: 2x resident image + 2x output tile + params + headroom ----
    img_bytes = Cin * _round_up(Hp, 8) * _round_up(Wp, 128) * xp.dtype.itemsize
    out_bytes = _round_up(Cout, 8) * _round_up(th, 8) * _round_up(Wo, 128) * 4
    vmem_limit = int(min(max(2 * img_bytes + 2 * out_bytes + (4 << 20), 32 << 20), 120 << 20))
    # TODO(synk): for images whose resident padded block nears the VMEM limit (v7x: 64 MiB/TC),
    # switch the image input to memory_space=pl.ANY with manually double-buffered row slabs.

    kernel = functools.partial(_dw_pw_kernel, k=k, stride=stride, th=th, wo=Wo,
                               cin=Cin, mxu_dtype=mxu_dtype)

    out = pl.pallas_call(
        kernel,
        out_shape=jax.ShapeDtypeStruct((N, Cout, Ho_pad, Wo), jnp.float32),
        grid_spec=pltpu.PrefetchScalarGridSpec(
            num_scalar_prefetch=0,
            grid=(N, n_tiles),
            in_specs=[
                # Whole padded image; constant block index along the row-tile axis keeps
                # it VMEM-resident (DMA'd once per image).
                pl.BlockSpec((1, Cin, Hp, Wp), lambda n, i: (n, 0, 0, 0)),
                pl.BlockSpec((k * k, Cin, 1, 1), lambda n, i: (0, 0, 0, 0)),
                pl.BlockSpec((Cout, Cin), lambda n, i: (0, 0)),
                pl.BlockSpec((Cout, 1), lambda n, i: (0, 0)),
            ],
            out_specs=pl.BlockSpec((1, Cout, th, Wo), lambda n, i: (n, 0, i, 0)),
        ),
        compiler_params=pltpu.CompilerParams(
            dimension_semantics=("parallel", "parallel"),
            vmem_limit_bytes=vmem_limit),
    )(xp, wd_taps, wp_mat, b_fold)

    return out if Ho_pad == Ho else out[:, :, :Ho, :]


# ---------------------------------------------------------------------------
# Pure-JAX reference (mirrors the PyTorch module: depthwise conv -> 1x1 conv).
# ---------------------------------------------------------------------------
def reference_forward(x, wd, bd, wp, bp, *, padding, stride):
    hp = jax.lax.Precision.HIGHEST
    Cin = x.shape[1]
    y = jax.lax.conv_general_dilated(
        x, wd, window_strides=(stride, stride),
        padding=((padding, padding), (padding, padding)),
        dimension_numbers=('NCHW', 'OIHW', 'NCHW'),
        feature_group_count=Cin, precision=hp)
    y = y + bd[None, :, None, None]
    z = jnp.einsum('nchw,oc->nohw', y, wp.reshape(wp.shape[0], Cin), precision=hp)
    return z + bp[None, :, None, None]


if __name__ == "__main__":
    key = jax.random.PRNGKey(0)
    kx, k1, k2, k3, k4, kx2 = jax.random.split(key, 6)

    # Shapes consistent with the module: dim_in=8, dim_out=16, kernel_size=3,
    # padding=1, stride=1, batch=2, spatial=32.
    N, Cin, Cout, H, W = 2, 8, 16, 32, 32
    ksz, pad, stride = 3, 1, 1

    x = jax.random.normal(kx, (N, Cin, H, W), jnp.float32)
    wd = 0.3 * jax.random.normal(k1, (Cin, 1, ksz, ksz), jnp.float32)   # depthwise weight
    bd = 0.1 * jax.random.normal(k2, (Cin,), jnp.float32)               # depthwise bias
    wp = 0.3 * jax.random.normal(k3, (Cout, Cin, 1, 1), jnp.float32)    # pointwise weight
    bp = 0.1 * jax.random.normal(k4, (Cout,), jnp.float32)              # pointwise bias

    ref = reference_forward(x, wd, bd, wp, bp, padding=pad, stride=stride)

    # 1) f32 everywhere (strict check); divisor-friendly tiles -> multi-tile, no tail.
    out = depthwise_conv2d_pallas(x, wd, bd, wp, bp, kernel_size=ksz, padding=pad,
                                  stride=stride, mxu_dtype=jnp.float32)
    out = jax.block_until_ready(out)
    assert out.shape == ref.shape == (N, Cout, H, W), (out.shape, ref.shape)
    err = float(jnp.max(jnp.abs(out - ref)))
    assert jnp.allclose(out, ref, atol=1e-2, rtol=1e-2), err

    # 2) v6e/v7x knobs: bf16 image + bf16 MXU operands, f32 accumulation.
    out_bf = depthwise_conv2d_pallas(x, wd, bd, wp, bp, kernel_size=ksz, padding=pad,
                                     stride=stride, image_dtype=jnp.bfloat16,
                                     mxu_dtype=jnp.bfloat16)
    out_bf = jax.block_until_ready(out_bf)
    err_bf = float(jnp.max(jnp.abs(out_bf - ref)))
    assert jnp.allclose(out_bf, ref, atol=6e-2, rtol=6e-2), err_bf

    # 3) Tail path: Ho not divisible by the tile height (small tiles forced).
    H3 = 30
    x3 = jax.random.normal(kx2, (1, Cin, H3, W), jnp.float32)
    ref3 = reference_forward(x3, wd, bd, wp, bp, padding=pad, stride=stride)
    out3 = depthwise_conv2d_pallas(x3, wd, bd, wp, bp, kernel_size=ksz, padding=pad,
                                   stride=stride, target_pixels_per_tile=128,
                                   mxu_dtype=jnp.float32)
    out3 = jax.block_until_ready(out3)
    assert out3.shape == ref3.shape, (out3.shape, ref3.shape)
    err3 = float(jnp.max(jnp.abs(out3 - ref3)))
    assert jnp.allclose(out3, ref3, atol=1e-2, rtol=1e-2), err3

    print("KERNEL_OK")
</pallas_src>

<mosaic_0001>
module attributes {stable_mosaic.version = 11 : i64} {
  func.func @_dw_pw_kernel(%arg0: i32, %arg1: i32, %arg2: memref<1x8x34x34xf32, #tpu.memory_space<vmem>>, %arg3: memref<9x8x1x1xf32, #tpu.memory_space<vmem>>, %arg4: memref<16x8xf32, #tpu.memory_space<vmem>>, %arg5: memref<16x1xf32, #tpu.memory_space<vmem>>, %arg6: memref<1x16x16x32xf32, #tpu.memory_space<vmem>>) attributes {dimension_semantics = [#tpu.dimension_semantics<parallel>, #tpu.dimension_semantics<parallel>], iteration_bounds = array<i64: 2, 2>, scalar_prefetch = 0 : i64, scratch_operands = 0 : i64, tpu.core_type = #tpu.core_type<tc>, window_params = [{transform_indices = @transform_0, window_bounds = array<i64: 1, 8, 34, 34>}, {pipeline_mode = #tpu.pipeline_mode<synchronous>, transform_indices = @transform_1, window_bounds = array<i64: 9, 8, 1, 1>}, {pipeline_mode = #tpu.pipeline_mode<synchronous>, transform_indices = @transform_2, window_bounds = array<i64: 16, 8>}, {pipeline_mode = #tpu.pipeline_mode<synchronous>, transform_indices = @transform_3, window_bounds = array<i64: 16, 1>}, {transform_indices = @transform_4, window_bounds = array<i64: 1, 16, 16, 32>}]} {
    %c16_i32 = arith.constant 16 : i32
    %0 = arith.muli %arg1, %c16_i32 : i32
    %1 = tpu.assume_multiple %0, 8 : i32
    %cst = arith.constant 0.000000e+00 : f32
    %2 = vector.broadcast %cst : f32 to vector<8x16x32xf32>
    %c0 = arith.constant 0 : index
    %c0_0 = arith.constant 0 : index
    %3 = arith.index_cast %1 : i32 to index
    %c0_1 = arith.constant 0 : index
    %4 = vector.load %arg2[%c0, %c0_0, %3, %c0_1] : memref<1x8x34x34xf32, #tpu.memory_space<vmem>>, vector<1x8x18x34xf32>
    %5 = vector.shape_cast %4 : vector<1x8x18x34xf32> to vector<8x18x34xf32>
    %6 = vector.extract_strided_slice %5 {offsets = [0, 0, 0], sizes = [8, 16, 32], strides = [1, 1, 1]} : vector<8x18x34xf32> to vector<8x16x32xf32>
    %c0_2 = arith.constant 0 : index
    %c0_3 = arith.constant 0 : index
    %c0_4 = arith.constant 0 : index
    %c0_5 = arith.constant 0 : index
    %7 = vector.load %arg3[%c0_2, %c0_3, %c0_4, %c0_5] : memref<9x8x1x1xf32, #tpu.memory_space<vmem>>, vector<1x8x1x1xf32>
    %8 = vector.shape_cast %7 : vector<1x8x1x1xf32> to vector<8x1x1xf32>
    %9 = vector.broadcast %8 : vector<8x1x1xf32> to vector<8x16x32xf32>
    %10 = arith.mulf %6, %9 : vector<8x16x32xf32>
    %11 = arith.addf %2, %10 : vector<8x16x32xf32>
    %12 = vector.extract_strided_slice %5 {offsets = [0, 0, 1], sizes = [8, 16, 32], strides = [1, 1, 1]} : vector<8x18x34xf32> to vector<8x16x32xf32>
    %c1 = arith.constant 1 : index
    %c0_6 = arith.constant 0 : index
    %c0_7 = arith.constant 0 : index
    %c0_8 = arith.constant 0 : index
    %13 = vector.load %arg3[%c1, %c0_6, %c0_7, %c0_8] : memref<9x8x1x1xf32, #tpu.memory_space<vmem>>, vector<1x8x1x1xf32>
    %14 = vector.shape_cast %13 : vector<1x8x1x1xf32> to vector<8x1x1xf32>
    %15 = vector.broadcast %14 : vector<8x1x1xf32> to vector<8x16x32xf32>
    %16 = arith.mulf %12, %15 : vector<8x16x32xf32>
    %17 = arith.addf %11, %16 : vector<8x16x32xf32>
    %18 = vector.extract_strided_slice %5 {offsets = [0, 0, 2], sizes = [8, 16, 32], strides = [1, 1, 1]} : vector<8x18x34xf32> to vector<8x16x32xf32>
    %c2 = arith.constant 2 : index
    %c0_9 = arith.constant 0 : index
    %c0_10 = arith.constant 0 : index
    %c0_11 = arith.constant 0 : index
    %19 = vector.load %arg3[%c2, %c0_9, %c0_10, %c0_11] : memref<9x8x1x1xf32, #tpu.memory_space<vmem>>, vector<1x8x1x1xf32>
    %20 = vector.shape_cast %19 : vector<1x8x1x1xf32> to vector<8x1x1xf32>
    %21 = vector.broadcast %20 : vector<8x1x1xf32> to vector<8x16x32xf32>
    %22 = arith.mulf %18, %21 : vector<8x16x32xf32>
    %23 = arith.addf %17, %22 : vector<8x16x32xf32>
    %24 = vector.extract_strided_slice %5 {offsets = [0, 1, 0], sizes = [8, 16, 32], strides = [1, 1, 1]} : vector<8x18x34xf32> to vector<8x16x32xf32>
    %c3 = arith.constant 3 : index
    %c0_12 = arith.constant 0 : index
    %c0_13 = arith.constant 0 : index
    %c0_14 = arith.constant 0 : index
    %25 = vector.load %arg3[%c3, %c0_12, %c0_13, %c0_14] : memref<9x8x1x1xf32, #tpu.memory_space<vmem>>, vector<1x8x1x1xf32>
    %26 = vector.shape_cast %25 : vector<1x8x1x1xf32> to vector<8x1x1xf32>
    %27 = vector.broadcast %26 : vector<8x1x1xf32> to vector<8x16x32xf32>
    %28 = arith.mulf %24, %27 : vector<8x16x32xf32>
    %29 = arith.addf %23, %28 : vector<8x16x32xf32>
    %30 = vector.extract_strided_slice %5 {offsets = [0, 1, 1], sizes = [8, 16, 32], strides = [1, 1, 1]} : vector<8x18x34xf32> to vector<8x16x32xf32>
    %c4 = arith.constant 4 : index
    %c0_15 = arith.constant 0 : index
    %c0_16 = arith.constant 0 : index
    %c0_17 = arith.constant 0 : index
    %31 = vector.load %arg3[%c4, %c0_15, %c0_16, %c0_17] : memref<9x8x1x1xf32, #tpu.memory_space<vmem>>, vector<1x8x1x1xf32>
    %32 = vector.shape_cast %31 : vector<1x8x1x1xf32> to vector<8x1x1xf32>
    %33 = vector.broadcast %32 : vector<8x1x1xf32> to vector<8x16x32xf32>
    %34 = arith.mulf %30, %33 : vector<8x16x32xf32>
    %35 = arith.addf %29, %34 : vector<8x16x32xf32>
    %36 = vector.extract_strided_slice %5 {offsets = [0, 1, 2], sizes = [8, 16, 32], strides = [1, 1, 1]} : vector<8x18x34xf32> to vector<8x16x32xf32>
    %c5 = arith.constant 5 : index
    %c0_18 = arith.constant 0 : index
    %c0_19 = arith.constant 0 : index
    %c0_20 = arith.constant 0 : index
    %37 = vector.load %arg3[%c5, %c0_18, %c0_19, %c0_20] : memref<9x8x1x1xf32, #tpu.memory_space<vmem>>, vector<1x8x1x1xf32>
    %38 = vector.shape_cast %37 : vector<1x8x1x1xf32> to vector<8x1x1xf32>
    %39 = vector.broadcast %38 : vector<8x1x1xf32> to vector<8x16x32xf32>
    %40 = arith.mulf %36, %39 : vector<8x16x32xf32>
    %41 = arith.addf %35, %40 : vector<8x16x32xf32>
    %42 = vector.extract_strided_slice %5 {offsets = [0, 2, 0], sizes = [8, 16, 32], strides = [1, 1, 1]} : vector<8x18x34xf32> to vector<8x16x32xf32>
    %c6 = arith.constant 6 : index
    %c0_21 = arith.constant 0 : index
    %c0_22 = arith.constant 0 : index
    %c0_23 = arith.constant 0 : index
    %43 = vector.load %arg3[%c6, %c0_21, %c0_22, %c0_23] : memref<9x8x1x1xf32, #tpu.memory_space<vmem>>, vector<1x8x1x1xf32>
    %44 = vector.shape_cast %43 : vector<1x8x1x1xf32> to vector<8x1x1xf32>
    %45 = vector.broadcast %44 : vector<8x1x1xf32> to vector<8x16x32xf32>
    %46 = arith.mulf %42, %45 : vector<8x16x32xf32>
    %47 = arith.addf %41, %46 : vector<8x16x32xf32>
    %48 = vector.extract_strided_slice %5 {offsets = [0, 2, 1], sizes = [8, 16, 32], strides = [1, 1, 1]} : vector<8x18x34xf32> to vector<8x16x32xf32>
    %c7 = arith.constant 7 : index
    %c0_24 = arith.constant 0 : index
    %c0_25 = arith.constant 0 : index
    %c0_26 = arith.constant 0 : index
    %49 = vector.load %arg3[%c7, %c0_24, %c0_25, %c0_26] : memref<9x8x1x1xf32, #tpu.memory_space<vmem>>, vector<1x8x1x1xf32>
    %50 = vector.shape_cast %49 : vector<1x8x1x1xf32> to vector<8x1x1xf32>
    %51 = vector.broadcast %50 : vector<8x1x1xf32> to vector<8x16x32xf32>
    %52 = arith.mulf %48, %51 : vector<8x16x32xf32>
    %53 = arith.addf %47, %52 : vector<8x16x32xf32>
    %54 = vector.extract_strided_slice %5 {offsets = [0, 2, 2], sizes = [8, 16, 32], strides = [1, 1, 1]} : vector<8x18x34xf32> to vector<8x16x32xf32>
    %c8 = arith.constant 8 : index
    %c0_27 = arith.constant 0 : index
    %c0_28 = arith.constant 0 : index
    %c0_29 = arith.constant 0 : index
    %55 = vector.load %arg3[%c8, %c0_27, %c0_28, %c0_29] : memref<9x8x1x1xf32, #tpu.memory_space<vmem>>, vector<1x8x1x1xf32>
    %56 = vector.shape_cast %55 : vector<1x8x1x1xf32> to vector<8x1x1xf32>
    %57 = vector.broadcast %56 : vector<8x1x1xf32> to vector<8x16x32xf32>
    %58 = arith.mulf %54, %57 : vector<8x16x32xf32>
    %59 = arith.addf %53, %58 : vector<8x16x32xf32>
    %c0_30 = arith.constant 0 : index
    %c0_31 = arith.constant 0 : index
    %60 = vector.load %arg4[%c0_30, %c0_31] : memref<16x8xf32, #tpu.memory_space<vmem>>, vector<16x8xf32>
    %c0_32 = arith.constant 0 : index
    %c0_33 = arith.constant 0 : index
    %61 = vector.load %arg5[%c0_32, %c0_33] : memref<16x1xf32, #tpu.memory_space<vmem>>, vector<16x1xf32>
    %62 = vector.extract_strided_slice %59 {offsets = [0, 0, 0], sizes = [8, 1, 32], strides = [1, 1, 1]} : vector<8x16x32xf32> to vector<8x1x32xf32>
    %63 = vector.shape_cast %62 : vector<8x1x32xf32> to vector<8x32xf32>
    %cst_34 = arith.constant dense<0.000000e+00> : vector<16x32xf32>
    %64 = tpu.matmul %60, %63, %cst_34 {dimension_numbers = #tpu.dot_dimension_numbers<[1], [0], [0], [1], [0, 0, 1, 1], [], []>} : vector<16x8xf32>, vector<8x32xf32>, vector<16x32xf32> -> vector<16x32xf32>
    %65 = vector.broadcast %61 : vector<16x1xf32> to vector<16x32xf32>
    %66 = arith.addf %64, %65 : vector<16x32xf32>
    %c0_35 = arith.constant 0 : index
    %c0_36 = arith.constant 0 : index
    %c0_37 = arith.constant 0 : index
    %c0_38 = arith.constant 0 : index
    %67 = vector.load %arg6[%c0_35, %c0_36, %c0_37, %c0_38] : memref<1x16x16x32xf32, #tpu.memory_space<vmem>>, vector<1x16x1x32xf32>
    %68 = vector.shape_cast %67 : vector<1x16x1x32xf32> to vector<16x32xf32>
    %69 = vector.shape_cast %66 : vector<16x32xf32> to vector<1x16x1x32xf32>
    tpu.vector_store %arg6[%c0_35, %c0_36, %c0_37, %c0_38], %69 {strides = array<i32>} : memref<1x16x16x32xf32, #tpu.memory_space<vmem>>, vector<1x16x1x32xf32>,
    %70 = vector.extract_strided_slice %59 {offsets = [0, 1, 0], sizes = [8, 1, 32], strides = [1, 1, 1]} : vector<8x16x32xf32> to vector<8x1x32xf32>
    %71 = vector.shape_cast %70 : vector<8x1x32xf32> to vector<8x32xf32>
    %cst_39 = arith.constant dense<0.000000e+00> : vector<16x32xf32>
    %72 = tpu.matmul %60, %71, %cst_39 {dimension_numbers = #tpu.dot_dimension_numbers<[1], [0], [0], [1], [0, 0, 1, 1], [], []>} : vector<16x8xf32>, vector<8x32xf32>, vector<16x32xf32> -> vector<16x32xf32>
    %73 = vector.broadcast %61 : vector<16x1xf32> to vector<16x32xf32>
    %74 = arith.addf %72, %73 : vector<16x32xf32>
    %c0_40 = arith.constant 0 : index
    %c0_41 = arith.constant 0 : index
    %c1_42 = arith.constant 1 : index
    %c0_43 = arith.constant 0 : index
    %75 = vector.load %arg6[%c0_40, %c0_41, %c1_42, %c0_43] : memref<1x16x16x32xf32, #tpu.memory_space<vmem>>, vector<1x16x1x32xf32>
    %76 = vector.shape_cast %75 : vector<1x16x1x32xf32> to vector<16x32xf32>
    %77 = vector.shape_cast %74 : vector<16x32xf32> to vector<1x16x1x32xf32>
    tpu.vector_store %arg6[%c0_40, %c0_41, %c1_42, %c0_43], %77 {strides = array<i32>} : memref<1x16x16x32xf32, #tpu.memory_space<vmem>>, vector<1x16x1x32xf32>,
    %78 = vector.extract_strided_slice %59 {offsets = [0, 2, 0], sizes = [8, 1, 32], strides = [1, 1, 1]} : vector<8x16x32xf32> to vector<8x1x32xf32>
    %79 = vector.shape_cast %78 : vector<8x1x32xf32> to vector<8x32xf32>
    %cst_44 = arith.constant dense<0.000000e+00> : vector<16x32xf32>
    %80 = tpu.matmul %60, %79, %cst_44 {dimension_numbers = #tpu.dot_dimension_numbers<[1], [0], [0], [1], [0, 0, 1, 1], [], []>} : vector<16x8xf32>, vector<8x32xf32>, vector<16x32xf32> -> vector<16x32xf32>
    %81 = vector.broadcast %61 : vector<16x1xf32> to vector<16x32xf32>
    %82 = arith.addf %80, %81 : vector<16x32xf32>
    %c0_45 = arith.constant 0 : index
    %c0_46 = arith.constant 0 : index
    %c2_47 = arith.constant 2 : index
    %c0_48 = arith.constant 0 : index
    %83 = vector.load %arg6[%c0_45, %c0_46, %c2_47, %c0_48] : memref<1x16x16x32xf32, #tpu.memory_space<vmem>>, vector<1x16x1x32xf32>
    %84 = vector.shape_cast %83 : vector<1x16x1x32xf32> to vector<16x32xf32>
    %85 = vector.shape_cast %82 : vector<16x32xf32> to vector<1x16x1x32xf32>
    tpu.vector_store %arg6[%c0_45, %c0_46, %c2_47, %c0_48], %85 {strides = array<i32>} : memref<1x16x16x32xf32, #tpu.memory_space<vmem>>, vector<1x16x1x32xf32>,
    %86 = vector.extract_strided_slice %59 {offsets = [0, 3, 0], sizes = [8, 1, 32], strides = [1, 1, 1]} : vector<8x16x32xf32> to vector<8x1x32xf32>
    %87 = vector.shape_cast %86 : vector<8x1x32xf32> to vector<8x32xf32>
    %cst_49 = arith.constant dense<0.000000e+00> : vector<16x32xf32>
    %88 = tpu.matmul %60, %87, %cst_49 {dimension_numbers = #tpu.dot_dimension_numbers<[1], [0], [0], [1], [0, 0, 1, 1], [], []>} : vector<16x8xf32>, vector<8x32xf32>, vector<16x32xf32> -> vector<16x32xf32>
    %89 = vector.broadcast %61 : vector<16x1xf32> to vector<16x32xf32>
    %90 = arith.addf %88, %89 : vector<16x32xf32>
    %c0_50 = arith.constant 0 : index
    %c0_51 = arith.constant 0 : index
    %c3_52 = arith.constant 3 : index
    %c0_53 = arith.constant 0 : index
    %91 = vector.load %arg6[%c0_50, %c0_51, %c3_52, %c0_53] : memref<1x16x16x32xf32, #tpu.memory_space<vmem>>, vector<1x16x1x32xf32>
    %92 = vector.shape_cast %91 : vector<1x16x1x32xf32> to vector<16x32xf32>
    %93 = vector.shape_cast %90 : vector<16x32xf32> to vector<1x16x1x32xf32>
    tpu.vector_store %arg6[%c0_50, %c0_51, %c3_52, %c0_53], %93 {strides = array<i32>} : memref<1x16x16x32xf32, #tpu.memory_space<vmem>>, vector<1x16x1x32xf32>,
    %94 = vector.extract_strided_slice %59 {offsets = [0, 4, 0], sizes = [8, 1, 32], strides = [1, 1, 1]} : vector<8x16x32xf32> to vector<8x1x32xf32>
    %95 = vector.shape_cast %94 : vector<8x1x32xf32> to vector<8x32xf32>
    %cst_54 = arith.constant dense<0.000000e+00> : vector<16x32xf32>
    %96 = tpu.matmul %60, %95, %cst_54 {dimension_numbers = #tpu.dot_dimension_numbers<[1], [0], [0], [1], [0, 0, 1, 1], [], []>} : vector<16x8xf32>, vector<8x32xf32>, vector<16x32xf32> -> vector<16x32xf32>
    %97 = vector.broadcast %61 : vector<16x1xf32> to vector<16x32xf32>
    %98 = arith.addf %96, %97 : vector<16x32xf32>
    %c0_55 = arith.constant 0 : index
    %c0_56 = arith.constant 0 : index
    %c4_57 = arith.constant 4 : index
    %c0_58 = arith.constant 0 : index
    %99 = vector.load %arg6[%c0_55, %c0_56, %c4_57, %c0_58] : memref<1x16x16x32xf32, #tpu.memory_space<vmem>>, vector<1x16x1x32xf32>
    %100 = vector.shape_cast %99 : vector<1x16x1x32xf32> to vector<16x32xf32>
    %101 = vector.shape_cast %98 : vector<16x32xf32> to vector<1x16x1x32xf32>
    tpu.vector_store %arg6[%c0_55, %c0_56, %c4_57, %c0_58], %101 {strides = array<i32>} : memref<1x16x16x32xf32, #tpu.memory_space<vmem>>, vector<1x16x1x32xf32>,
    %102 = vector.extract_strided_slice %59 {offsets = [0, 5, 0], sizes = [8, 1, 32], strides = [1, 1, 1]} : vector<8x16x32xf32> to vector<8x1x32xf32>
    %103 = vector.shape_cast %102 : vector<8x1x32xf32> to vector<8x32xf32>
    %cst_59 = arith.constant dense<0.000000e+00> : vector<16x32xf32>
    %104 = tpu.matmul %60, %103, %cst_59 {dimension_numbers = #tpu.dot_dimension_numbers<[1], [0], [0], [1], [0, 0, 1, 1], [], []>} : vector<16x8xf32>, vector<8x32xf32>, vector<16x32xf32> -> vector<16x32xf32>
    %105 = vector.broadcast %61 : vector<16x1xf32> to vector<16x32xf32>
    %106 = arith.addf %104, %105 : vector<16x32xf32>
    %c0_60 = arith.constant 0 : index
    %c0_61 = arith.constant 0 : index
    %c5_62 = arith.constant 5 : index
    %c0_63 = arith.constant 0 : index
    %107 = vector.load %arg6[%c0_60, %c0_61, %c5_62, %c0_63] : memref<1x16x16x32xf32, #tpu.memory_space<vmem>>, vector<1x16x1x32xf32>
    %108 = vector.shape_cast %107 : vector<1x16x1x32xf32> to vector<16x32xf32>
    %109 = vector.shape_cast %106 : vector<16x32xf32> to vector<1x16x1x32xf32>
    tpu.vector_store %arg6[%c0_60, %c0_61, %c5_62, %c0_63], %109 {strides = array<i32>} : memref<1x16x16x32xf32, #tpu.memory_space<vmem>>, vector<1x16x1x32xf32>,
    %110 = vector.extract_strided_slice %59 {offsets = [0, 6, 0], sizes = [8, 1, 32], strides = [1, 1, 1]} : vector<8x16x32xf32> to vector<8x1x32xf32>
    %111 = vector.shape_cast %110 : vector<8x1x32xf32> to vector<8x32xf32>
    %cst_64 = arith.constant dense<0.000000e+00> : vector<16x32xf32>
    %112 = tpu.matmul %60, %111, %cst_64 {dimension_numbers = #tpu.dot_dimension_numbers<[1], [0], [0], [1], [0, 0, 1, 1], [], []>} : vector<16x8xf32>, vector<8x32xf32>, vector<16x32xf32> -> vector<16x32xf32>
    %113 = vector.broadcast %61 : vector<16x1xf32> to vector<16x32xf32>
    %114 = arith.addf %112, %113 : vector<16x32xf32>
    %c0_65 = arith.constant 0 : index
    %c0_66 = arith.constant 0 : index
    %c6_67 = arith.constant 6 : index
    %c0_68 = arith.constant 0 : index
    %115 = vector.load %arg6[%c0_65, %c0_66, %c6_67, %c0_68] : memref<1x16x16x32xf32, #tpu.memory_space<vmem>>, vector<1x16x1x32xf32>
    %116 = vector.shape_cast %115 : vector<1x16x1x32xf32> to vector<16x32xf32>
    %117 = vector.shape_cast %114 : vector<16x32xf32> to vector<1x16x1x32xf32>
    tpu.vector_store %arg6[%c0_65, %c0_66, %c6_67, %c0_68], %117 {strides = array<i32>} : memref<1x16x16x32xf32, #tpu.memory_space<vmem>>, vector<1x16x1x32xf32>,
    %118 = vector.extract_strided_slice %59 {offsets = [0, 7, 0], sizes = [8, 1, 32], strides = [1, 1, 1]} : vector<8x16x32xf32> to vector<8x1x32xf32>
    %119 = vector.shape_cast %118 : vector<8x1x32xf32> to vector<8x32xf32>
    %cst_69 = arith.constant dense<0.000000e+00> : vector<16x32xf32>
    %120 = tpu.matmul %60, %119, %cst_69 {dimension_numbers = #tpu.dot_dimension_numbers<[1], [0], [0], [1], [0, 0, 1, 1], [], []>} : vector<16x8xf32>, vector<8x32xf32>, vector<16x32xf32> -> vector<16x32xf32>
    %121 = vector.broadcast %61 : vector<16x1xf32> to vector<16x32xf32>
    %122 = arith.addf %120, %121 : vector<16x32xf32>
    %c0_70 = arith.constant 0 : index
    %c0_71 = arith.constant 0 : index
    %c7_72 = arith.constant 7 : index
    %c0_73 = arith.constant 0 : index
    %123 = vector.load %arg6[%c0_70, %c0_71, %c7_72, %c0_73] : memref<1x16x16x32xf32, #tpu.memory_space<vmem>>, vector<1x16x1x32xf32>
    %124 = vector.shape_cast %123 : vector<1x16x1x32xf32> to vector<16x32xf32>
    %125 = vector.shape_cast %122 : vector<16x32xf32> to vector<1x16x1x32xf32>
    tpu.vector_store %arg6[%c0_70, %c0_71, %c7_72, %c0_73], %125 {strides = array<i32>} : memref<1x16x16x32xf32, #tpu.memory_space<vmem>>, vector<1x16x1x32xf32>,
    %126 = vector.extract_strided_slice %59 {offsets = [0, 8, 0], sizes = [8, 1, 32], strides = [1, 1, 1]} : vector<8x16x32xf32> to vector<8x1x32xf32>
    %127 = vector.shape_cast %126 : vector<8x1x32xf32> to vector<8x32xf32>
    %cst_74 = arith.constant dense<0.000000e+00> : vector<16x32xf32>
    %128 = tpu.matmul %60, %127, %cst_74 {dimension_numbers = #tpu.dot_dimension_numbers<[1], [0], [0], [1], [0, 0, 1, 1], [], []>} : vector<16x8xf32>, vector<8x32xf32>, vector<16x32xf32> -> vector<16x32xf32>
    %129 = vector.broadcast %61 : vector<16x1xf32> to vector<16x32xf32>
    %130 = arith.addf %128, %129 : vector<16x32xf32>
    %c0_75 = arith.constant 0 : index
    %c0_76 = arith.constant 0 : index
    %c8_77 = arith.constant 8 : index
    %c0_78 = arith.constant 0 : index
    %131 = vector.load %arg6[%c0_75, %c0_76, %c8_77, %c0_78] : memref<1x16x16x32xf32, #tpu.memory_space<vmem>>, vector<1x16x1x32xf32>
    %132 = vector.shape_cast %131 : vector<1x16x1x32xf32> to vector<16x32xf32>
    %133 = vector.shape_cast %130 : vector<16x32xf32> to vector<1x16x1x32xf32>
    tpu.vector_store %arg6[%c0_75, %c0_76, %c8_77, %c0_78], %133 {strides = array<i32>} : memref<1x16x16x32xf32, #tpu.memory_space<vmem>>, vector<1x16x1x32xf32>,
    %134 = vector.extract_strided_slice %59 {offsets = [0, 9, 0], sizes = [8, 1, 32], strides = [1, 1, 1]} : vector<8x16x32xf32> to vector<8x1x32xf32>
    %135 = vector.shape_cast %134 : vector<8x1x32xf32> to vector<8x32xf32>
    %cst_79 = arith.constant dense<0.000000e+00> : vector<16x32xf32>
    %136 = tpu.matmul %60, %135, %cst_79 {dimension_numbers = #tpu.dot_dimension_numbers<[1], [0], [0], [1], [0, 0, 1, 1], [], []>} : vector<16x8xf32>, vector<8x32xf32>, vector<16x32xf32> -> vector<16x32xf32>
    %137 = vector.broadcast %61 : vector<16x1xf32> to vector<16x32xf32>
    %138 = arith.addf %136, %137 : vector<16x32xf32>
    %c0_80 = arith.constant 0 : index
    %c0_81 = arith.constant 0 : index
    %c9 = arith.constant 9 : index
    %c0_82 = arith.constant 0 : index
    %139 = vector.load %arg6[%c0_80, %c0_81, %c9, %c0_82] : memref<1x16x16x32xf32, #tpu.memory_space<vmem>>, vector<1x16x1x32xf32>
    %140 = vector.shape_cast %139 : vector<1x16x1x32xf32> to vector<16x32xf32>
    %141 = vector.shape_cast %138 : vector<16x32xf32> to vector<1x16x1x32xf32>
    tpu.vector_store %arg6[%c0_80, %c0_81, %c9, %c0_82], %141 {strides = array<i32>} : memref<1x16x16x32xf32, #tpu.memory_space<vmem>>, vector<1x16x1x32xf32>,
    %142 = vector.extract_strided_slice %59 {offsets = [0, 10, 0], sizes = [8, 1, 32], strides = [1, 1, 1]} : vector<8x16x32xf32> to vector<8x1x32xf32>
    %143 = vector.shape_cast %142 : vector<8x1x32xf32> to vector<8x32xf32>
    %cst_83 = arith.constant dense<0.000000e+00> : vector<16x32xf32>
    %144 = tpu.matmul %60, %143, %cst_83 {dimension_numbers = #tpu.dot_dimension_numbers<[1], [0], [0], [1], [0, 0, 1, 1], [], []>} : vector<16x8xf32>, vector<8x32xf32>, vector<16x32xf32> -> vector<16x32xf32>
    %145 = vector.broadcast %61 : vector<16x1xf32> to vector<16x32xf32>
    %146 = arith.addf %144, %145 : vector<16x32xf32>
    %c0_84 = arith.constant 0 : index
    %c0_85 = arith.constant 0 : index
    %c10 = arith.constant 10 : index
    %c0_86 = arith.constant 0 : index
    %147 = vector.load %arg6[%c0_84, %c0_85, %c10, %c0_86] : memref<1x16x16x32xf32, #tpu.memory_space<vmem>>, vector<1x16x1x32xf32>
    %148 = vector.shape_cast %147 : vector<1x16x1x32xf32> to vector<16x32xf32>
    %149 = vector.shape_cast %146 : vector<16x32xf32> to vector<1x16x1x32xf32>
    tpu.vector_store %arg6[%c0_84, %c0_85, %c10, %c0_86], %149 {strides = array<i32>} : memref<1x16x16x32xf32, #tpu.memory_space<vmem>>, vector<1x16x1x32xf32>,
    %150 = vector.extract_strided_slice %59 {offsets = [0, 11, 0], sizes = [8, 1, 32], strides = [1, 1, 1]} : vector<8x16x32xf32> to vector<8x1x32xf32>
    %151 = vector.shape_cast %150 : vector<8x1x32xf32> to vector<8x32xf32>
    %cst_87 = arith.constant dense<0.000000e+00> : vector<16x32xf32>
    %152 = tpu.matmul %60, %151, %cst_87 {dimension_numbers = #tpu.dot_dimension_numbers<[1], [0], [0], [1], [0, 0, 1, 1], [], []>} : vector<16x8xf32>, vector<8x32xf32>, vector<16x32xf32> -> vector<16x32xf32>
    %153 = vector.broadcast %61 : vector<16x1xf32> to vector<16x32xf32>
    %154 = arith.addf %152, %153 : vector<16x32xf32>
    %c0_88 = arith.constant 0 : index
    %c0_89 = arith.constant 0 : index
    %c11 = arith.constant 11 : index
    %c0_90 = arith.constant 0 : index
    %155 = vector.load %arg6[%c0_88, %c0_89, %c11, %c0_90] : memref<1x16x16x32xf32, #tpu.memory_space<vmem>>, vector<1x16x1x32xf32>
    %156 = vector.shape_cast %155 : vector<1x16x1x32xf32> to vector<16x32xf32>
    %157 = vector.shape_cast %154 : vector<16x32xf32> to vector<1x16x1x32xf32>
    tpu.vector_store %arg6[%c0_88, %c0_89, %c11, %c0_90], %157 {strides = array<i32>} : memref<1x16x16x32xf32, #tpu.memory_space<vmem>>, vector<1x16x1x32xf32>,
    %158 = vector.extract_strided_slice %59 {offsets = [0, 12, 0], sizes = [8, 1, 32], strides = [1, 1, 1]} : vector<8x16x32xf32> to vector<8x1x32xf32>
    %159 = vector.shape_cast %158 : vector<8x1x32xf32> to vector<8x32xf32>
    %cst_91 = arith.constant dense<0.000000e+00> : vector<16x32xf32>
    %160 = tpu.matmul %60, %159, %cst_91 {dimension_numbers = #tpu.dot_dimension_numbers<[1], [0], [0], [1], [0, 0, 1, 1], [], []>} : vector<16x8xf32>, vector<8x32xf32>, vector<16x32xf32> -> vector<16x32xf32>
    %161 = vector.broadcast %61 : vector<16x1xf32> to vector<16x32xf32>
    %162 = arith.addf %160, %161 : vector<16x32xf32>
    %c0_92 = arith.constant 0 : index
    %c0_93 = arith.constant 0 : index
    %c12 = arith.constant 12 : index
    %c0_94 = arith.constant 0 : index
    %163 = vector.load %arg6[%c0_92, %c0_93, %c12, %c0_94] : memref<1x16x16x32xf32, #tpu.memory_space<vmem>>, vector<1x16x1x32xf32>
    %164 = vector.shape_cast %163 : vector<1x16x1x32xf32> to vector<16x32xf32>
    %165 = vector.shape_cast %162 : vector<16x32xf32> to vector<1x16x1x32xf32>
    tpu.vector_store %arg6[%c0_92, %c0_93, %c12, %c0_94], %165 {strides = array<i32>} : memref<1x16x16x32xf32, #tpu.memory_space<vmem>>, vector<1x16x1x32xf32>,
    %166 = vector.extract_strided_slice %59 {offsets = [0, 13, 0], sizes = [8, 1, 32], strides = [1, 1, 1]} : vector<8x16x32xf32> to vector<8x1x32xf32>
    %167 = vector.shape_cast %166 : vector<8x1x32xf32> to vector<8x32xf32>
    %cst_95 = arith.constant dense<0.000000e+00> : vector<16x32xf32>
    %168 = tpu.matmul %60, %167, %cst_95 {dimension_numbers = #tpu.dot_dimension_numbers<[1], [0], [0], [1], [0, 0, 1, 1], [], []>} : vector<16x8xf32>, vector<8x32xf32>, vector<16x32xf32> -> vector<16x32xf32>
    %169 = vector.broadcast %61 : vector<16x1xf32> to vector<16x32xf32>
    %170 = arith.addf %168, %169 : vector<16x32xf32>
    %c0_96 = arith.constant 0 : index
    %c0_97 = arith.constant 0 : index
    %c13 = arith.constant 13 : index
    %c0_98 = arith.constant 0 : index
    %171 = vector.load %arg6[%c0_96, %c0_97, %c13, %c0_98] : memref<1x16x16x32xf32, #tpu.memory_space<vmem>>, vector<1x16x1x32xf32>
    %172 = vector.shape_cast %171 : vector<1x16x1x32xf32> to vector<16x32xf32>
    %173 = vector.shape_cast %170 : vector<16x32xf32> to vector<1x16x1x32xf32>
    tpu.vector_store %arg6[%c0_96, %c0_97, %c13, %c0_98], %173 {strides = array<i32>} : memref<1x16x16x32xf32, #tpu.memory_space<vmem>>, vector<1x16x1x32xf32>,
    %174 = vector.extract_strided_slice %59 {offsets = [0, 14, 0], sizes = [8, 1, 32], strides = [1, 1, 1]} : vector<8x16x32xf32> to vector<8x1x32xf32>
    %175 = vector.shape_cast %174 : vector<8x1x32xf32> to vector<8x32xf32>
    %cst_99 = arith.constant dense<0.000000e+00> : vector<16x32xf32>
    %176 = tpu.matmul %60, %175, %cst_99 {dimension_numbers = #tpu.dot_dimension_numbers<[1], [0], [0], [1], [0, 0, 1, 1], [], []>} : vector<16x8xf32>, vector<8x32xf32>, vector<16x32xf32> -> vector<16x32xf32>
    %177 = vector.broadcast %61 : vector<16x1xf32> to vector<16x32xf32>
    %178 = arith.addf %176, %177 : vector<16x32xf32>
    %c0_100 = arith.constant 0 : index
    %c0_101 = arith.constant 0 : index
    %c14 = arith.constant 14 : index
    %c0_102 = arith.constant 0 : index
    %179 = vector.load %arg6[%c0_100, %c0_101, %c14, %c0_102] : memref<1x16x16x32xf32, #tpu.memory_space<vmem>>, vector<1x16x1x32xf32>
    %180 = vector.shape_cast %179 : vector<1x16x1x32xf32> to vector<16x32xf32>
    %181 = vector.shape_cast %178 : vector<16x32xf32> to vector<1x16x1x32xf32>
    tpu.vector_store %arg6[%c0_100, %c0_101, %c14, %c0_102], %181 {strides = array<i32>} : memref<1x16x16x32xf32, #tpu.memory_space<vmem>>, vector<1x16x1x32xf32>,
    %182 = vector.extract_strided_slice %59 {offsets = [0, 15, 0], sizes = [8, 1, 32], strides = [1, 1, 1]} : vector<8x16x32xf32> to vector<8x1x32xf32>
    %183 = vector.shape_cast %182 : vector<8x1x32xf32> to vector<8x32xf32>
    %cst_103 = arith.constant dense<0.000000e+00> : vector<16x32xf32>
    %184 = tpu.matmul %60, %183, %cst_103 {dimension_numbers = #tpu.dot_dimension_numbers<[1], [0], [0], [1], [0, 0, 1, 1], [], []>} : vector<16x8xf32>, vector<8x32xf32>, vector<16x32xf32> -> vector<16x32xf32>
    %185 = vector.broadcast %61 : vector<16x1xf32> to vector<16x32xf32>
    %186 = arith.addf %184, %185 : vector<16x32xf32>
    %c0_104 = arith.constant 0 : index
    %c0_105 = arith.constant 0 : index
    %c15 = arith.constant 15 : index
    %c0_106 = arith.constant 0 : index
    %187 = vector.load %arg6[%c0_104, %c0_105, %c15, %c0_106] : memref<1x16x16x32xf32, #tpu.memory_space<vmem>>, vector<1x16x1x32xf32>
    %188 = vector.shape_cast %187 : vector<1x16x1x32xf32> to vector<16x32xf32>
    %189 = vector.shape_cast %186 : vector<16x32xf32> to vector<1x16x1x32xf32>
    tpu.vector_store %arg6[%c0_104, %c0_105, %c15, %c0_106], %189 {strides = array<i32>} : memref<1x16x16x32xf32, #tpu.memory_space<vmem>>, vector<1x16x1x32xf32>,
    return
  }
  func.func @transform_0(%arg0: i32, %arg1: i32) -> (i32, i32, i32, i32) {
    %c0_i32 = arith.constant 0 : i32
    %c0_i32_0 = arith.constant 0 : i32
    %c0_i32_1 = arith.constant 0 : i32
    %c0_i32_2 = arith.constant 0 : i32
    return %arg0, %c0_i32, %c0_i32_0, %c0_i32_1 : i32, i32, i32, i32
  }
  func.func @transform_1(%arg0: i32, %arg1: i32) -> (i32, i32, i32, i32) {
    %c0_i32 = arith.constant 0 : i32
    %c0_i32_0 = arith.constant 0 : i32
    %c0_i32_1 = arith.constant 0 : i32
    %c0_i32_2 = arith.constant 0 : i32
    %c0_i32_3 = arith.constant 0 : i32
    return %c0_i32, %c0_i32_0, %c0_i32_1, %c0_i32_2 : i32, i32, i32, i32
  }
  func.func @transform_2(%arg0: i32, %arg1: i32) -> (i32, i32) {
    %c0_i32 = arith.constant 0 : i32
    %c0_i32_0 = arith.constant 0 : i32
    %c0_i32_1 = arith.constant 0 : i32
    return %c0_i32, %c0_i32_0 : i32, i32
  }
  func.func @transform_3(%arg0: i32, %arg1: i32) -> (i32, i32) {
    %c0_i32 = arith.constant 0 : i32
    %c0_i32_0 = arith.constant 0 : i32
    %c0_i32_1 = arith.constant 0 : i32
    return %c0_i32, %c0_i32_0 : i32, i32
  }
  func.func @transform_4(%arg0: i32, %arg1: i32) -> (i32, i32, i32, i32) {
    %c0_i32 = arith.constant 0 : i32
    %c0_i32_0 = arith.constant 0 : i32
    %c0_i32_1 = arith.constant 0 : i32
    return %arg0, %c0_i32, %arg1, %c0_i32_0 : i32, i32, i32, i32
  }
}

</mosaic_0001>

<llo_original>
// kernel: tpu_custom_call.1
$region0: #{tpu_custom_call.1}
  #allocation0 [shape = 'u32[]', space=smem, size = 0x4, offset = 0x4, fixed_abs, tag = 'smem constant byte address 0x4 - core index']
  #allocation1 [shape = 'u32[144,128]{1,0:T(1,128)}', space=vmem, size = 0x12000, scoped, tag = 'internal scratch']
  #allocation4 [shape = 's32[]', space=sflag, size = 0x4, offset = 0, fixed_abs, tag = 'sflag constant byte address 0x0 - dummy sync flag']
  %s0 = inlined_call_operand.vmem [shape: f32[2,8,34,34], index: 0, kind: input, shape index: {}]
  %s1 = inlined_call_operand.vmem [shape: f32[9,8,1,1], index: 1, kind: input, shape index: {}]
  %s2 = inlined_call_operand.vmem [shape: f32[16,8], index: 2, kind: input, shape index: {}]
  %s3 = inlined_call_operand.vmem [shape: f32[16,1], index: 3, kind: input, shape index: {}]
  %s4 = inlined_call_operand.hbm [shape: f32[2,16,32,32], index: 4, kind: output, shape index: {}]
  %s5 = sld [smem:[#allocation0]]
  $region49: #{tpu_custom_call.1} parent=0
    _
  %s7 = ssub.s32 1, %s5
  %s8 = scalar_select 0, %s7, %s5
  $region1: #{tpu_custom_call.1} parent=0
    #allocation2 [shape = 'u8[262144]{0}', space=vmem, size = 0x40000, scoped, tag = 'output window, operand 0']
    #allocation3 [shape = 's32[2]{0}', space=sflag, size = 0x8, scoped, tag = 'scoped memory for tpu_custom_call.1']
    %9 = vsyncpa [#allocation3], 0
    %s10 = scalar_lea.sflag [#allocation3], 1
    %11 = vsyncpa %s10, 0
    loop: start=0, step=1, limit=6
    $region2: #{tpu_custom_call.1} parent=1 // loop_pre_header
      _
    $region3: #{tpu_custom_call.1} parent=1 // loop_header
      %s13 = sphi 0, %s17
      %p14 = scmp.ge.s32.totalorder %s13, 6
      %s20 = sphi 0, %s32
      %s21 = sphi 0, %s28
      %s22 = sphi 0, %s20
      %s23 = sphi 0, %s21
      %s24 = sphi 0, %s22
      %s25 = sphi 0, %s23
      %s35 = sphi 0, %s37
      %s38 = sphi 0, %s35
      %s39 = sphi 0, %s38
      %s55 = sphi 0, %s39
      %s59 = sphi 0, %s59
      %s61 = sphi 0, %s59
      %s62 = sphi 0, %s61
      %s76 = sphi 0, %s62
      %s80 = sphi 0, %s80
      %s82 = sphi 0, %s80
      %s83 = sphi 0, %s82
      %s97 = sphi 0, %s83
      %s101 = sphi 0, %s101
      %s103 = sphi 0, %s101
      %s104 = sphi 0, %s103
      %s118 = sphi 0, %s104
      %s126 = sphi 0, %s128
      %s129 = sphi 0, %s126
      %s130 = sphi 0, %s129
      %s146 = sphi 0, %s130
    $region4: #{tpu_custom_call.1} parent=1 // loop_header_branch
      %16 = sbr.rel (%p14) target = $region8
    $region5: #{tpu_custom_call.1} parent=1 // loop_body
      %s18 = ssub.s32 %s13, 1
      %s19 = ssub.s32 %s13, 2
      %s26 = sadd.s32 1, %s21
      %p27 = scmp.ge.s32.totalorder %s26, 2
      %s28 = scalar_select %p27, 0, %s26
      %s29 = sadd.s32 1, %s20
      %s30 = scalar_select %p27, %s29, %s20
      %p31 = scmp.ge.s32.totalorder %s30, 2
      %s32 = scalar_select %p31, 0, %s30
      %s33 = ssub.s32 %s20, %s32
      %p34 = scmp.eq.s32.totalorder %s33, 0
      %s36 = sadd.s32 %s35, 1
      %s37 = scalar_select %p34, %s35, %s36
      %p40 = pneg %p34
      %p41 = scmp.eq.s32.totalorder %s13, 3
      %p42 = por %p40, %p41
      %p43 = scmp.ne.s32.totalorder %s35, %s38
      %p44 = scmp.eq.s32.totalorder %s13, 0
      %p45 = por %p43, %p44
      %p46 = scmp.ne.s32.totalorder %s35, %s38
      %p47 = scmp.eq.s32.totalorder %s18, 3
      %p48 = por %p46, %p47
      %p49 = scmp.ne.s32.totalorder %s38, %s39
      %p50 = scmp.eq.s32.totalorder %s18, 0
      %p51 = por %p49, %p50
      %p52 = scmp.ne.s32.totalorder %s38, %s39
      %p53 = scmp.eq.s32.totalorder %s19, 3
      %p54 = por %p52, %p53
      %p56 = scmp.ne.s32.totalorder %s39, %s55
      %p57 = scmp.eq.s32.totalorder %s19, 0
      %p58 = por %p56, %p57
      %s60 = sadd.s32 %s59, 1
      %p63 = scmp.eq.s32.totalorder %s13, 3
      %p64 = scmp.ne.s32.totalorder %s59, %s61
      %p65 = scmp.eq.s32.totalorder %s13, 0
      %p66 = por %p64, %p65
      %p67 = scmp.ne.s32.totalorder %s59, %s61
      %p68 = scmp.eq.s32.totalorder %s18, 3
      %p69 = por %p67, %p68
      %p70 = scmp.ne.s32.totalorder %s61, %s62
      %p71 = scmp.eq.s32.totalorder %s18, 0
      %p72 = por %p70, %p71
      %p73 = scmp.ne.s32.totalorder %s61, %s62
      %p74 = scmp.eq.s32.totalorder %s19, 3
      %p75 = por %p73, %p74
      %p77 = scmp.ne.s32.totalorder %s62, %s76
      %p78 = scmp.eq.s32.totalorder %s19, 0
      %p79 = por %p77, %p78
      %s81 = sadd.s32 %s80, 1
      %p84 = scmp.eq.s32.totalorder %s13, 3
      %p85 = scmp.ne.s32.totalorder %s80, %s82
      %p86 = scmp.eq.s32.totalorder %s13, 0
      %p87 = por %p85, %p86
      %p88 = scmp.ne.s32.totalorder %s80, %s82
      %p89 = scmp.eq.s32.totalorder %s18, 3
      %p90 = por %p88, %p89
      %p91 = scmp.ne.s32.totalorder %s82, %s83
      %p92 = scmp.eq.s32.totalorder %s18, 0
      %p93 = por %p91, %p92
      %p94 = scmp.ne.s32.totalorder %s82, %s83
      %p95 = scmp.eq.s32.totalorder %s19, 3
      %p96 = por %p94, %p95
      %p98 = scmp.ne.s32.totalorder %s83, %s97
      %p99 = scmp.eq.s32.totalorder %s19, 0
      %p100 = por %p98, %p99
      %s102 = sadd.s32 %s101, 1
      %p105 = scmp.eq.s32.totalorder %s13, 3
      %p106 = scmp.ne.s32.totalorder %s101, %s103
      %p107 = scmp.eq.s32.totalorder %s13, 0
      %p108 = por %p106, %p107
      %p109 = scmp.ne.s32.totalorder %s101, %s103
      %p110 = scmp.eq.s32.totalorder %s18, 3
      %p111 = por %p109, %p110
      %p112 = scmp.ne.s32.totalorder %s103, %s104
      %p113 = scmp.eq.s32.totalorder %s18, 0
      %p114 = por %p112, %p113
      %p115 = scmp.ne.s32.totalorder %s103, %s104
      %p116 = scmp.eq.s32.totalorder %s19, 3
      %p117 = por %p115, %p116
      %p119 = scmp.ne.s32.totalorder %s104, %s118
      %p120 = scmp.eq.s32.totalorder %s19, 0
      %p121 = por %p119, %p120
      %s122 = ssub.s32 %s20, %s32
      %s123 = ssub.s32 %s21, %s28
      %s124 = sor.u32 %s122, %s123
      %p125 = scmp.eq.s32.totalorder %s124, 0
      %s127 = sadd.s32 %s126, 1
      %s128 = scalar_select %p125, %s126, %s127
      %p131 = pneg %p125
      %p132 = scmp.eq.s32.totalorder %s13, 3
      %p133 = por %p131, %p132
      %p134 = scmp.ne.s32.totalorder %s126, %s129
      %p135 = scmp.eq.s32.totalorder %s13, 0
      %p136 = por %p134, %p135
      %p137 = scmp.ne.s32.totalorder %s126, %s129
      %p138 = scmp.eq.s32.totalorder %s18, 3
      %p139 = por %p137, %p138
      %p140 = scmp.ne.s32.totalorder %s129, %s130
      %p141 = scmp.eq.s32.totalorder %s18, 0
      %p142 = por %p140, %p141
      %p143 = scmp.ne.s32.totalorder %s129, %s130
      %p144 = scmp.eq.s32.totalorder %s19, 3
      %p145 = por %p143, %p144
      %p147 = scmp.ne.s32.totalorder %s130, %s146
      %p148 = scmp.eq.s32.totalorder %s19, 0
      %p149 = por %p147, %p148
      %p150 = scmp.le.s32.totalorder 1, %s13
      %p151 = scmp.lt.s32.totalorder %s13, 5
      %p152 = pnand %p150, %p151
      %p153 = pneg %p152
      // Predicated region
      $region9: #{tpu_custom_call.1} parent=5 // pred_check
        _
      $region10: #{tpu_custom_call.1} parent=5 // pred_check_branch
        %155 = sbr.rel (%p152) target = $region12
      $region11: #{tpu_custom_call.1} parent=5 // pred_region
        %s156 = ssub.s32 %s13, 1
        // Predicated region
        $region13: #{tpu_custom_call.1} parent=11 // pred_check
          %p157 = pneg %p72
        $region14: #{tpu_custom_call.1} parent=11 // pred_check_branch
          %159 = sbr.rel (%p157) target = $region16
        $region15: #{tpu_custom_call.1} parent=11 // pred_region
          _
        $region16: #{tpu_custom_call.1} parent=11 // pred_fallthru
          _
        // Predicated region
        $region17: #{tpu_custom_call.1} parent=11 // pred_check
          %p160 = pneg %p93
        $region18: #{tpu_custom_call.1} parent=11 // pred_check_branch
          %162 = sbr.rel (%p160) target = $region20
        $region19: #{tpu_custom_call.1} parent=11 // pred_region
          _
        $region20: #{tpu_custom_call.1} parent=11 // pred_fallthru
          _
        // Predicated region
        $region21: #{tpu_custom_call.1} parent=11 // pred_check
          %p163 = pneg %p114
        $region22: #{tpu_custom_call.1} parent=11 // pred_check_branch
          %165 = sbr.rel (%p163) target = $region24
        $region23: #{tpu_custom_call.1} parent=11 // pred_region
          _
        $region24: #{tpu_custom_call.1} parent=11 // pred_fallthru
          _
      $region12: #{tpu_custom_call.1} parent=5 // pred_fallthru
        _
      %p166 = scmp.lt.s32.totalorder %s13, 4
      // Predicated region
      $region25: #{tpu_custom_call.1} parent=5 // pred_check
        %p167 = pneg %p166
      $region26: #{tpu_custom_call.1} parent=5 // pred_check_branch
        %169 = sbr.rel (%p167) target = $region28
      $region27: #{tpu_custom_call.1} parent=5 // pred_region
        // Predicated region
        $region29: #{tpu_custom_call.1} parent=27 // pred_check
          %p170 = pneg %p45
        $region30: #{tpu_custom_call.1} parent=27 // pred_check_branch
          %172 = sbr.rel (%p170) target = $region32
        $region31: #{tpu_custom_call.1} parent=27 // pred_region
          %p173 = scmp.lt.s32.totalorder %s20, 1
          %s174 = scalar_select %p173, %s20, 1
          %s175 = smul.addr %s174, 40
          %s176 = smul.addr %s175, 8
          %s177 = scalar_lea.vmem %s0, %s176
        $region32: #{tpu_custom_call.1} parent=27 // pred_fallthru
          _
      $region28: #{tpu_custom_call.1} parent=5 // pred_fallthru
        _
      %p178 = scmp.le.s32.totalorder 1, %s13
      %p179 = scmp.lt.s32.totalorder %s13, 5
      %p180 = pnand %p178, %p179
      %p181 = pneg %p180
      // Predicated region
      $region33: #{tpu_custom_call.1} parent=5 // pred_check
        _
      $region34: #{tpu_custom_call.1} parent=5 // pred_check_branch
        %183 = sbr.rel (%p180) target = $region36
      $region35: #{tpu_custom_call.1} parent=5 // pred_region
        %s184 = ssub.s32 %s13, 1
        %p185 = scmp.lt.s32.totalorder %s22, 1
        %s186 = scalar_select %p185, %s22, 1
        %s187 = smul.addr %s186, 40
        %s188 = smul.addr %s187, 8
        %s189 = scalar_lea.vmem %s0, %s188
        %p190 = pneg %p51
        %p191 = pneg %p48
        %p192 = pneg %p72
        %p193 = pneg %p69
        %p194 = pneg %p93
        %p195 = pneg %p90
        %p196 = pneg %p114
        %p197 = pneg %p111
        %p198 = pneg %p142
        %p199 = pneg %p139
        %s200 = sand.u32 %s129, 1
        %s201 = scalar_lea.sflag [#allocation3], %s200
        %s202 = sand.u32 %s129, 1
        %s203 = smul.addr %s202, 256
        %s204 = scalar_lea.vmem [#allocation2], %s203
        %p205 = scmp.lt.s32.totalorder %s22, 1
        %s206 = scalar_select %p205, %s22, 1
        %s207 = smul.addr %s206, 40
        %s208 = smul.addr %s207, 8
        %s209 = scalar_lea.vmem %s0, %s208
        %s210 = smul.u32 2, %s23
        %s211 = smul.u32 %s23, 16
        %s212 = scalar_lea.vmem %s209, %s211
        %v213 = vld [vmem:[%s212] sm:$0xff]
        %v214 = vld [vmem:[%s212 + $0x8] sm:$0xff]
        %v215 = vld [vmem:[%s212 + $0x10] sm:$0x3]
        %v216 = vld [vmem:[%s212 + $0x28] sm:$0xff]
        %v217 = vld [vmem:[%s212 + $0x30] sm:$0xff]
        %v218 = vld [vmem:[%s212 + $0x38] sm:$0x3]
        %v219 = vld [vmem:[%s212 + $0x50] sm:$0xff]
        %v220 = vld [vmem:[%s212 + $0x58] sm:$0xff]
        %v221 = vld [vmem:[%s212 + $0x60] sm:$0x3]
        %v222 = vld [vmem:[%s212 + $0x78] sm:$0xff]
        %v223 = vld [vmem:[%s212 + $0x80] sm:$0xff]
        %v224 = vld [vmem:[%s212 + $0x88] sm:$0x3]
        %v225 = vld [vmem:[%s212 + $0xa0] sm:$0xff]
        %v226 = vld [vmem:[%s212 + $0xa8] sm:$0xff]
        %v227 = vld [vmem:[%s212 + $0xb0] sm:$0x3]
        %v228 = vld [vmem:[%s212 + $0xc8] sm:$0xff]
        %v229 = vld [vmem:[%s212 + $0xd0] sm:$0xff]
        %v230 = vld [vmem:[%s212 + $0xd8] sm:$0x3]
        %v231 = vld [vmem:[%s212 + $0xf0] sm:$0xff]
        %v232 = vld [vmem:[%s212 + $0xf8] sm:$0xff]
        %v233 = vld [vmem:[%s212 + $0x100] sm:$0x3]
        %v234 = vld [vmem:[%s212 + $0x118] sm:$0xff]
        %v235 = vld [vmem:[%s212 + $0x120] sm:$0xff]
        %v236 = vld [vmem:[%s212 + $0x128] sm:$0x3]
        %v237 = vld [vmem:[%s1] sm:$0x1]
        %v238 = vld [vmem:[%s1 + $0x1] sm:$0x1]
        %v239 = vld [vmem:[%s1 + $0x2] sm:$0x1]
        %v240 = vld [vmem:[%s1 + $0x3] sm:$0x1]
        %v241 = vld [vmem:[%s1 + $0x4] sm:$0x1]
        %v242 = vld [vmem:[%s1 + $0x5] sm:$0x1]
        %v243 = vld [vmem:[%s1 + $0x6] sm:$0x1]
        %v244 = vld [vmem:[%s1 + $0x7] sm:$0x1]
        %v253 = vlaneseq
        %v254 = vshrl.u32 %v253, 7
        %v255 = vsub.s32 0, %v254
        %v256 = vrot.slane %v237, %v255
        %v257 = vlaneseq
        %v258 = vshrl.u32 %v257, 7
        %v259 = vsub.s32 0, %v258
        %v260 = vrot.slane %v238, %v259
        %v261 = vlaneseq
        %v262 = vshrl.u32 %v261, 7
        %v263 = vsub.s32 0, %v262
        %v264 = vrot.slane %v239, %v263
        %v265 = vlaneseq
        %v266 = vshrl.u32 %v265, 7
        %v267 = vsub.s32 0, %v266
        %v268 = vrot.slane %v240, %v267
        %v269 = vlaneseq
        %v270 = vshrl.u32 %v269, 7
        %v271 = vsub.s32 0, %v270
        %v272 = vrot.slane %v241, %v271
        %v273 = vlaneseq
        %v274 = vshrl.u32 %v273, 7
        %v275 = vsub.s32 0, %v274
        %v276 = vrot.slane %v242, %v275
        %v277 = vlaneseq
        %v278 = vshrl.u32 %v277, 7
        %v279 = vsub.s32 0, %v278
        %v280 = vrot.slane %v243, %v279
        %v281 = vlaneseq
        %v282 = vshrl.u32 %v281, 7
        %v283 = vsub.s32 0, %v282
        %v284 = vrot.slane %v244, %v283
        %285 = vset.pattern.permute.xlu0 0
        %286 = vperm.xlu0 %285, %v256
        %v287 = vpop.permute.xlu0 %286
        %289 = vset.pattern.permute.xlu0 0
        %290 = vperm.xlu0 %289, %v260
        %v291 = vpop.permute.xlu0 %290
        %293 = vset.pattern.permute.xlu0 0
        %294 = vperm.xlu0 %293, %v264
        %v295 = vpop.permute.xlu0 %294
        %297 = vset.pattern.permute.xlu0 0
        %298 = vperm.xlu0 %297, %v268
        %v299 = vpop.permute.xlu0 %298
        %301 = vset.pattern.permute.xlu0 0
        %302 = vperm.xlu0 %301, %v272
        %v303 = vpop.permute.xlu0 %302
        %305 = vset.pattern.permute.xlu0 0
        %306 = vperm.xlu0 %305, %v276
        %v307 = vpop.permute.xlu0 %306
        %309 = vset.pattern.permute.xlu0 0
        %310 = vperm.xlu0 %309, %v280
        %v311 = vpop.permute.xlu0 %310
        %313 = vset.pattern.permute.xlu0 0
        %314 = vperm.xlu0 %313, %v284
        %v315 = vpop.permute.xlu0 %314
        %v317 = vmul.f32 %v213, %v287
        %v318 = vmul.f32 %v214, %v287
        %v319 = vmul.f32 %v216, %v291
        %v320 = vmul.f32 %v217, %v291
        %v321 = vmul.f32 %v219, %v295
        %v322 = vmul.f32 %v220, %v295
        %v323 = vmul.f32 %v222, %v299
        %v324 = vmul.f32 %v223, %v299
        %v325 = vmul.f32 %v225, %v303
        %v326 = vmul.f32 %v226, %v303
        %v327 = vmul.f32 %v228, %v307
        %v328 = vmul.f32 %v229, %v307
        %v329 = vmul.f32 %v231, %v311
        %v330 = vmul.f32 %v232, %v311
        %v331 = vmul.f32 %v234, %v315
        %v332 = vmul.f32 %v235, %v315
        %v333 = vadd.f32 %v317, 0.0
        %v334 = vadd.f32 %v318, 0.0
        %v335 = vadd.f32 %v319, 0.0
        %v336 = vadd.f32 %v320, 0.0
        %v337 = vadd.f32 %v321, 0.0
        %v338 = vadd.f32 %v322, 0.0
        %v339 = vadd.f32 %v323, 0.0
        %v340 = vadd.f32 %v324, 0.0
        %v341 = vadd.f32 %v325, 0.0
        %v342 = vadd.f32 %v326, 0.0
        %v343 = vadd.f32 %v327, 0.0
        %v344 = vadd.f32 %v328, 0.0
        %v345 = vadd.f32 %v329, 0.0
        %v346 = vadd.f32 %v330, 0.0
        %v347 = vadd.f32 %v331, 0.0
        %v348 = vadd.f32 %v332, 0.0
        %s349 = scalar_lea.vmem %s1, 8
        %v350 = vld [vmem:[%s349] sm:$0x1]
        %v351 = vld [vmem:[%s349 + $0x1] sm:$0x1]
        %v352 = vld [vmem:[%s349 + $0x2] sm:$0x1]
        %v353 = vld [vmem:[%s349 + $0x3] sm:$0x1]
        %v354 = vld [vmem:[%s349 + $0x4] sm:$0x1]
        %v355 = vld [vmem:[%s349 + $0x5] sm:$0x1]
        %v356 = vld [vmem:[%s349 + $0x6] sm:$0x1]
        %v357 = vld [vmem:[%s349 + $0x7] sm:$0x1]
        %v366 = vlaneseq
        %v367 = vshrl.u32 %v366, 7
        %v368 = vsub.s32 0, %v367
        %v369 = vrot.slane %v350, %v368
        %v370 = vlaneseq
        %v371 = vshrl.u32 %v370, 7
        %v372 = vsub.s32 0, %v371
        %v373 = vrot.slane %v351, %v372
        %v374 = vlaneseq
        %v375 = vshrl.u32 %v374, 7
        %v376 = vsub.s32 0, %v375
        %v377 = vrot.slane %v352, %v376
        %v378 = vlaneseq
        %v379 = vshrl.u32 %v378, 7
        %v380 = vsub.s32 0, %v379
        %v381 = vrot.slane %v353, %v380
        %v382 = vlaneseq
        %v383 = vshrl.u32 %v382, 7
        %v384 = vsub.s32 0, %v383
        %v385 = vrot.slane %v354, %v384
        %v386 = vlaneseq
        %v387 = vshrl.u32 %v386, 7
        %v388 = vsub.s32 0, %v387
        %v389 = vrot.slane %v355, %v388
        %v390 = vlaneseq
        %v391 = vshrl.u32 %v390, 7
        %v392 = vsub.s32 0, %v391
        %v393 = vrot.slane %v356, %v392
        %v394 = vlaneseq
        %v395 = vshrl.u32 %v394, 7
        %v396 = vsub.s32 0, %v395
        %v397 = vrot.slane %v357, %v396
        %398 = vset.pattern.permute.xlu0 0
        %399 = vperm.xlu0 %398, %v369
        %v400 = vpop.permute.xlu0 %399
        %402 = vset.pattern.permute.xlu0 0
        %403 = vperm.xlu0 %402, %v373
        %v404 = vpop.permute.xlu0 %403
        %406 = vset.pattern.permute.xlu0 0
        %407 = vperm.xlu0 %406, %v377
        %v408 = vpop.permute.xlu0 %407
        %410 = vset.pattern.permute.xlu0 0
        %411 = vperm.xlu0 %410, %v381
        %v412 = vpop.permute.xlu0 %411
        %414 = vset.pattern.permute.xlu0 0
        %415 = vperm.xlu0 %414, %v385
        %v416 = vpop.permute.xlu0 %415
        %418 = vset.pattern.permute.xlu0 0
        %419 = vperm.xlu0 %418, %v389
        %v420 = vpop.permute.xlu0 %419
        %422 = vset.pattern.permute.xlu0 0
        %423 = vperm.xlu0 %422, %v393
        %v424 = vpop.permute.xlu0 %423
        %426 = vset.pattern.permute.xlu0 0
        %427 = vperm.xlu0 %426, %v397
        %v428 = vpop.permute.xlu0 %427
        %v430 = vmul.f32 %v213, %v400
        %v431 = vmul.f32 %v214, %v400
        %v432 = vmul.f32 %v216, %v404
        %v433 = vmul.f32 %v217, %v404
        %v434 = vmul.f32 %v219, %v408
        %v435 = vmul.f32 %v220, %v408
        %v436 = vmul.f32 %v222, %v412
        %v437 = vmul.f32 %v223, %v412
        %v438 = vmul.f32 %v225, %v416
        %v439 = vmul.f32 %v226, %v416
        %v440 = vmul.f32 %v228, %v420
        %v441 = vmul.f32 %v229, %v420
        %v442 = vmul.f32 %v231, %v424
        %v443 = vmul.f32 %v232, %v424
        %v444 = vmul.f32 %v234, %v428
        %v445 = vmul.f32 %v235, %v428
        %462 = vrot.lane.b32.xlu0 %v430, 127
        %v463 = vpop.permute.xlu0 %462
        %464 = vrot.lane.b32.xlu0 %v431, 127
        %v465 = vpop.permute.xlu0 %464
        %466 = vrot.lane.b32.xlu0 %v432, 127
        %v467 = vpop.permute.xlu0 %466
        %468 = vrot.lane.b32.xlu0 %v433, 127
        %v469 = vpop.permute.xlu0 %468
        %470 = vrot.lane.b32.xlu0 %v434, 127
        %v471 = vpop.permute.xlu0 %470
        %472 = vrot.lane.b32.xlu0 %v435, 127
        %v473 = vpop.permute.xlu0 %472
        %474 = vrot.lane.b32.xlu0 %v436, 127
        %v475 = vpop.permute.xlu0 %474
        %476 = vrot.lane.b32.xlu0 %v437, 127
        %v477 = vpop.permute.xlu0 %476
        %478 = vrot.lane.b32.xlu0 %v438, 127
        %v479 = vpop.permute.xlu0 %478
        %480 = vrot.lane.b32.xlu0 %v439, 127
        %v481 = vpop.permute.xlu0 %480
        %482 = vrot.lane.b32.xlu0 %v440, 127
        %v483 = vpop.permute.xlu0 %482
        %484 = vrot.lane.b32.xlu0 %v441, 127
        %v485 = vpop.permute.xlu0 %484
        %486 = vrot.lane.b32.xlu0 %v442, 127
        %v487 = vpop.permute.xlu0 %486
        %488 = vrot.lane.b32.xlu0 %v443, 127
        %v489 = vpop.permute.xlu0 %488
        %490 = vrot.lane.b32.xlu0 %v444, 127
        %v491 = vpop.permute.xlu0 %490
        %492 = vrot.lane.b32.xlu0 %v445, 127
        %v493 = vpop.permute.xlu0 %492
        %v510 = vadd.f32 %v333, %v463
        %v511 = vadd.f32 %v334, %v465
        %v512 = vadd.f32 %v335, %v467
        %v513 = vadd.f32 %v336, %v469
        %v514 = vadd.f32 %v337, %v471
        %v515 = vadd.f32 %v338, %v473
        %v516 = vadd.f32 %v339, %v475
        %v517 = vadd.f32 %v340, %v477
        %v518 = vadd.f32 %v341, %v479
        %v519 = vadd.f32 %v342, %v481
        %v520 = vadd.f32 %v343, %v483
        %v521 = vadd.f32 %v344, %v485
        %v522 = vadd.f32 %v345, %v487
        %v523 = vadd.f32 %v346, %v489
        %v524 = vadd.f32 %v347, %v491
        %v525 = vadd.f32 %v348, %v493
        %s526 = scalar_lea.vmem %s1, 16
        %v527 = vld [vmem:[%s526] sm:$0x1]
        %v528 = vld [vmem:[%s526 + $0x1] sm:$0x1]
        %v529 = vld [vmem:[%s526 + $0x2] sm:$0x1]
        %v530 = vld [vmem:[%s526 + $0x3] sm:$0x1]
        %v531 = vld [vmem:[%s526 + $0x4] sm:$0x1]
        %v532 = vld [vmem:[%s526 + $0x5] sm:$0x1]
        %v533 = vld [vmem:[%s526 + $0x6] sm:$0x1]
        %v534 = vld [vmem:[%s526 + $0x7] sm:$0x1]
        %v543 = vlaneseq
        %v544 = vshrl.u32 %v543, 7
        %v545 = vsub.s32 0, %v544
        %v546 = vrot.slane %v527, %v545
        %v547 = vlaneseq
        %v548 = vshrl.u32 %v547, 7
        %v549 = vsub.s32 0, %v548
        %v550 = vrot.slane %v528, %v549
        %v551 = vlaneseq
        %v552 = vshrl.u32 %v551, 7
        %v553 = vsub.s32 0, %v552
        %v554 = vrot.slane %v529, %v553
        %v555 = vlaneseq
        %v556 = vshrl.u32 %v555, 7
        %v557 = vsub.s32 0, %v556
        %v558 = vrot.slane %v530, %v557
        %v559 = vlaneseq
        %v560 = vshrl.u32 %v559, 7
        %v561 = vsub.s32 0, %v560
        %v562 = vrot.slane %v531, %v561
        %v563 = vlaneseq
        %v564 = vshrl.u32 %v563, 7
        %v565 = vsub.s32 0, %v564
        %v566 = vrot.slane %v532, %v565
        %v567 = vlaneseq
        %v568 = vshrl.u32 %v567, 7
        %v569 = vsub.s32 0, %v568
        %v570 = vrot.slane %v533, %v569
        %v571 = vlaneseq
        %v572 = vshrl.u32 %v571, 7
        %v573 = vsub.s32 0, %v572
        %v574 = vrot.slane %v534, %v573
        %575 = vset.pattern.permute.xlu0 0
        %576 = vperm.xlu0 %575, %v546
        %v577 = vpop.permute.xlu0 %576
        %579 = vset.pattern.permute.xlu0 0
        %580 = vperm.xlu0 %579, %v550
        %v581 = vpop.permute.xlu0 %580
        %583 = vset.pattern.permute.xlu0 0
        %584 = vperm.xlu0 %583, %v554
        %v585 = vpop.permute.xlu0 %584
        %587 = vset.pattern.permute.xlu0 0
        %588 = vperm.xlu0 %587, %v558
        %v589 = vpop.permute.xlu0 %588
        %591 = vset.pattern.permute.xlu0 0
        %592 = vperm.xlu0 %591, %v562
        %v593 = vpop.permute.xlu0 %592
        %595 = vset.pattern.permute.xlu0 0
        %596 = vperm.xlu0 %595, %v566
        %v597 = vpop.permute.xlu0 %596
        %599 = vset.pattern.permute.xlu0 0
        %600 = vperm.xlu0 %599, %v570
        %v601 = vpop.permute.xlu0 %600
        %603 = vset.pattern.permute.xlu0 0
        %604 = vperm.xlu0 %603, %v574
        %v605 = vpop.permute.xlu0 %604
        %v607 = vmul.f32 %v213, %v577
        %v608 = vmul.f32 %v214, %v577
        %v609 = vmul.f32 %v216, %v581
        %v610 = vmul.f32 %v217, %v581
        %v611 = vmul.f32 %v219, %v585
        %v612 = vmul.f32 %v220, %v585
        %v613 = vmul.f32 %v222, %v589
        %v614 = vmul.f32 %v223, %v589
        %v615 = vmul.f32 %v225, %v593
        %v616 = vmul.f32 %v226, %v593
        %v617 = vmul.f32 %v228, %v597
        %v618 = vmul.f32 %v229, %v597
        %v619 = vmul.f32 %v231, %v601
        %v620 = vmul.f32 %v232, %v601
        %v621 = vmul.f32 %v234, %v605
        %v622 = vmul.f32 %v235, %v605
        %639 = vrot.lane.b32.xlu0 %v607, 126
        %v640 = vpop.permute.xlu0 %639
        %641 = vrot.lane.b32.xlu0 %v608, 126
        %v642 = vpop.permute.xlu0 %641
        %643 = vrot.lane.b32.xlu0 %v609, 126
        %v644 = vpop.permute.xlu0 %643
        %645 = vrot.lane.b32.xlu0 %v610, 126
        %v646 = vpop.permute.xlu0 %645
        %647 = vrot.lane.b32.xlu0 %v611, 126
        %v648 = vpop.permute.xlu0 %647
        %649 = vrot.lane.b32.xlu0 %v612, 126
        %v650 = vpop.permute.xlu0 %649
        %651 = vrot.lane.b32.xlu0 %v613, 126
        %v652 = vpop.permute.xlu0 %651
        %653 = vrot.lane.b32.xlu0 %v614, 126
        %v654 = vpop.permute.xlu0 %653
        %655 = vrot.lane.b32.xlu0 %v615, 126
        %v656 = vpop.permute.xlu0 %655
        %657 = vrot.lane.b32.xlu0 %v616, 126
        %v658 = vpop.permute.xlu0 %657
        %659 = vrot.lane.b32.xlu0 %v617, 126
        %v660 = vpop.permute.xlu0 %659
        %661 = vrot.lane.b32.xlu0 %v618, 126
        %v662 = vpop.permute.xlu0 %661
        %663 = vrot.lane.b32.xlu0 %v619, 126
        %v664 = vpop.permute.xlu0 %663
        %665 = vrot.lane.b32.xlu0 %v620, 126
        %v666 = vpop.permute.xlu0 %665
        %667 = vrot.lane.b32.xlu0 %v621, 126
        %v668 = vpop.permute.xlu0 %667
        %669 = vrot.lane.b32.xlu0 %v622, 126
        %v670 = vpop.permute.xlu0 %669
        %v687 = vadd.f32 %v510, %v640
        %v688 = vadd.f32 %v511, %v642
        %v689 = vadd.f32 %v512, %v644
        %v690 = vadd.f32 %v513, %v646
        %v691 = vadd.f32 %v514, %v648
        %v692 = vadd.f32 %v515, %v650
        %v693 = vadd.f32 %v516, %v652
        %v694 = vadd.f32 %v517, %v654
        %v695 = vadd.f32 %v518, %v656
        %v696 = vadd.f32 %v519, %v658
        %v697 = vadd.f32 %v520, %v660
        %v698 = vadd.f32 %v521, %v662
        %v699 = vadd.f32 %v522, %v664
        %v700 = vadd.f32 %v523, %v666
        %v701 = vadd.f32 %v524, %v668
        %v702 = vadd.f32 %v525, %v670
        %s703 = scalar_lea.vmem %s1, 24
        %v704 = vld [vmem:[%s703] sm:$0x1]
        %v705 = vld [vmem:[%s703 + $0x1] sm:$0x1]
        %v706 = vld [vmem:[%s703 + $0x2] sm:$0x1]
        %v707 = vld [vmem:[%s703 + $0x3] sm:$0x1]
        %v708 = vld [vmem:[%s703 + $0x4] sm:$0x1]
        %v709 = vld [vmem:[%s703 + $0x5] sm:$0x1]
        %v710 = vld [vmem:[%s703 + $0x6] sm:$0x1]
        %v711 = vld [vmem:[%s703 + $0x7] sm:$0x1]
        %v720 = vlaneseq
        %v721 = vshrl.u32 %v720, 7
        %v722 = vsub.s32 0, %v721
        %v723 = vrot.slane %v704, %v722
        %v724 = vlaneseq
        %v725 = vshrl.u32 %v724, 7
        %v726 = vsub.s32 0, %v725
        %v727 = vrot.slane %v705, %v726
        %v728 = vlaneseq
        %v729 = vshrl.u32 %v728, 7
        %v730 = vsub.s32 0, %v729
        %v731 = vrot.slane %v706, %v730
        %v732 = vlaneseq
        %v733 = vshrl.u32 %v732, 7
        %v734 = vsub.s32 0, %v733
        %v735 = vrot.slane %v707, %v734
        %v736 = vlaneseq
        %v737 = vshrl.u32 %v736, 7
        %v738 = vsub.s32 0, %v737
        %v739 = vrot.slane %v708, %v738
        %v740 = vlaneseq
        %v741 = vshrl.u32 %v740, 7
        %v742 = vsub.s32 0, %v741
        %v743 = vrot.slane %v709, %v742
        %v744 = vlaneseq
        %v745 = vshrl.u32 %v744, 7
        %v746 = vsub.s32 0, %v745
        %v747 = vrot.slane %v710, %v746
        %v748 = vlaneseq
        %v749 = vshrl.u32 %v748, 7
        %v750 = vsub.s32 0, %v749
        %v751 = vrot.slane %v711, %v750
        %752 = vset.pattern.permute.xlu0 0
        %753 = vperm.xlu0 %752, %v723
        %v754 = vpop.permute.xlu0 %753
        %756 = vset.pattern.permute.xlu0 0
        %757 = vperm.xlu0 %756, %v727
        %v758 = vpop.permute.xlu0 %757
        %760 = vset.pattern.permute.xlu0 0
        %761 = vperm.xlu0 %760, %v731
        %v762 = vpop.permute.xlu0 %761
        %764 = vset.pattern.permute.xlu0 0
        %765 = vperm.xlu0 %764, %v735
        %v766 = vpop.permute.xlu0 %765
        %768 = vset.pattern.permute.xlu0 0
        %769 = vperm.xlu0 %768, %v739
        %v770 = vpop.permute.xlu0 %769
        %772 = vset.pattern.permute.xlu0 0
        %773 = vperm.xlu0 %772, %v743
        %v774 = vpop.permute.xlu0 %773
        %776 = vset.pattern.permute.xlu0 0
        %777 = vperm.xlu0 %776, %v747
        %v778 = vpop.permute.xlu0 %777
        %780 = vset.pattern.permute.xlu0 0
        %781 = vperm.xlu0 %780, %v751
        %v782 = vpop.permute.xlu0 %781
        %v784 = vmul.f32 %v213, %v754
        %v785 = vmul.f32 %v214, %v754
        %v786 = vmul.f32 %v215, %v754
        %v787 = vmul.f32 %v216, %v758
        %v788 = vmul.f32 %v217, %v758
        %v789 = vmul.f32 %v218, %v758
        %v790 = vmul.f32 %v219, %v762
        %v791 = vmul.f32 %v220, %v762
        %v792 = vmul.f32 %v221, %v762
        %v793 = vmul.f32 %v222, %v766
        %v794 = vmul.f32 %v223, %v766
        %v795 = vmul.f32 %v224, %v766
        %v796 = vmul.f32 %v225, %v770
        %v797 = vmul.f32 %v226, %v770
        %v798 = vmul.f32 %v227, %v770
        %v799 = vmul.f32 %v228, %v774
        %v800 = vmul.f32 %v229, %v774
        %v801 = vmul.f32 %v230, %v774
        %v802 = vmul.f32 %v231, %v778
        %v803 = vmul.f32 %v232, %v778
        %v804 = vmul.f32 %v233, %v778
        %v805 = vmul.f32 %v234, %v782
        %v806 = vmul.f32 %v235, %v782
        %v807 = vmul.f32 %v236, %v782
        %vm832 = vcmask 1046528
        %v833 = vrot.slane %v784, 1
        %v834 = vrot.slane %v785, 1
        %v835 = vsel %vm832, %v833, %v834
        %v836 = vrot.slane %v786, 1
        %v837 = vsel %vm832, %v834, %v836
        %v838 = vrot.slane %v787, 1
        %v839 = vrot.slane %v788, 1
        %v840 = vsel %vm832, %v838, %v839
        %v841 = vrot.slane %v789, 1
        %v842 = vsel %vm832, %v839, %v841
        %v843 = vrot.slane %v790, 1
        %v844 = vrot.slane %v791, 1
        %v845 = vsel %vm832, %v843, %v844
        %v846 = vrot.slane %v792, 1
        %v847 = vsel %vm832, %v844, %v846
        %v848 = vrot.slane %v793, 1
        %v849 = vrot.slane %v794, 1
        %v850 = vsel %vm832, %v848, %v849
        %v851 = vrot.slane %v795, 1
        %v852 = vsel %vm832, %v849, %v851
        %v853 = vrot.slane %v796, 1
        %v854 = vrot.slane %v797, 1
        %v855 = vsel %vm832, %v853, %v854
        %v856 = vrot.slane %v798, 1
        %v857 = vsel %vm832, %v854, %v856
        %v858 = vrot.slane %v799, 1
        %v859 = vrot.slane %v800, 1
        %v860 = vsel %vm832, %v858, %v859
        %v861 = vrot.slane %v801, 1
        %v862 = vsel %vm832, %v859, %v861
        %v863 = vrot.slane %v802, 1
        %v864 = vrot.slane %v803, 1
        %v865 = vsel %vm832, %v863, %v864
        %v866 = vrot.slane %v804, 1
        %v867 = vsel %vm832, %v864, %v866
        %v868 = vrot.slane %v805, 1
        %v869 = vrot.slane %v806, 1
        %v870 = vsel %vm832, %v868, %v869
        %v871 = vrot.slane %v807, 1
        %v872 = vsel %vm832, %v869, %v871
        %v889 = vadd.f32 %v687, %v835
        %v890 = vadd.f32 %v688, %v837
        %v891 = vadd.f32 %v689, %v840
        %v892 = vadd.f32 %v690, %v842
        %v893 = vadd.f32 %v691, %v845
        %v894 = vadd.f32 %v692, %v847
        %v895 = vadd.f32 %v693, %v850
        %v896 = vadd.f32 %v694, %v852
        %v897 = vadd.f32 %v695, %v855
        %v898 = vadd.f32 %v696, %v857
        %v899 = vadd.f32 %v697, %v860
        %v900 = vadd.f32 %v698, %v862
        %v901 = vadd.f32 %v699, %v865
        %v902 = vadd.f32 %v700, %v867
        %v903 = vadd.f32 %v701, %v870
        %v904 = vadd.f32 %v702, %v872
        %s905 = scalar_lea.vmem %s1, 32
        %v906 = vld [vmem:[%s905] sm:$0x1]
        %v907 = vld [vmem:[%s905 + $0x1] sm:$0x1]
        %v908 = vld [vmem:[%s905 + $0x2] sm:$0x1]
        %v909 = vld [vmem:[%s905 + $0x3] sm:$0x1]
        %v910 = vld [vmem:[%s905 + $0x4] sm:$0x1]
        %v911 = vld [vmem:[%s905 + $0x5] sm:$0x1]
        %v912 = vld [vmem:[%s905 + $0x6] sm:$0x1]
        %v913 = vld [vmem:[%s905 + $0x7] sm:$0x1]
        %v922 = vlaneseq
        %v923 = vshrl.u32 %v922, 7
        %v924 = vsub.s32 0, %v923
        %v925 = vrot.slane %v906, %v924
        %v926 = vlaneseq
        %v927 = vshrl.u32 %v926, 7
        %v928 = vsub.s32 0, %v927
        %v929 = vrot.slane %v907, %v928
        %v930 = vlaneseq
        %v931 = vshrl.u32 %v930, 7
        %v932 = vsub.s32 0, %v931
        %v933 = vrot.slane %v908, %v932
        %v934 = vlaneseq
        %v935 = vshrl.u32 %v934, 7
        %v936 = vsub.s32 0, %v935
        %v937 = vrot.slane %v909, %v936
        %v938 = vlaneseq
        %v939 = vshrl.u32 %v938, 7
        %v940 = vsub.s32 0, %v939
        %v941 = vrot.slane %v910, %v940
        %v942 = vlaneseq
        %v943 = vshrl.u32 %v942, 7
        %v944 = vsub.s32 0, %v943
        %v945 = vrot.slane %v911, %v944
        %v946 = vlaneseq
        %v947 = vshrl.u32 %v946, 7
        %v948 = vsub.s32 0, %v947
        %v949 = vrot.slane %v912, %v948
        %v950 = vlaneseq
        %v951 = vshrl.u32 %v950, 7
        %v952 = vsub.s32 0, %v951
        %v953 = vrot.slane %v913, %v952
        %954 = vset.pattern.permute.xlu0 0
        %955 = vperm.xlu0 %954, %v925
        %v956 = vpop.permute.xlu0 %955
        %958 = vset.pattern.permute.xlu0 0
        %959 = vperm.xlu0 %958, %v929
        %v960 = vpop.permute.xlu0 %959
        %962 = vset.pattern.permute.xlu0 0
        %963 = vperm.xlu0 %962, %v933
        %v964 = vpop.permute.xlu0 %963
        %966 = vset.pattern.permute.xlu0 0
        %967 = vperm.xlu0 %966, %v937
        %v968 = vpop.permute.xlu0 %967
        %970 = vset.pattern.permute.xlu0 0
        %971 = vperm.xlu0 %970, %v941
        %v972 = vpop.permute.xlu0 %971
        %974 = vset.pattern.permute.xlu0 0
        %975 = vperm.xlu0 %974, %v945
        %v976 = vpop.permute.xlu0 %975
        %978 = vset.pattern.permute.xlu0 0
        %979 = vperm.xlu0 %978, %v949
        %v980 = vpop.permute.xlu0 %979
        %982 = vset.pattern.permute.xlu0 0
        %983 = vperm.xlu0 %982, %v953
        %v984 = vpop.permute.xlu0 %983
        %v986 = vmul.f32 %v213, %v956
        %v987 = vmul.f32 %v214, %v956
        %v988 = vmul.f32 %v215, %v956
        %v989 = vmul.f32 %v216, %v960
        %v990 = vmul.f32 %v217, %v960
        %v991 = vmul.f32 %v218, %v960
        %v992 = vmul.f32 %v219, %v964
        %v993 = vmul.f32 %v220, %v964
        %v994 = vmul.f32 %v221, %v964
        %v995 = vmul.f32 %v222, %v968
        %v996 = vmul.f32 %v223, %v968
        %v997 = vmul.f32 %v224, %v968
        %v998 = vmul.f32 %v225, %v972
        %v999 = vmul.f32 %v226, %v972
        %v1000 = vmul.f32 %v227, %v972
        %v1001 = vmul.f32 %v228, %v976
        %v1002 = vmul.f32 %v229, %v976
        %v1003 = vmul.f32 %v230, %v976
        %v1004 = vmul.f32 %v231, %v980
        %v1005 = vmul.f32 %v232, %v980
        %v1006 = vmul.f32 %v233, %v980
        %v1007 = vmul.f32 %v234, %v984
        %v1008 = vmul.f32 %v235, %v984
        %v1009 = vmul.f32 %v236, %v984
        %v1034 = vrot.slane %v986, 1
        %v1035 = vrot.slane %v987, 1
        %v1036 = vsel %vm832, %v1034, %v1035
        %v1037 = vrot.slane %v988, 1
        %v1038 = vsel %vm832, %v1035, %v1037
        %v1039 = vrot.slane %v989, 1
        %v1040 = vrot.slane %v990, 1
        %v1041 = vsel %vm832, %v1039, %v1040
        %v1042 = vrot.slane %v991, 1
        %v1043 = vsel %vm832, %v1040, %v1042
        %v1044 = vrot.slane %v992, 1
        %v1045 = vrot.slane %v993, 1
        %v1046 = vsel %vm832, %v1044, %v1045
        %v1047 = vrot.slane %v994, 1
        %v1048 = vsel %vm832, %v1045, %v1047
        %v1049 = vrot.slane %v995, 1
        %v1050 = vrot.slane %v996, 1
        %v1051 = vsel %vm832, %v1049, %v1050
        %v1052 = vrot.slane %v997, 1
        %v1053 = vsel %vm832, %v1050, %v1052
        %v1054 = vrot.slane %v998, 1
        %v1055 = vrot.slane %v999, 1
        %v1056 = vsel %vm832, %v1054, %v1055
        %v1057 = vrot.slane %v1000, 1
        %v1058 = vsel %vm832, %v1055, %v1057
        %v1059 = vrot.slane %v1001, 1
        %v1060 = vrot.slane %v1002, 1
        %v1061 = vsel %vm832, %v1059, %v1060
        %v1062 = vrot.slane %v1003, 1
        %v1063 = vsel %vm832, %v1060, %v1062
        %v1064 = vrot.slane %v1004, 1
        %v1065 = vrot.slane %v1005, 1
        %v1066 = vsel %vm832, %v1064, %v1065
        %v1067 = vrot.slane %v1006, 1
        %v1068 = vsel %vm832, %v1065, %v1067
        %v1069 = vrot.slane %v1007, 1
        %v1070 = vrot.slane %v1008, 1
        %v1071 = vsel %vm832, %v1069, %v1070
        %v1072 = vrot.slane %v1009, 1
        %v1073 = vsel %vm832, %v1070, %v1072
        %1074 = vrot.lane.b32.xlu0 %v1036, 127
        %v1075 = vpop.permute.xlu0 %1074
        %1076 = vrot.lane.b32.xlu0 %v1038, 127
        %v1077 = vpop.permute.xlu0 %1076
        %1078 = vrot.lane.b32.xlu0 %v1041, 127
        %v1079 = vpop.permute.xlu0 %1078
        %1080 = vrot.lane.b32.xlu0 %v1043, 127
        %v1081 = vpop.permute.xlu0 %1080
        %1082 = vrot.lane.b32.xlu0 %v1046, 127
        %v1083 = vpop.permute.xlu0 %1082
        %1084 = vrot.lane.b32.xlu0 %v1048, 127
        %v1085 = vpop.permute.xlu0 %1084
        %1086 = vrot.lane.b32.xlu0 %v1051, 127
        %v1087 = vpop.permute.xlu0 %1086
        %1088 = vrot.lane.b32.xlu0 %v1053, 127
        %v1089 = vpop.permute.xlu0 %1088
        %1090 = vrot.lane.b32.xlu0 %v1056, 127
        %v1091 = vpop.permute.xlu0 %1090
        %1092 = vrot.lane.b32.xlu0 %v1058, 127
        %v1093 = vpop.permute.xlu0 %1092
        %1094 = vrot.lane.b32.xlu0 %v1061, 127
        %v1095 = vpop.permute.xlu0 %1094
        %1096 = vrot.lane.b32.xlu0 %v1063, 127
        %v1097 = vpop.permute.xlu0 %1096
        %1098 = vrot.lane.b32.xlu0 %v1066, 127
        %v1099 = vpop.permute.xlu0 %1098
        %1100 = vrot.lane.b32.xlu0 %v1068, 127
        %v1101 = vpop.permute.xlu0 %1100
        %1102 = vrot.lane.b32.xlu0 %v1071, 127
        %v1103 = vpop.permute.xlu0 %1102
        %1104 = vrot.lane.b32.xlu0 %v1073, 127
        %v1105 = vpop.permute.xlu0 %1104
        %v1122 = vadd.f32 %v889, %v1075
        %v1123 = vadd.f32 %v890, %v1077
        %v1124 = vadd.f32 %v891, %v1079
        %v1125 = vadd.f32 %v892, %v1081
        %v1126 = vadd.f32 %v893, %v1083
        %v1127 = vadd.f32 %v894, %v1085
        %v1128 = vadd.f32 %v895, %v1087
        %v1129 = vadd.f32 %v896, %v1089
        %v1130 = vadd.f32 %v897, %v1091
        %v1131 = vadd.f32 %v898, %v1093
        %v1132 = vadd.f32 %v899, %v1095
        %v1133 = vadd.f32 %v900, %v1097
        %v1134 = vadd.f32 %v901, %v1099
        %v1135 = vadd.f32 %v902, %v1101
        %v1136 = vadd.f32 %v903, %v1103
        %v1137 = vadd.f32 %v904, %v1105
        %s1138 = scalar_lea.vmem %s1, 40
        %v1139 = vld [vmem:[%s1138] sm:$0x1]
        %v1140 = vld [vmem:[%s1138 + $0x1] sm:$0x1]
        %v1141 = vld [vmem:[%s1138 + $0x2] sm:$0x1]
        %v1142 = vld [vmem:[%s1138 + $0x3] sm:$0x1]
        %v1143 = vld [vmem:[%s1138 + $0x4] sm:$0x1]
        %v1144 = vld [vmem:[%s1138 + $0x5] sm:$0x1]
        %v1145 = vld [vmem:[%s1138 + $0x6] sm:$0x1]
        %v1146 = vld [vmem:[%s1138 + $0x7] sm:$0x1]
        %v1155 = vlaneseq
        %v1156 = vshrl.u32 %v1155, 7
        %v1157 = vsub.s32 0, %v1156
        %v1158 = vrot.slane %v1139, %v1157
        %v1159 = vlaneseq
        %v1160 = vshrl.u32 %v1159, 7
        %v1161 = vsub.s32 0, %v1160
        %v1162 = vrot.slane %v1140, %v1161
        %v1163 = vlaneseq
        %v1164 = vshrl.u32 %v1163, 7
        %v1165 = vsub.s32 0, %v1164
        %v1166 = vrot.slane %v1141, %v1165
        %v1167 = vlaneseq
        %v1168 = vshrl.u32 %v1167, 7
        %v1169 = vsub.s32 0, %v1168
        %v1170 = vrot.slane %v1142, %v1169
        %v1171 = vlaneseq
        %v1172 = vshrl.u32 %v1171, 7
        %v1173 = vsub.s32 0, %v1172
        %v1174 = vrot.slane %v1143, %v1173
        %v1175 = vlaneseq
        %v1176 = vshrl.u32 %v1175, 7
        %v1177 = vsub.s32 0, %v1176
        %v1178 = vrot.slane %v1144, %v1177
        %v1179 = vlaneseq
        %v1180 = vshrl.u32 %v1179, 7
        %v1181 = vsub.s32 0, %v1180
        %v1182 = vrot.slane %v1145, %v1181
        %v1183 = vlaneseq
        %v1184 = vshrl.u32 %v1183, 7
        %v1185 = vsub.s32 0, %v1184
        %v1186 = vrot.slane %v1146, %v1185
        %1187 = vset.pattern.permute.xlu0 0
        %1188 = vperm.xlu0 %1187, %v1158
        %v1189 = vpop.permute.xlu0 %1188
        %1191 = vset.pattern.permute.xlu0 0
        %1192 = vperm.xlu0 %1191, %v1162
        %v1193 = vpop.permute.xlu0 %1192
        %1195 = vset.pattern.permute.xlu0 0
        %1196 = vperm.xlu0 %1195, %v1166
        %v1197 = vpop.permute.xlu0 %1196
        %1199 = vset.pattern.permute.xlu0 0
        %1200 = vperm.xlu0 %1199, %v1170
        %v1201 = vpop.permute.xlu0 %1200
        %1203 = vset.pattern.permute.xlu0 0
        %1204 = vperm.xlu0 %1203, %v1174
        %v1205 = vpop.permute.xlu0 %1204
        %1207 = vset.pattern.permute.xlu0 0
        %1208 = vperm.xlu0 %1207, %v1178
        %v1209 = vpop.permute.xlu0 %1208
        %1211 = vset.pattern.permute.xlu0 0
        %1212 = vperm.xlu0 %1211, %v1182
        %v1213 = vpop.permute.xlu0 %1212
        %1215 = vset.pattern.permute.xlu0 0
        %1216 = vperm.xlu0 %1215, %v1186
        %v1217 = vpop.permute.xlu0 %1216
        %v1219 = vmul.f32 %v213, %v1189
        %v1220 = vmul.f32 %v214, %v1189
        %v1221 = vmul.f32 %v215, %v1189
        %v1222 = vmul.f32 %v216, %v1193
        %v1223 = vmul.f32 %v217, %v1193
        %v1224 = vmul.f32 %v218, %v1193
        %v1225 = vmul.f32 %v219, %v1197
        %v1226 = vmul.f32 %v220, %v1197
        %v1227 = vmul.f32 %v221, %v1197
        %v1228 = vmul.f32 %v222, %v1201
        %v1229 = vmul.f32 %v223, %v1201
        %v1230 = vmul.f32 %v224, %v1201
        %v1231 = vmul.f32 %v225, %v1205
        %v1232 = vmul.f32 %v226, %v1205
        %v1233 = vmul.f32 %v227, %v1205
        %v1234 = vmul.f32 %v228, %v1209
        %v1235 = vmul.f32 %v229, %v1209
        %v1236 = vmul.f32 %v230, %v1209
        %v1237 = vmul.f32 %v231, %v1213
        %v1238 = vmul.f32 %v232, %v1213
        %v1239 = vmul.f32 %v233, %v1213
        %v1240 = vmul.f32 %v234, %v1217
        %v1241 = vmul.f32 %v235, %v1217
        %v1242 = vmul.f32 %v236, %v1217
        %v1267 = vrot.slane %v1219, 1
        %v1268 = vrot.slane %v1220, 1
        %v1269 = vsel %vm832, %v1267, %v1268
        %v1270 = vrot.slane %v1221, 1
        %v1271 = vsel %vm832, %v1268, %v1270
        %v1272 = vrot.slane %v1222, 1
        %v1273 = vrot.slane %v1223, 1
        %v1274 = vsel %vm832, %v1272, %v1273
        %v1275 = vrot.slane %v1224, 1
        %v1276 = vsel %vm832, %v1273, %v1275
        %v1277 = vrot.slane %v1225, 1
        %v1278 = vrot.slane %v1226, 1
        %v1279 = vsel %vm832, %v1277, %v1278
        %v1280 = vrot.slane %v1227, 1
        %v1281 = vsel %vm832, %v1278, %v1280
        %v1282 = vrot.slane %v1228, 1
        %v1283 = vrot.slane %v1229, 1
        %v1284 = vsel %vm832, %v1282, %v1283
        %v1285 = vrot.slane %v1230, 1
        %v1286 = vsel %vm832, %v1283, %v1285
        %v1287 = vrot.slane %v1231, 1
        %v1288 = vrot.slane %v1232, 1
        %v1289 = vsel %vm832, %v1287, %v1288
        %v1290 = vrot.slane %v1233, 1
        %v1291 = vsel %vm832, %v1288, %v1290
        %v1292 = vrot.slane %v1234, 1
        %v1293 = vrot.slane %v1235, 1
        %v1294 = vsel %vm832, %v1292, %v1293
        %v1295 = vrot.slane %v1236, 1
        %v1296 = vsel %vm832, %v1293, %v1295
        %v1297 = vrot.slane %v1237, 1
        %v1298 = vrot.slane %v1238, 1
        %v1299 = vsel %vm832, %v1297, %v1298
        %v1300 = vrot.slane %v1239, 1
        %v1301 = vsel %vm832, %v1298, %v1300
        %v1302 = vrot.slane %v1240, 1
        %v1303 = vrot.slane %v1241, 1
        %v1304 = vsel %vm832, %v1302, %v1303
        %v1305 = vrot.slane %v1242, 1
        %v1306 = vsel %vm832, %v1303, %v1305
        %1307 = vrot.lane.b32.xlu0 %v1269, 126
        %v1308 = vpop.permute.xlu0 %1307
        %1309 = vrot.lane.b32.xlu0 %v1271, 126
        %v1310 = vpop.permute.xlu0 %1309
        %1311 = vrot.lane.b32.xlu0 %v1274, 126
        %v1312 = vpop.permute.xlu0 %1311
        %1313 = vrot.lane.b32.xlu0 %v1276, 126
        %v1314 = vpop.permute.xlu0 %1313
        %1315 = vrot.lane.b32.xlu0 %v1279, 126
        %v1316 = vpop.permute.xlu0 %1315
        %1317 = vrot.lane.b32.xlu0 %v1281, 126
        %v1318 = vpop.permute.xlu0 %1317
        %1319 = vrot.lane.b32.xlu0 %v1284, 126
        %v1320 = vpop.permute.xlu0 %1319
        %1321 = vrot.lane.b32.xlu0 %v1286, 126
        %v1322 = vpop.permute.xlu0 %1321
        %1323 = vrot.lane.b32.xlu0 %v1289, 126
        %v1324 = vpop.permute.xlu0 %1323
        %1325 = vrot.lane.b32.xlu0 %v1291, 126
        %v1326 = vpop.permute.xlu0 %1325
        %1327 = vrot.lane.b32.xlu0 %v1294, 126
        %v1328 = vpop.permute.xlu0 %1327
        %1329 = vrot.lane.b32.xlu0 %v1296, 126
        %v1330 = vpop.permute.xlu0 %1329
        %1331 = vrot.lane.b32.xlu0 %v1299, 126
        %v1332 = vpop.permute.xlu0 %1331
        %1333 = vrot.lane.b32.xlu0 %v1301, 126
        %v1334 = vpop.permute.xlu0 %1333
        %1335 = vrot.lane.b32.xlu0 %v1304, 126
        %v1336 = vpop.permute.xlu0 %1335
        %1337 = vrot.lane.b32.xlu0 %v1306, 126
        %v1338 = vpop.permute.xlu0 %1337
        %v1355 = vadd.f32 %v1122, %v1308
        %v1356 = vadd.f32 %v1123, %v1310
        %v1357 = vadd.f32 %v1124, %v1312
        %v1358 = vadd.f32 %v1125, %v1314
        %v1359 = vadd.f32 %v1126, %v1316
        %v1360 = vadd.f32 %v1127, %v1318
        %v1361 = vadd.f32 %v1128, %v1320
        %v1362 = vadd.f32 %v1129, %v1322
        %v1363 = vadd.f32 %v1130, %v1324
        %v1364 = vadd.f32 %v1131, %v1326
        %v1365 = vadd.f32 %v1132, %v1328
        %v1366 = vadd.f32 %v1133, %v1330
        %v1367 = vadd.f32 %v1134, %v1332
        %v1368 = vadd.f32 %v1135, %v1334
        %v1369 = vadd.f32 %v1136, %v1336
        %v1370 = vadd.f32 %v1137, %v1338
        %s1371 = scalar_lea.vmem %s1, 48
        %v1372 = vld [vmem:[%s1371] sm:$0x1]
        %v1373 = vld [vmem:[%s1371 + $0x1] sm:$0x1]
        %v1374 = vld [vmem:[%s1371 + $0x2] sm:$0x1]
        %v1375 = vld [vmem:[%s1371 + $0x3] sm:$0x1]
        %v1376 = vld [vmem:[%s1371 + $0x4] sm:$0x1]
        %v1377 = vld [vmem:[%s1371 + $0x5] sm:$0x1]
        %v1378 = vld [vmem:[%s1371 + $0x6] sm:$0x1]
        %v1379 = vld [vmem:[%s1371 + $0x7] sm:$0x1]
        %v1388 = vlaneseq
        %v1389 = vshrl.u32 %v1388, 7
        %v1390 = vsub.s32 0, %v1389
        %v1391 = vrot.slane %v1372, %v1390
        %v1392 = vlaneseq
        %v1393 = vshrl.u32 %v1392, 7
        %v1394 = vsub.s32 0, %v1393
        %v1395 = vrot.slane %v1373, %v1394
        %v1396 = vlaneseq
        %v1397 = vshrl.u32 %v1396, 7
        %v1398 = vsub.s32 0, %v1397
        %v1399 = vrot.slane %v1374, %v1398
        %v1400 = vlaneseq
        %v1401 = vshrl.u32 %v1400, 7
        %v1402 = vsub.s32 0, %v1401
        %v1403 = vrot.slane %v1375, %v1402
        %v1404 = vlaneseq
        %v1405 = vshrl.u32 %v1404, 7
        %v1406 = vsub.s32 0, %v1405
        %v1407 = vrot.slane %v1376, %v1406
        %v1408 = vlaneseq
        %v1409 = vshrl.u32 %v1408, 7
        %v1410 = vsub.s32 0, %v1409
        %v1411 = vrot.slane %v1377, %v1410
        %v1412 = vlaneseq
        %v1413 = vshrl.u32 %v1412, 7
        %v1414 = vsub.s32 0, %v1413
        %v1415 = vrot.slane %v1378, %v1414
        %v1416 = vlaneseq
        %v1417 = vshrl.u32 %v1416, 7
        %v1418 = vsub.s32 0, %v1417
        %v1419 = vrot.slane %v1379, %v1418
        %1420 = vset.pattern.permute.xlu0 0
        %1421 = vperm.xlu0 %1420, %v1391
        %v1422 = vpop.permute.xlu0 %1421
        %1424 = vset.pattern.permute.xlu0 0
        %1425 = vperm.xlu0 %1424, %v1395
        %v1426 = vpop.permute.xlu0 %1425
        %1428 = vset.pattern.permute.xlu0 0
        %1429 = vperm.xlu0 %1428, %v1399
        %v1430 = vpop.permute.xlu0 %1429
        %1432 = vset.pattern.permute.xlu0 0
        %1433 = vperm.xlu0 %1432, %v1403
        %v1434 = vpop.permute.xlu0 %1433
        %1436 = vset.pattern.permute.xlu0 0
        %1437 = vperm.xlu0 %1436, %v1407
        %v1438 = vpop.permute.xlu0 %1437
        %1440 = vset.pattern.permute.xlu0 0
        %1441 = vperm.xlu0 %1440, %v1411
        %v1442 = vpop.permute.xlu0 %1441
        %1444 = vset.pattern.permute.xlu0 0
        %1445 = vperm.xlu0 %1444, %v1415
        %v1446 = vpop.permute.xlu0 %1445
        %1448 = vset.pattern.permute.xlu0 0
        %1449 = vperm.xlu0 %1448, %v1419
        %v1450 = vpop.permute.xlu0 %1449
        %v1452 = vmul.f32 %v213, %v1422
        %v1453 = vmul.f32 %v214, %v1422
        %v1454 = vmul.f32 %v215, %v1422
        %v1455 = vmul.f32 %v216, %v1426
        %v1456 = vmul.f32 %v217, %v1426
        %v1457 = vmul.f32 %v218, %v1426
        %v1458 = vmul.f32 %v219, %v1430
        %v1459 = vmul.f32 %v220, %v1430
        %v1460 = vmul.f32 %v221, %v1430
        %v1461 = vmul.f32 %v222, %v1434
        %v1462 = vmul.f32 %v223, %v1434
        %v1463 = vmul.f32 %v224, %v1434
        %v1464 = vmul.f32 %v225, %v1438
        %v1465 = vmul.f32 %v226, %v1438
        %v1466 = vmul.f32 %v227, %v1438
        %v1467 = vmul.f32 %v228, %v1442
        %v1468 = vmul.f32 %v229, %v1442
        %v1469 = vmul.f32 %v230, %v1442
        %v1470 = vmul.f32 %v231, %v1446
        %v1471 = vmul.f32 %v232, %v1446
        %v1472 = vmul.f32 %v233, %v1446
        %v1473 = vmul.f32 %v234, %v1450
        %v1474 = vmul.f32 %v235, %v1450
        %v1475 = vmul.f32 %v236, %v1450
        %vm1500 = vcmask 1045504
        %v1501 = vrot.slane %v1452, 2
        %v1502 = vrot.slane %v1453, 2
        %v1503 = vsel %vm1500, %v1501, %v1502
        %v1504 = vrot.slane %v1454, 2
        %v1505 = vsel %vm1500, %v1502, %v1504
        %v1506 = vrot.slane %v1455, 2
        %v1507 = vrot.slane %v1456, 2
        %v1508 = vsel %vm1500, %v1506, %v1507
        %v1509 = vrot.slane %v1457, 2
        %v1510 = vsel %vm1500, %v1507, %v1509
        %v1511 = vrot.slane %v1458, 2
        %v1512 = vrot.slane %v1459, 2
        %v1513 = vsel %vm1500, %v1511, %v1512
        %v1514 = vrot.slane %v1460, 2
        %v1515 = vsel %vm1500, %v1512, %v1514
        %v1516 = vrot.slane %v1461, 2
        %v1517 = vrot.slane %v1462, 2
        %v1518 = vsel %vm1500, %v1516, %v1517
        %v1519 = vrot.slane %v1463, 2
        %v1520 = vsel %vm1500, %v1517, %v1519
        %v1521 = vrot.slane %v1464, 2
        %v1522 = vrot.slane %v1465, 2
        %v1523 = vsel %vm1500, %v1521, %v1522
        %v1524 = vrot.slane %v1466, 2
        %v1525 = vsel %vm1500, %v1522, %v1524
        %v1526 = vrot.slane %v1467, 2
        %v1527 = vrot.slane %v1468, 2
        %v1528 = vsel %vm1500, %v1526, %v1527
        %v1529 = vrot.slane %v1469, 2
        %v1530 = vsel %vm1500, %v1527, %v1529
        %v1531 = vrot.slane %v1470, 2
        %v1532 = vrot.slane %v1471, 2
        %v1533 = vsel %vm1500, %v1531, %v1532
        %v1534 = vrot.slane %v1472, 2
        %v1535 = vsel %vm1500, %v1532, %v1534
        %v1536 = vrot.slane %v1473, 2
        %v1537 = vrot.slane %v1474, 2
        %v1538 = vsel %vm1500, %v1536, %v1537
        %v1539 = vrot.slane %v1475, 2
        %v1540 = vsel %vm1500, %v1537, %v1539
        %v1557 = vadd.f32 %v1355, %v1503
        %v1558 = vadd.f32 %v1356, %v1505
        %v1559 = vadd.f32 %v1357, %v1508
        %v1560 = vadd.f32 %v1358, %v1510
        %v1561 = vadd.f32 %v1359, %v1513
        %v1562 = vadd.f32 %v1360, %v1515
        %v1563 = vadd.f32 %v1361, %v1518
        %v1564 = vadd.f32 %v1362, %v1520
        %v1565 = vadd.f32 %v1363, %v1523
        %v1566 = vadd.f32 %v1364, %v1525
        %v1567 = vadd.f32 %v1365, %v1528
        %v1568 = vadd.f32 %v1366, %v1530
        %v1569 = vadd.f32 %v1367, %v1533
        %v1570 = vadd.f32 %v1368, %v1535
        %v1571 = vadd.f32 %v1369, %v1538
        %v1572 = vadd.f32 %v1370, %v1540
        %s1573 = scalar_lea.vmem %s1, 56
        %v1574 = vld [vmem:[%s1573] sm:$0x1]
        %v1575 = vld [vmem:[%s1573 + $0x1] sm:$0x1]
        %v1576 = vld [vmem:[%s1573 + $0x2] sm:$0x1]
        %v1577 = vld [vmem:[%s1573 + $0x3] sm:$0x1]
        %v1578 = vld [vmem:[%s1573 + $0x4] sm:$0x1]
        %v1579 = vld [vmem:[%s1573 + $0x5] sm:$0x1]
        %v1580 = vld [vmem:[%s1573 + $0x6] sm:$0x1]
        %v1581 = vld [vmem:[%s1573 + $0x7] sm:$0x1]
        %v1590 = vlaneseq
        %v1591 = vshrl.u32 %v1590, 7
        %v1592 = vsub.s32 0, %v1591
        %v1593 = vrot.slane %v1574, %v1592
        %v1594 = vlaneseq
        %v1595 = vshrl.u32 %v1594, 7
        %v1596 = vsub.s32 0, %v1595
        %v1597 = vrot.slane %v1575, %v1596
        %v1598 = vlaneseq
        %v1599 = vshrl.u32 %v1598, 7
        %v1600 = vsub.s32 0, %v1599
        %v1601 = vrot.slane %v1576, %v1600
        %v1602 = vlaneseq
        %v1603 = vshrl.u32 %v1602, 7
        %v1604 = vsub.s32 0, %v1603
        %v1605 = vrot.slane %v1577, %v1604
        %v1606 = vlaneseq
        %v1607 = vshrl.u32 %v1606, 7
        %v1608 = vsub.s32 0, %v1607
        %v1609 = vrot.slane %v1578, %v1608
        %v1610 = vlaneseq
        %v1611 = vshrl.u32 %v1610, 7
        %v1612 = vsub.s32 0, %v1611
        %v1613 = vrot.slane %v1579, %v1612
        %v1614 = vlaneseq
        %v1615 = vshrl.u32 %v1614, 7
        %v1616 = vsub.s32 0, %v1615
        %v1617 = vrot.slane %v1580, %v1616
        %v1618 = vlaneseq
        %v1619 = vshrl.u32 %v1618, 7
        %v1620 = vsub.s32 0, %v1619
        %v1621 = vrot.slane %v1581, %v1620
        %1622 = vset.pattern.permute.xlu0 0
        %1623 = vperm.xlu0 %1622, %v1593
        %v1624 = vpop.permute.xlu0 %1623
        %1626 = vset.pattern.permute.xlu0 0
        %1627 = vperm.xlu0 %1626, %v1597
        %v1628 = vpop.permute.xlu0 %1627
        %1630 = vset.pattern.permute.xlu0 0
        %1631 = vperm.xlu0 %1630, %v1601
        %v1632 = vpop.permute.xlu0 %1631
        %1634 = vset.pattern.permute.xlu0 0
        %1635 = vperm.xlu0 %1634, %v1605
        %v1636 = vpop.permute.xlu0 %1635
        %1638 = vset.pattern.permute.xlu0 0
        %1639 = vperm.xlu0 %1638, %v1609
        %v1640 = vpop.permute.xlu0 %1639
        %1642 = vset.pattern.permute.xlu0 0
        %1643 = vperm.xlu0 %1642, %v1613
        %v1644 = vpop.permute.xlu0 %1643
        %1646 = vset.pattern.permute.xlu0 0
        %1647 = vperm.xlu0 %1646, %v1617
        %v1648 = vpop.permute.xlu0 %1647
        %1650 = vset.pattern.permute.xlu0 0
        %1651 = vperm.xlu0 %1650, %v1621
        %v1652 = vpop.permute.xlu0 %1651
        %v1654 = vmul.f32 %v213, %v1624
        %v1655 = vmul.f32 %v214, %v1624
        %v1656 = vmul.f32 %v215, %v1624
        %v1657 = vmul.f32 %v216, %v1628
        %v1658 = vmul.f32 %v217, %v1628
        %v1659 = vmul.f32 %v218, %v1628
        %v1660 = vmul.f32 %v219, %v1632
        %v1661 = vmul.f32 %v220, %v1632
        %v1662 = vmul.f32 %v221, %v1632
        %v1663 = vmul.f32 %v222, %v1636
        %v1664 = vmul.f32 %v223, %v1636
        %v1665 = vmul.f32 %v224, %v1636
        %v1666 = vmul.f32 %v225, %v1640
        %v1667 = vmul.f32 %v226, %v1640
        %v1668 = vmul.f32 %v227, %v1640
        %v1669 = vmul.f32 %v228, %v1644
        %v1670 = vmul.f32 %v229, %v1644
        %v1671 = vmul.f32 %v230, %v1644
        %v1672 = vmul.f32 %v231, %v1648
        %v1673 = vmul.f32 %v232, %v1648
        %v1674 = vmul.f32 %v233, %v1648
        %v1675 = vmul.f32 %v234, %v1652
        %v1676 = vmul.f32 %v235, %v1652
        %v1677 = vmul.f32 %v236, %v1652
        %v1702 = vrot.slane %v1654, 2
        %v1703 = vrot.slane %v1655, 2
        %v1704 = vsel %vm1500, %v1702, %v1703
        %v1705 = vrot.slane %v1656, 2
        %v1706 = vsel %vm1500, %v1703, %v1705
        %v1707 = vrot.slane %v1657, 2
        %v1708 = vrot.slane %v1658, 2
        %v1709 = vsel %vm1500, %v1707, %v1708
        %v1710 = vrot.slane %v1659, 2
        %v1711 = vsel %vm1500, %v1708, %v1710
        %v1712 = vrot.slane %v1660, 2
        %v1713 = vrot.slane %v1661, 2
        %v1714 = vsel %vm1500, %v1712, %v1713
        %v1715 = vrot.slane %v1662, 2
        %v1716 = vsel %vm1500, %v1713, %v1715
        %v1717 = vrot.slane %v1663, 2
        %v1718 = vrot.slane %v1664, 2
        %v1719 = vsel %vm1500, %v1717, %v1718
        %v1720 = vrot.slane %v1665, 2
        %v1721 = vsel %vm1500, %v1718, %v1720
        %v1722 = vrot.slane %v1666, 2
        %v1723 = vrot.slane %v1667, 2
        %v1724 = vsel %vm1500, %v1722, %v1723
        %v1725 = vrot.slane %v1668, 2
        %v1726 = vsel %vm1500, %v1723, %v1725
        %v1727 = vrot.slane %v1669, 2
        %v1728 = vrot.slane %v1670, 2
        %v1729 = vsel %vm1500, %v1727, %v1728
        %v1730 = vrot.slane %v1671, 2
        %v1731 = vsel %vm1500, %v1728, %v1730
        %v1732 = vrot.slane %v1672, 2
        %v1733 = vrot.slane %v1673, 2
        %v1734 = vsel %vm1500, %v1732, %v1733
        %v1735 = vrot.slane %v1674, 2
        %v1736 = vsel %vm1500, %v1733, %v1735
        %v1737 = vrot.slane %v1675, 2
        %v1738 = vrot.slane %v1676, 2
        %v1739 = vsel %vm1500, %v1737, %v1738
        %v1740 = vrot.slane %v1677, 2
        %v1741 = vsel %vm1500, %v1738, %v1740
        %1742 = vrot.lane.b32.xlu0 %v1704, 127
        %v1743 = vpop.permute.xlu0 %1742
        %1744 = vrot.lane.b32.xlu0 %v1706, 127
        %v1745 = vpop.permute.xlu0 %1744
        %1746 = vrot.lane.b32.xlu0 %v1709, 127
        %v1747 = vpop.permute.xlu0 %1746
        %1748 = vrot.lane.b32.xlu0 %v1711, 127
        %v1749 = vpop.permute.xlu0 %1748
        %1750 = vrot.lane.b32.xlu0 %v1714, 127
        %v1751 = vpop.permute.xlu0 %1750
        %1752 = vrot.lane.b32.xlu0 %v1716, 127
        %v1753 = vpop.permute.xlu0 %1752
        %1754 = vrot.lane.b32.xlu0 %v1719, 127
        %v1755 = vpop.permute.xlu0 %1754
        %1756 = vrot.lane.b32.xlu0 %v1721, 127
        %v1757 = vpop.permute.xlu0 %1756
        %1758 = vrot.lane.b32.xlu0 %v1724, 127
        %v1759 = vpop.permute.xlu0 %1758
        %1760 = vrot.lane.b32.xlu0 %v1726, 127
        %v1761 = vpop.permute.xlu0 %1760
        %1762 = vrot.lane.b32.xlu0 %v1729, 127
        %v1763 = vpop.permute.xlu0 %1762
        %1764 = vrot.lane.b32.xlu0 %v1731, 127
        %v1765 = vpop.permute.xlu0 %1764
        %1766 = vrot.lane.b32.xlu0 %v1734, 127
        %v1767 = vpop.permute.xlu0 %1766
        %1768 = vrot.lane.b32.xlu0 %v1736, 127
        %v1769 = vpop.permute.xlu0 %1768
        %1770 = vrot.lane.b32.xlu0 %v1739, 127
        %v1771 = vpop.permute.xlu0 %1770
        %1772 = vrot.lane.b32.xlu0 %v1741, 127
        %v1773 = vpop.permute.xlu0 %1772
        %v1790 = vadd.f32 %v1557, %v1743
        %v1791 = vadd.f32 %v1558, %v1745
        %v1792 = vadd.f32 %v1559, %v1747
        %v1793 = vadd.f32 %v1560, %v1749
        %v1794 = vadd.f32 %v1561, %v1751
        %v1795 = vadd.f32 %v1562, %v1753
        %v1796 = vadd.f32 %v1563, %v1755
        %v1797 = vadd.f32 %v1564, %v1757
        %v1798 = vadd.f32 %v1565, %v1759
        %v1799 = vadd.f32 %v1566, %v1761
        %v1800 = vadd.f32 %v1567, %v1763
        %v1801 = vadd.f32 %v1568, %v1765
        %v1802 = vadd.f32 %v1569, %v1767
        %v1803 = vadd.f32 %v1570, %v1769
        %v1804 = vadd.f32 %v1571, %v1771
        %v1805 = vadd.f32 %v1572, %v1773
        %s1806 = scalar_lea.vmem %s1, 64
        %v1807 = vld [vmem:[%s1806] sm:$0x1]
        %v1808 = vld [vmem:[%s1806 + $0x1] sm:$0x1]
        %v1809 = vld [vmem:[%s1806 + $0x2] sm:$0x1]
        %v1810 = vld [vmem:[%s1806 + $0x3] sm:$0x1]
        %v1811 = vld [vmem:[%s1806 + $0x4] sm:$0x1]
        %v1812 = vld [vmem:[%s1806 + $0x5] sm:$0x1]
        %v1813 = vld [vmem:[%s1806 + $0x6] sm:$0x1]
        %v1814 = vld [vmem:[%s1806 + $0x7] sm:$0x1]
        %v1823 = vlaneseq
        %v1824 = vshrl.u32 %v1823, 7
        %v1825 = vsub.s32 0, %v1824
        %v1826 = vrot.slane %v1807, %v1825
        %v1827 = vlaneseq
        %v1828 = vshrl.u32 %v1827, 7
        %v1829 = vsub.s32 0, %v1828
        %v1830 = vrot.slane %v1808, %v1829
        %v1831 = vlaneseq
        %v1832 = vshrl.u32 %v1831, 7
        %v1833 = vsub.s32 0, %v1832
        %v1834 = vrot.slane %v1809, %v1833
        %v1835 = vlaneseq
        %v1836 = vshrl.u32 %v1835, 7
        %v1837 = vsub.s32 0, %v1836
        %v1838 = vrot.slane %v1810, %v1837
        %v1839 = vlaneseq
        %v1840 = vshrl.u32 %v1839, 7
        %v1841 = vsub.s32 0, %v1840
        %v1842 = vrot.slane %v1811, %v1841
        %v1843 = vlaneseq
        %v1844 = vshrl.u32 %v1843, 7
        %v1845 = vsub.s32 0, %v1844
        %v1846 = vrot.slane %v1812, %v1845
        %v1847 = vlaneseq
        %v1848 = vshrl.u32 %v1847, 7
        %v1849 = vsub.s32 0, %v1848
        %v1850 = vrot.slane %v1813, %v1849
        %v1851 = vlaneseq
        %v1852 = vshrl.u32 %v1851, 7
        %v1853 = vsub.s32 0, %v1852
        %v1854 = vrot.slane %v1814, %v1853
        %1855 = vset.pattern.permute.xlu0 0
        %1856 = vperm.xlu0 %1855, %v1826
        %v1857 = vpop.permute.xlu0 %1856
        %1859 = vset.pattern.permute.xlu0 0
        %1860 = vperm.xlu0 %1859, %v1830
        %v1861 = vpop.permute.xlu0 %1860
        %1863 = vset.pattern.permute.xlu0 0
        %1864 = vperm.xlu0 %1863, %v1834
        %v1865 = vpop.permute.xlu0 %1864
        %1867 = vset.pattern.permute.xlu0 0
        %1868 = vperm.xlu0 %1867, %v1838
        %v1869 = vpop.permute.xlu0 %1868
        %1871 = vset.pattern.permute.xlu0 0
        %1872 = vperm.xlu0 %1871, %v1842
        %v1873 = vpop.permute.xlu0 %1872
        %1875 = vset.pattern.permute.xlu0 0
        %1876 = vperm.xlu0 %1875, %v1846
        %v1877 = vpop.permute.xlu0 %1876
        %1879 = vset.pattern.permute.xlu0 0
        %1880 = vperm.xlu0 %1879, %v1850
        %v1881 = vpop.permute.xlu0 %1880
        %1883 = vset.pattern.permute.xlu0 0
        %1884 = vperm.xlu0 %1883, %v1854
        %v1885 = vpop.permute.xlu0 %1884
        %v1887 = vmul.f32 %v213, %v1857
        %v1888 = vmul.f32 %v214, %v1857
        %v1889 = vmul.f32 %v215, %v1857
        %v1890 = vmul.f32 %v216, %v1861
        %v1891 = vmul.f32 %v217, %v1861
        %v1892 = vmul.f32 %v218, %v1861
        %v1893 = vmul.f32 %v219, %v1865
        %v1894 = vmul.f32 %v220, %v1865
        %v1895 = vmul.f32 %v221, %v1865
        %v1896 = vmul.f32 %v222, %v1869
        %v1897 = vmul.f32 %v223, %v1869
        %v1898 = vmul.f32 %v224, %v1869
        %v1899 = vmul.f32 %v225, %v1873
        %v1900 = vmul.f32 %v226, %v1873
        %v1901 = vmul.f32 %v227, %v1873
        %v1902 = vmul.f32 %v228, %v1877
        %v1903 = vmul.f32 %v229, %v1877
        %v1904 = vmul.f32 %v230, %v1877
        %v1905 = vmul.f32 %v231, %v1881
        %v1906 = vmul.f32 %v232, %v1881
        %v1907 = vmul.f32 %v233, %v1881
        %v1908 = vmul.f32 %v234, %v1885
        %v1909 = vmul.f32 %v235, %v1885
        %v1910 = vmul.f32 %v236, %v1885
        %v1935 = vrot.slane %v1887, 2
        %v1936 = vrot.slane %v1888, 2
        %v1937 = vsel %vm1500, %v1935, %v1936
        %v1938 = vrot.slane %v1889, 2
        %v1939 = vsel %vm1500, %v1936, %v1938
        %v1940 = vrot.slane %v1890, 2
        %v1941 = vrot.slane %v1891, 2
        %v1942 = vsel %vm1500, %v1940, %v1941
        %v1943 = vrot.slane %v1892, 2
        %v1944 = vsel %vm1500, %v1941, %v1943
        %v1945 = vrot.slane %v1893, 2
        %v1946 = vrot.slane %v1894, 2
        %v1947 = vsel %vm1500, %v1945, %v1946
        %v1948 = vrot.slane %v1895, 2
        %v1949 = vsel %vm1500, %v1946, %v1948
        %v1950 = vrot.slane %v1896, 2
        %v1951 = vrot.slane %v1897, 2
        %v1952 = vsel %vm1500, %v1950, %v1951
        %v1953 = vrot.slane %v1898, 2
        %v1954 = vsel %vm1500, %v1951, %v1953
        %v1955 = vrot.slane %v1899, 2
        %v1956 = vrot.slane %v1900, 2
        %v1957 = vsel %vm1500, %v1955, %v1956
        %v1958 = vrot.slane %v1901, 2
        %v1959 = vsel %vm1500, %v1956, %v1958
        %v1960 = vrot.slane %v1902, 2
        %v1961 = vrot.slane %v1903, 2
        %v1962 = vsel %vm1500, %v1960, %v1961
        %v1963 = vrot.slane %v1904, 2
        %v1964 = vsel %vm1500, %v1961, %v1963
        %v1965 = vrot.slane %v1905, 2
        %v1966 = vrot.slane %v1906, 2
        %v1967 = vsel %vm1500, %v1965, %v1966
        %v1968 = vrot.slane %v1907, 2
        %v1969 = vsel %vm1500, %v1966, %v1968
        %v1970 = vrot.slane %v1908, 2
        %v1971 = vrot.slane %v1909, 2
        %v1972 = vsel %vm1500, %v1970, %v1971
        %v1973 = vrot.slane %v1910, 2
        %v1974 = vsel %vm1500, %v1971, %v1973
        %1975 = vrot.lane.b32.xlu0 %v1937, 126
        %v1976 = vpop.permute.xlu0 %1975
        %1977 = vrot.lane.b32.xlu0 %v1939, 126
        %v1978 = vpop.permute.xlu0 %1977
        %1979 = vrot.lane.b32.xlu0 %v1942, 126
        %v1980 = vpop.permute.xlu0 %1979
        %1981 = vrot.lane.b32.xlu0 %v1944, 126
        %v1982 = vpop.permute.xlu0 %1981
        %1983 = vrot.lane.b32.xlu0 %v1947, 126
        %v1984 = vpop.permute.xlu0 %1983
        %1985 = vrot.lane.b32.xlu0 %v1949, 126
        %v1986 = vpop.permute.xlu0 %1985
        %1987 = vrot.lane.b32.xlu0 %v1952, 126
        %v1988 = vpop.permute.xlu0 %1987
        %1989 = vrot.lane.b32.xlu0 %v1954, 126
        %v1990 = vpop.permute.xlu0 %1989
        %1991 = vrot.lane.b32.xlu0 %v1957, 126
        %v1992 = vpop.permute.xlu0 %1991
        %1993 = vrot.lane.b32.xlu0 %v1959, 126
        %v1994 = vpop.permute.xlu0 %1993
        %1995 = vrot.lane.b32.xlu0 %v1962, 126
        %v1996 = vpop.permute.xlu0 %1995
        %1997 = vrot.lane.b32.xlu0 %v1964, 126
        %v1998 = vpop.permute.xlu0 %1997
        %1999 = vrot.lane.b32.xlu0 %v1967, 126
        %v2000 = vpop.permute.xlu0 %1999
        %2001 = vrot.lane.b32.xlu0 %v1969, 126
        %v2002 = vpop.permute.xlu0 %2001
        %2003 = vrot.lane.b32.xlu0 %v1972, 126
        %v2004 = vpop.permute.xlu0 %2003
        %2005 = vrot.lane.b32.xlu0 %v1974, 126
        %v2006 = vpop.permute.xlu0 %2005
        %v2023 = vadd.f32 %v1790, %v1976
        %v2024 = vadd.f32 %v1791, %v1978
        %v2025 = vadd.f32 %v1792, %v1980
        %v2026 = vadd.f32 %v1793, %v1982
        %v2027 = vadd.f32 %v1794, %v1984
        %v2028 = vadd.f32 %v1795, %v1986
        %v2029 = vadd.f32 %v1796, %v1988
        %v2030 = vadd.f32 %v1797, %v1990
        %v2031 = vadd.f32 %v1798, %v1992
        %v2032 = vadd.f32 %v1799, %v1994
        %v2033 = vadd.f32 %v1800, %v1996
        %v2034 = vadd.f32 %v1801, %v1998
        %v2035 = vadd.f32 %v1802, %v2000
        %v2036 = vadd.f32 %v1803, %v2002
        %v2037 = vadd.f32 %v1804, %v2004
        %v2038 = vadd.f32 %v1805, %v2006
        %v2039 = vld [vmem:[%s2] sm:$0xff]
        %v2040 = vld [vmem:[%s2 + $0x8] sm:$0xff]
        %v2041 = vld [vmem:[%s3] sm:$0xff]
        %v2042 = vld [vmem:[%s3 + $0x8] sm:$0xff]
        %2044 = vset.pattern.permute.xlu0 0
        %2045 = vperm.xlu0 %2044, %v2041
        %v2046 = vpop.permute.xlu0 %2045
        %2049 = vset.pattern.permute.xlu0 0
        %2050 = vperm.xlu0 %2049, %v2042
        %v2051 = vpop.permute.xlu0 %2050
        %v2061 = vrot.slane %v2025, 7
        %vm2062 = vcmask 1041409
        %v2063 = vsel %vm2062, %v2061, %v2023
        %v2064 = vrot.slane %v2027, 6
        %vm2065 = vcmask 1042434
        %v2066 = vsel %vm2065, %v2064, %v2063
        %v2067 = vrot.slane %v2029, 5
        %vm2068 = vcmask 1043459
        %v2069 = vsel %vm2068, %v2067, %v2066
        %v2070 = vrot.slane %v2031, 4
        %vm2071 = vcmask 1044484
        %v2072 = vsel %vm2071, %v2070, %v2069
        %v2073 = vrot.slane %v2033, 3
        %vm2074 = vcmask 1045509
        %v2075 = vsel %vm2074, %v2073, %v2072
        %v2076 = vrot.slane %v2035, 2
        %vm2077 = vcmask 1046534
        %v2078 = vsel %vm2077, %v2076, %v2075
        %v2079 = vrot.slane %v2037, 1
        %vm2080 = vcmask 1047559
        %v2081 = vsel %vm2080, %v2079, %v2078
        %vm2083 = vcmask 64512
        %v2085 = vsel %vm2083, %v2039, 0
        %v2088 = vsel %vm2083, %v2040, 0
        %2090 = vmatprep.subr.mxu0 0.0
        %2091 = vmatpush1.msra.mxu0 %v2081
        %2092 = vmatprep.subr.mxu0 0.0
        %2093 = vmatpush1.msra.mxu0 0.0
        %2094 = vmatprep.subr.mxu0 0.0
        %2095 = vmatpush1.msra.mxu0 0.0
        %2096 = vmatprep.subr.mxu0 0.0
        %2097 = vmatpush1.msra.mxu0 0.0
        %2098 = vmatprep.subr.mxu0 0.0
        %2099 = vmatpush1.msra.mxu0 0.0
        %2100 = vmatprep.subr.mxu0 0.0
        %2101 = vmatpush1.msra.mxu0 0.0
        %2102 = vmatprep.subr.mxu0 0.0
        %2103 = vmatpush1.msra.mxu0 0.0
        %2104 = vmatprep.subr.mxu0 0.0
        %2105 = vmatpush1.msra.mxu0 0.0
        %2106 = vmatprep.subr.mxu0 0.0
        %2107 = vmatpush1.msra.mxu0 0.0
        %2108 = vmatprep.subr.mxu0 0.0
        %2109 = vmatpush1.msra.mxu0 0.0
        %2110 = vmatprep.subr.mxu0 0.0
        %2111 = vmatpush1.msra.mxu0 0.0
        %2112 = vmatprep.subr.mxu0 0.0
        %2113 = vmatpush1.msra.mxu0 0.0
        %2114 = vmatprep.subr.mxu0 0.0
        %2115 = vmatpush1.msra.mxu0 0.0
        %2116 = vmatprep.subr.mxu0 0.0
        %2117 = vmatpush1.msra.mxu0 0.0
        %2118 = vmatprep.subr.mxu0 0.0
        %2119 = vmatpush1.msra.mxu0 0.0
        %2120 = vmatprep.subr.mxu0 0.0
        %2121 = vmatpush1.msra.mxu0 0.0
        %2122 = vmatprep.subr.mxu0 0.0
        %2123 = vmatpush1.msra.mxu0 0.0
        %2124 = vmatprep.subr.mxu0 0.0
        %2125 = vmatpush1.msra.mxu0 0.0
        %2126 = vmatprep.subr.mxu0 0.0
        %2127 = vmatpush1.msra.mxu0 0.0
        %2128 = vmatprep.subr.mxu0 0.0
        %2129 = vmatpush1.msra.mxu0 0.0
        %2130 = vmatprep.subr.mxu0 0.0
        %2131 = vmatpush1.msra.mxu0 0.0
        %2132 = vmatprep.subr.mxu0 0.0
        %2133 = vmatpush1.msra.mxu0 0.0
        %2134 = vmatprep.subr.mxu0 0.0
        %2135 = vmatpush1.msra.mxu0 0.0
        %2136 = vmatprep.subr.mxu0 0.0
        %2137 = vmatpush1.msra.mxu0 0.0
        %2138 = vmatprep.subr.mxu0 0.0
        %2139 = vmatpush1.msra.mxu0 0.0
        %2140 = vmatprep.subr.mxu0 0.0
        %2141 = vmatpush1.msra.mxu0 0.0
        %2142 = vmatprep.subr.mxu0 0.0
        %2143 = vmatpush1.msra.mxu0 0.0
        %2144 = vmatprep.subr.mxu0 0.0
        %2145 = vmatpush1.msra.mxu0 0.0
        %2146 = vmatprep.subr.mxu0 0.0
        %2147 = vmatpush1.msra.mxu0 0.0
        %2148 = vmatprep.subr.mxu0 0.0
        %2149 = vmatpush1.msra.mxu0 0.0
        %2150 = vmatprep.subr.mxu0 0.0
        %2151 = vmatpush1.msra.mxu0 0.0
        %2152 = vmatprep.subr.mxu0 0.0
        %2153 = vmatpush1.msra.mxu0 0.0
        %2154 = vmatprep.mubr.f32.mxu0 0.0
        %2155 = vmatmul.mubr.f32.gmra.mrb[0].mxu0 %v2085
        %v2156 = vpop.f32.mrb[0].mxu0
        %v2157 = vadd.f32 %v2046, %v2156
        %v2158 = vpop.f32.mrb[0].mxu0
        %2159 = vmatprep.mubr.f32.mxu0 0.0
        %2160 = vmatmul.mubr.f32.gmra.mrb[0].mxu0 %v2088
        %v2161 = vpop.f32.mrb[0].mxu0
        %v2162 = vadd.f32 %v2051, %v2161
        %v2163 = vpop.f32.mrb[0].mxu0
        %2164 = vdwg.mxu0
        %v2167 = vcombine.high %v2157, %v2157
        %v2169 = vunpack.c.l.s4 1966171168
        %v2170 = vunpack.c.0.s8 %v2169
        %v2171 = vlaneseq
        %v2172 = vshrl.u32 %v2171, 7
        %v2173 = vsub.s32 %v2170, %v2172
        %v2174 = vrot.slane %v2157, %v2173
        %v2176 = vunpack.c.l.s4 1966171168
        %v2177 = vunpack.c.0.s8 %v2176
        %v2178 = vlaneseq
        %v2179 = vshrl.u32 %v2178, 7
        %v2180 = vsub.s32 %v2177, %v2179
        %v2181 = vrot.slane %v2167, %v2180
        %v2182 = vcombine.high %v2174, %v2174
        %v2183 = vcombine.high %v2181, %v2181
        %v2185 = vunpack.c.l.s4 1966171168
        %v2186 = vunpack.c.0.s8 %v2185
        %v2187 = vlaneseq
        %v2188 = vshrl.u32 %v2187, 7
        %v2189 = vsub.s32 %v2186, %v2188
        %v2190 = vrot.slane %v2174, %v2189
        %v2192 = vunpack.c.l.s4 1966171168
        %v2193 = vunpack.c.0.s8 %v2192
        %v2194 = vlaneseq
        %v2195 = vshrl.u32 %v2194, 7
        %v2196 = vsub.s32 %v2193, %v2195
        %v2197 = vrot.slane %v2181, %v2196
        %v2199 = vunpack.c.l.s4 1966171168
        %v2200 = vunpack.c.0.s8 %v2199
        %v2201 = vlaneseq
        %v2202 = vshrl.u32 %v2201, 7
        %v2203 = vsub.s32 %v2200, %v2202
        %v2204 = vrot.slane %v2182, %v2203
        %v2206 = vunpack.c.l.s4 1966171168
        %v2207 = vunpack.c.0.s8 %v2206
        %v2208 = vlaneseq
        %v2209 = vshrl.u32 %v2208, 7
        %v2210 = vsub.s32 %v2207, %v2209
        %v2211 = vrot.slane %v2183, %v2210
        %v2212 = vcombine.high %v2190, %v2190
        %v2213 = vcombine.high %v2197, %v2197
        %v2214 = vcombine.high %v2204, %v2204
        %v2215 = vcombine.high %v2211, %v2211
        %v2216 = vcombine.high %v2162, %v2162
        %v2218 = vunpack.c.l.s4 1966171168
        %v2219 = vunpack.c.0.s8 %v2218
        %v2220 = vlaneseq
        %v2221 = vshrl.u32 %v2220, 7
        %v2222 = vsub.s32 %v2219, %v2221
        %v2223 = vrot.slane %v2162, %v2222
        %v2225 = vunpack.c.l.s4 1966171168
        %v2226 = vunpack.c.0.s8 %v2225
        %v2227 = vlaneseq
        %v2228 = vshrl.u32 %v2227, 7
        %v2229 = vsub.s32 %v2226, %v2228
        %v2230 = vrot.slane %v2216, %v2229
        %v2231 = vcombine.high %v2223, %v2223
        %v2232 = vcombine.high %v2230, %v2230
        %v2234 = vunpack.c.l.s4 1966171168
        %v2235 = vunpack.c.0.s8 %v2234
        %v2236 = vlaneseq
        %v2237 = vshrl.u32 %v2236, 7
        %v2238 = vsub.s32 %v2235, %v2237
        %v2239 = vrot.slane %v2223, %v2238
        %v2241 = vunpack.c.l.s4 1966171168
        %v2242 = vunpack.c.0.s8 %v2241
        %v2243 = vlaneseq
        %v2244 = vshrl.u32 %v2243, 7
        %v2245 = vsub.s32 %v2242, %v2244
        %v2246 = vrot.slane %v2230, %v2245
        %v2248 = vunpack.c.l.s4 1966171168
        %v2249 = vunpack.c.0.s8 %v2248
        %v2250 = vlaneseq
        %v2251 = vshrl.u32 %v2250, 7
        %v2252 = vsub.s32 %v2249, %v2251
        %v2253 = vrot.slane %v2231, %v2252
        %v2255 = vunpack.c.l.s4 1966171168
        %v2256 = vunpack.c.0.s8 %v2255
        %v2257 = vlaneseq
        %v2258 = vshrl.u32 %v2257, 7
        %v2259 = vsub.s32 %v2256, %v2258
        %v2260 = vrot.slane %v2232, %v2259
        %v2261 = vcombine.high %v2239, %v2239
        %v2262 = vcombine.high %v2246, %v2246
        %v2263 = vcombine.high %v2253, %v2253
        %v2264 = vcombine.high %v2260, %v2260
        %vm2281 = vcmask 253952
        %2282 = vst.msk [vmem:[%s204] sm:$0x1] %vm2281, %v2190
        %2283 = vst.msk [vmem:[%s204 + $0x10] sm:$0x1] %vm2281, %v2204
        %2284 = vst.msk [vmem:[%s204 + $0x20] sm:$0x1] %vm2281, %v2212
        %2285 = vst.msk [vmem:[%s204 + $0x30] sm:$0x1] %vm2281, %v2214
        %2286 = vst.msk [vmem:[%s204 + $0x40] sm:$0x1] %vm2281, %v2197
        %2287 = vst.msk [vmem:[%s204 + $0x50] sm:$0x1] %vm2281, %v2211
        %2288 = vst.msk [vmem:[%s204 + $0x60] sm:$0x1] %vm2281, %v2213
        %2289 = vst.msk [vmem:[%s204 + $0x70] sm:$0x1] %vm2281, %v2215
        %2290 = vst.msk [vmem:[%s204 + $0x80] sm:$0x1] %vm2281, %v2239
        %2291 = vst.msk [vmem:[%s204 + $0x90] sm:$0x1] %vm2281, %v2253
        %2292 = vst.msk [vmem:[%s204 + $0xa0] sm:$0x1] %vm2281, %v2261
        %2293 = vst.msk [vmem:[%s204 + $0xb0] sm:$0x1] %vm2281, %v2263
        %2294 = vst.msk [vmem:[%s204 + $0xc0] sm:$0x1] %vm2281, %v2246
        %2295 = vst.msk [vmem:[%s204 + $0xd0] sm:$0x1] %vm2281, %v2260
        %2296 = vst.msk [vmem:[%s204 + $0xe0] sm:$0x1] %vm2281, %v2262
        %2297 = vst.msk [vmem:[%s204 + $0xf0] sm:$0x1] %vm2281, %v2264
        %v2298 = vrot.slane %v2023, 1
        %v2299 = vsel %vm2062, %v2025, %v2298
        %v2300 = vrot.slane %v2027, 7
        %v2301 = vsel %vm2065, %v2300, %v2299
        %v2302 = vrot.slane %v2029, 6
        %v2303 = vsel %vm2068, %v2302, %v2301
        %v2304 = vrot.slane %v2031, 5
        %v2305 = vsel %vm2071, %v2304, %v2303
        %v2306 = vrot.slane %v2033, 4
        %v2307 = vsel %vm2074, %v2306, %v2305
        %v2308 = vrot.slane %v2035, 3
        %v2309 = vsel %vm2077, %v2308, %v2307
        %v2310 = vrot.slane %v2037, 2
        %v2311 = vsel %vm2080, %v2310, %v2309
        %2313 = vmatprep.subr.mxu0 0.0
        %2314 = vmatpush1.msra.mxu0 %v2311
        %2315 = vmatprep.subr.mxu0 0.0
        %2316 = vmatpush1.msra.mxu0 0.0
        %2317 = vmatprep.subr.mxu0 0.0
        %2318 = vmatpush1.msra.mxu0 0.0
        %2319 = vmatprep.subr.mxu0 0.0
        %2320 = vmatpush1.msra.mxu0 0.0
        %2321 = vmatprep.subr.mxu0 0.0
        %2322 = vmatpush1.msra.mxu0 0.0
        %2323 = vmatprep.subr.mxu0 0.0
        %2324 = vmatpush1.msra.mxu0 0.0
        %2325 = vmatprep.subr.mxu0 0.0
        %2326 = vmatpush1.msra.mxu0 0.0
        %2327 = vmatprep.subr.mxu0 0.0
        %2328 = vmatpush1.msra.mxu0 0.0
        %2329 = vmatprep.subr.mxu0 0.0
        %2330 = vmatpush1.msra.mxu0 0.0
        %2331 = vmatprep.subr.mxu0 0.0
        %2332 = vmatpush1.msra.mxu0 0.0
        %2333 = vmatprep.subr.mxu0 0.0
        %2334 = vmatpush1.msra.mxu0 0.0
        %2335 = vmatprep.subr.mxu0 0.0
        %2336 = vmatpush1.msra.mxu0 0.0
        %2337 = vmatprep.subr.mxu0 0.0
        %2338 = vmatpush1.msra.mxu0 0.0
        %2339 = vmatprep.subr.mxu0 0.0
        %2340 = vmatpush1.msra.mxu0 0.0
        %2341 = vmatprep.subr.mxu0 0.0
        %2342 = vmatpush1.msra.mxu0 0.0
        %2343 = vmatprep.subr.mxu0 0.0
        %2344 = vmatpush1.msra.mxu0 0.0
        %2345 = vmatprep.subr.mxu0 0.0
        %2346 = vmatpush1.msra.mxu0 0.0
        %2347 = vmatprep.subr.mxu0 0.0
        %2348 = vmatpush1.msra.mxu0 0.0
        %2349 = vmatprep.subr.mxu0 0.0
        %2350 = vmatpush1.msra.mxu0 0.0
        %2351 = vmatprep.subr.mxu0 0.0
        %2352 = vmatpush1.msra.mxu0 0.0
        %2353 = vmatprep.subr.mxu0 0.0
        %2354 = vmatpush1.msra.mxu0 0.0
        %2355 = vmatprep.subr.mxu0 0.0
        %2356 = vmatpush1.msra.mxu0 0.0
        %2357 = vmatprep.subr.mxu0 0.0
        %2358 = vmatpush1.msra.mxu0 0.0
        %2359 = vmatprep.subr.mxu0 0.0
        %2360 = vmatpush1.msra.mxu0 0.0
        %2361 = vmatprep.subr.mxu0 0.0
        %2362 = vmatpush1.msra.mxu0 0.0
        %2363 = vmatprep.subr.mxu0 0.0
        %2364 = vmatpush1.msra.mxu0 0.0
        %2365 = vmatprep.subr.mxu0 0.0
        %2366 = vmatpush1.msra.mxu0 0.0
        %2367 = vmatprep.subr.mxu0 0.0
        %2368 = vmatpush1.msra.mxu0 0.0
        %2369 = vmatprep.subr.mxu0 0.0
        %2370 = vmatpush1.msra.mxu0 0.0
        %2371 = vmatprep.subr.mxu0 0.0
        %2372 = vmatpush1.msra.mxu0 0.0
        %2373 = vmatprep.subr.mxu0 0.0
        %2374 = vmatpush1.msra.mxu0 0.0
        %2375 = vmatprep.subr.mxu0 0.0
        %2376 = vmatpush1.msra.mxu0 0.0
        %2377 = vmatprep.mubr.f32.mxu0 0.0
        %2378 = vmatmul.mubr.f32.gmra.mrb[0].mxu0 %v2085
        %v2379 = vpop.f32.mrb[0].mxu0
        %v2380 = vadd.f32 %v2046, %v2379
        %v2381 = vpop.f32.mrb[0].mxu0
        %2382 = vmatprep.mubr.f32.mxu0 0.0
        %2383 = vmatmul.mubr.f32.gmra.mrb[0].mxu0 %v2088
        %v2384 = vpop.f32.mrb[0].mxu0
        %v2385 = vadd.f32 %v2051, %v2384
        %v2386 = vpop.f32.mrb[0].mxu0
        %2387 = vdwg.mxu0
        %v2390 = vcombine.high %v2380, %v2380
        %v2392 = vunpack.c.l.s4 1966171168
        %v2393 = vunpack.c.0.s8 %v2392
        %v2394 = vlaneseq
        %v2395 = vshrl.u32 %v2394, 7
        %v2396 = vsub.s32 %v2393, %v2395
        %v2397 = vrot.slane %v2380, %v2396
        %v2399 = vunpack.c.l.s4 1966171168
        %v2400 = vunpack.c.0.s8 %v2399
        %v2401 = vlaneseq
        %v2402 = vshrl.u32 %v2401, 7
        %v2403 = vsub.s32 %v2400, %v2402
        %v2404 = vrot.slane %v2390, %v2403
        %v2405 = vcombine.high %v2397, %v2397
        %v2406 = vcombine.high %v2404, %v2404
        %v2408 = vunpack.c.l.s4 1966171168
        %v2409 = vunpack.c.0.s8 %v2408
        %v2410 = vlaneseq
        %v2411 = vshrl.u32 %v2410, 7
        %v2412 = vsub.s32 %v2409, %v2411
        %v2413 = vrot.slane %v2397, %v2412
        %v2415 = vunpack.c.l.s4 1966171168
        %v2416 = vunpack.c.0.s8 %v2415
        %v2417 = vlaneseq
        %v2418 = vshrl.u32 %v2417, 7
        %v2419 = vsub.s32 %v2416, %v2418
        %v2420 = vrot.slane %v2404, %v2419
        %v2422 = vunpack.c.l.s4 1966171168
        %v2423 = vunpack.c.0.s8 %v2422
        %v2424 = vlaneseq
        %v2425 = vshrl.u32 %v2424, 7
        %v2426 = vsub.s32 %v2423, %v2425
        %v2427 = vrot.slane %v2405, %v2426
        %v2429 = vunpack.c.l.s4 1966171168
        %v2430 = vunpack.c.0.s8 %v2429
        %v2431 = vlaneseq
        %v2432 = vshrl.u32 %v2431, 7
        %v2433 = vsub.s32 %v2430, %v2432
        %v2434 = vrot.slane %v2406, %v2433
        %v2435 = vcombine.high %v2413, %v2413
        %v2436 = vcombine.high %v2420, %v2420
        %v2437 = vcombine.high %v2427, %v2427
        %v2438 = vcombine.high %v2434, %v2434
        %v2439 = vcombine.high %v2385, %v2385
        %v2441 = vunpack.c.l.s4 1966171168
        %v2442 = vunpack.c.0.s8 %v2441
        %v2443 = vlaneseq
        %v2444 = vshrl.u32 %v2443, 7
        %v2445 = vsub.s32 %v2442, %v2444
        %v2446 = vrot.slane %v2385, %v2445
        %v2448 = vunpack.c.l.s4 1966171168
        %v2449 = vunpack.c.0.s8 %v2448
        %v2450 = vlaneseq
        %v2451 = vshrl.u32 %v2450, 7
        %v2452 = vsub.s32 %v2449, %v2451
        %v2453 = vrot.slane %v2439, %v2452
        %v2454 = vcombine.high %v2446, %v2446
        %v2455 = vcombine.high %v2453, %v2453
        %v2457 = vunpack.c.l.s4 1966171168
        %v2458 = vunpack.c.0.s8 %v2457
        %v2459 = vlaneseq
        %v2460 = vshrl.u32 %v2459, 7
        %v2461 = vsub.s32 %v2458, %v2460
        %v2462 = vrot.slane %v2446, %v2461
        %v2464 = vunpack.c.l.s4 1966171168
        %v2465 = vunpack.c.0.s8 %v2464
        %v2466 = vlaneseq
        %v2467 = vshrl.u32 %v2466, 7
        %v2468 = vsub.s32 %v2465, %v2467
        %v2469 = vrot.slane %v2453, %v2468
        %v2471 = vunpack.c.l.s4 1966171168
        %v2472 = vunpack.c.0.s8 %v2471
        %v2473 = vlaneseq
        %v2474 = vshrl.u32 %v2473, 7
        %v2475 = vsub.s32 %v2472, %v2474
        %v2476 = vrot.slane %v2454, %v2475
        %v2478 = vunpack.c.l.s4 1966171168
        %v2479 = vunpack.c.0.s8 %v2478
        %v2480 = vlaneseq
        %v2481 = vshrl.u32 %v2480, 7
        %v2482 = vsub.s32 %v2479, %v2481
        %v2483 = vrot.slane %v2455, %v2482
        %v2484 = vcombine.high %v2462, %v2462
        %v2485 = vcombine.high %v2469, %v2469
        %v2486 = vcombine.high %v2476, %v2476
        %v2487 = vcombine.high %v2483, %v2483
        %2504 = vst.msk [vmem:[%s204 + $0x1] sm:$0x1] %vm2281, %v2413
        %2505 = vst.msk [vmem:[%s204 + $0x11] sm:$0x1] %vm2281, %v2427
        %2506 = vst.msk [vmem:[%s204 + $0x21] sm:$0x1] %vm2281, %v2435
        %2507 = vst.msk [vmem:[%s204 + $0x31] sm:$0x1] %vm2281, %v2437
        %2508 = vst.msk [vmem:[%s204 + $0x41] sm:$0x1] %vm2281, %v2420
        %2509 = vst.msk [vmem:[%s204 + $0x51] sm:$0x1] %vm2281, %v2434
        %2510 = vst.msk [vmem:[%s204 + $0x61] sm:$0x1] %vm2281, %v2436
        %2511 = vst.msk [vmem:[%s204 + $0x71] sm:$0x1] %vm2281, %v2438
        %2512 = vst.msk [vmem:[%s204 + $0x81] sm:$0x1] %vm2281, %v2462
        %2513 = vst.msk [vmem:[%s204 + $0x91] sm:$0x1] %vm2281, %v2476
        %2514 = vst.msk [vmem:[%s204 + $0xa1] sm:$0x1] %vm2281, %v2484
        %2515 = vst.msk [vmem:[%s204 + $0xb1] sm:$0x1] %vm2281, %v2486
        %2516 = vst.msk [vmem:[%s204 + $0xc1] sm:$0x1] %vm2281, %v2469
        %2517 = vst.msk [vmem:[%s204 + $0xd1] sm:$0x1] %vm2281, %v2483
        %2518 = vst.msk [vmem:[%s204 + $0xe1] sm:$0x1] %vm2281, %v2485
        %2519 = vst.msk [vmem:[%s204 + $0xf1] sm:$0x1] %vm2281, %v2487
        %v2520 = vrot.slane %v2023, 2
        %v2521 = vrot.slane %v2025, 1
        %v2522 = vsel %vm2062, %v2521, %v2520
        %v2523 = vsel %vm2065, %v2027, %v2522
        %v2524 = vrot.slane %v2029, 7
        %v2525 = vsel %vm2068, %v2524, %v2523
        %v2526 = vrot.slane %v2031, 6
        %v2527 = vsel %vm2071, %v2526, %v2525
        %v2528 = vrot.slane %v2033, 5
        %v2529 = vsel %vm2074, %v2528, %v2527
        %v2530 = vrot.slane %v2035, 4
        %v2531 = vsel %vm2077, %v2530, %v2529
        %v2532 = vrot.slane %v2037, 3
        %v2533 = vsel %vm2080, %v2532, %v2531
        %2535 = vmatprep.subr.mxu0 0.0
        %2536 = vmatpush1.msra.mxu0 %v2533
        %2537 = vmatprep.subr.mxu0 0.0
        %2538 = vmatpush1.msra.mxu0 0.0
        %2539 = vmatprep.subr.mxu0 0.0
        %2540 = vmatpush1.msra.mxu0 0.0
        %2541 = vmatprep.subr.mxu0 0.0
        %2542 = vmatpush1.msra.mxu0 0.0
        %2543 = vmatprep.subr.mxu0 0.0
        %2544 = vmatpush1.msra.mxu0 0.0
        %2545 = vmatprep.subr.mxu0 0.0
        %2546 = vmatpush1.msra.mxu0 0.0
        %2547 = vmatprep.subr.mxu0 0.0
        %2548 = vmatpush1.msra.mxu0 0.0
        %2549 = vmatprep.subr.mxu0 0.0
        %2550 = vmatpush1.msra.mxu0 0.0
        %2551 = vmatprep.subr.mxu0 0.0
        %2552 = vmatpush1.msra.mxu0 0.0
        %2553 = vmatprep.subr.mxu0 0.0
        %2554 = vmatpush1.msra.mxu0 0.0
        %2555 = vmatprep.subr.mxu0 0.0
        %2556 = vmatpush1.msra.mxu0 0.0
        %2557 = vmatprep.subr.mxu0 0.0
        %2558 = vmatpush1.msra.mxu0 0.0
        %2559 = vmatprep.subr.mxu0 0.0
        %2560 = vmatpush1.msra.mxu0 0.0
        %2561 = vmatprep.subr.mxu0 0.0
        %2562 = vmatpush1.msra.mxu0 0.0
        %2563 = vmatprep.subr.mxu0 0.0
        %2564 = vmatpush1.msra.mxu0 0.0
        %2565 = vmatprep.subr.mxu0 0.0
        %2566 = vmatpush1.msra.mxu0 0.0
        %2567 = vmatprep.subr.mxu0 0.0
        %2568 = vmatpush1.msra.mxu0 0.0
        %2569 = vmatprep.subr.mxu0 0.0
        %2570 = vmatpush1.msra.mxu0 0.0
        %2571 = vmatprep.subr.mxu0 0.0
        %2572 = vmatpush1.msra.mxu0 0.0
        %2573 = vmatprep.subr.mxu0 0.0
        %2574 = vmatpush1.msra.mxu0 0.0
        %2575 = vmatprep.subr.mxu0 0.0
        %2576 = vmatpush1.msra.mxu0 0.0
        %2577 = vmatprep.subr.mxu0 0.0
        %2578 = vmatpush1.msra.mxu0 0.0
        %2579 = vmatprep.subr.mxu0 0.0
        %2580 = vmatpush1.msra.mxu0 0.0
        %2581 = vmatprep.subr.mxu0 0.0
        %2582 = vmatpush1.msra.mxu0 0.0
        %2583 = vmatprep.subr.mxu0 0.0
        %2584 = vmatpush1.msra.mxu0 0.0
        %2585 = vmatprep.subr.mxu0 0.0
        %2586 = vmatpush1.msra.mxu0 0.0
        %2587 = vmatprep.subr.mxu0 0.0
        %2588 = vmatpush1.msra.mxu0 0.0
        %2589 = vmatprep.subr.mxu0 0.0
        %2590 = vmatpush1.msra.mxu0 0.0
        %2591 = vmatprep.subr.mxu0 0.0
        %2592 = vmatpush1.msra.mxu0 0.0
        %2593 = vmatprep.subr.mxu0 0.0
        %2594 = vmatpush1.msra.mxu0 0.0
        %2595 = vmatprep.subr.mxu0 0.0
        %2596 = vmatpush1.msra.mxu0 0.0
        %2597 = vmatprep.subr.mxu0 0.0
        %2598 = vmatpush1.msra.mxu0 0.0
        %2599 = vmatprep.mubr.f32.mxu0 0.0
        %2600 = vmatmul.mubr.f32.gmra.mrb[0].mxu0 %v2085
        %v2601 = vpop.f32.mrb[0].mxu0
        %v2602 = vadd.f32 %v2046, %v2601
        %v2603 = vpop.f32.mrb[0].mxu0
        %2604 = vmatprep.mubr.f32.mxu0 0.0
        %2605 = vmatmul.mubr.f32.gmra.mrb[0].mxu0 %v2088
        %v2606 = vpop.f32.mrb[0].mxu0
        %v2607 = vadd.f32 %v2051, %v2606
        %v2608 = vpop.f32.mrb[0].mxu0
        %2609 = vdwg.mxu0
        %v2612 = vcombine.high %v2602, %v2602
        %v2614 = vunpack.c.l.s4 1966171168
        %v2615 = vunpack.c.0.s8 %v2614
        %v2616 = vlaneseq
        %v2617 = vshrl.u32 %v2616, 7
        %v2618 = vsub.s32 %v2615, %v2617
        %v2619 = vrot.slane %v2602, %v2618
        %v2621 = vunpack.c.l.s4 1966171168
        %v2622 = vunpack.c.0.s8 %v2621
        %v2623 = vlaneseq
        %v2624 = vshrl.u32 %v2623, 7
        %v2625 = vsub.s32 %v2622, %v2624
        %v2626 = vrot.slane %v2612, %v2625
        %v2627 = vcombine.high %v2619, %v2619
        %v2628 = vcombine.high %v2626, %v2626
        %v2630 = vunpack.c.l.s4 1966171168
        %v2631 = vunpack.c.0.s8 %v2630
        %v2632 = vlaneseq
        %v2633 = vshrl.u32 %v2632, 7
        %v2634 = vsub.s32 %v2631, %v2633
        %v2635 = vrot.slane %v2619, %v2634
        %v2637 = vunpack.c.l.s4 1966171168
        %v2638 = vunpack.c.0.s8 %v2637
        %v2639 = vlaneseq
        %v2640 = vshrl.u32 %v2639, 7
        %v2641 = vsub.s32 %v2638, %v2640
        %v2642 = vrot.slane %v2626, %v2641
        %v2644 = vunpack.c.l.s4 1966171168
        %v2645 = vunpack.c.0.s8 %v2644
        %v2646 = vlaneseq
        %v2647 = vshrl.u32 %v2646, 7
        %v2648 = vsub.s32 %v2645, %v2647
        %v2649 = vrot.slane %v2627, %v2648
        %v2651 = vunpack.c.l.s4 1966171168
        %v2652 = vunpack.c.0.s8 %v2651
        %v2653 = vlaneseq
        %v2654 = vshrl.u32 %v2653, 7
        %v2655 = vsub.s32 %v2652, %v2654
        %v2656 = vrot.slane %v2628, %v2655
        %v2657 = vcombine.high %v2635, %v2635
        %v2658 = vcombine.high %v2642, %v2642
        %v2659 = vcombine.high %v2649, %v2649
        %v2660 = vcombine.high %v2656, %v2656
        %v2661 = vcombine.high %v2607, %v2607
        %v2663 = vunpack.c.l.s4 1966171168
        %v2664 = vunpack.c.0.s8 %v2663
        %v2665 = vlaneseq
        %v2666 = vshrl.u32 %v2665, 7
        %v2667 = vsub.s32 %v2664, %v2666
        %v2668 = vrot.slane %v2607, %v2667
        %v2670 = vunpack.c.l.s4 1966171168
        %v2671 = vunpack.c.0.s8 %v2670
        %v2672 = vlaneseq
        %v2673 = vshrl.u32 %v2672, 7
        %v2674 = vsub.s32 %v2671, %v2673
        %v2675 = vrot.slane %v2661, %v2674
        %v2676 = vcombine.high %v2668, %v2668
        %v2677 = vcombine.high %v2675, %v2675
        %v2679 = vunpack.c.l.s4 1966171168
        %v2680 = vunpack.c.0.s8 %v2679
        %v2681 = vlaneseq
        %v2682 = vshrl.u32 %v2681, 7
        %v2683 = vsub.s32 %v2680, %v2682
        %v2684 = vrot.slane %v2668, %v2683
        %v2686 = vunpack.c.l.s4 1966171168
        %v2687 = vunpack.c.0.s8 %v2686
        %v2688 = vlaneseq
        %v2689 = vshrl.u32 %v2688, 7
        %v2690 = vsub.s32 %v2687, %v2689
        %v2691 = vrot.slane %v2675, %v2690
        %v2693 = vunpack.c.l.s4 1966171168
        %v2694 = vunpack.c.0.s8 %v2693
        %v2695 = vlaneseq
        %v2696 = vshrl.u32 %v2695, 7
        %v2697 = vsub.s32 %v2694, %v2696
        %v2698 = vrot.slane %v2676, %v2697
        %v2700 = vunpack.c.l.s4 1966171168
        %v2701 = vunpack.c.0.s8 %v2700
        %v2702 = vlaneseq
        %v2703 = vshrl.u32 %v2702, 7
        %v2704 = vsub.s32 %v2701, %v2703
        %v2705 = vrot.slane %v2677, %v2704
        %v2706 = vcombine.high %v2684, %v2684
        %v2707 = vcombine.high %v2691, %v2691
        %v2708 = vcombine.high %v2698, %v2698
        %v2709 = vcombine.high %v2705, %v2705
        %2726 = vst.msk [vmem:[%s204 + $0x2] sm:$0x1] %vm2281, %v2635
        %2727 = vst.msk [vmem:[%s204 + $0x12] sm:$0x1] %vm2281, %v2649
        %2728 = vst.msk [vmem:[%s204 + $0x22] sm:$0x1] %vm2281, %v2657
        %2729 = vst.msk [vmem:[%s204 + $0x32] sm:$0x1] %vm2281, %v2659
        %2730 = vst.msk [vmem:[%s204 + $0x42] sm:$0x1] %vm2281, %v2642
        %2731 = vst.msk [vmem:[%s204 + $0x52] sm:$0x1] %vm2281, %v2656
        %2732 = vst.msk [vmem:[%s204 + $0x62] sm:$0x1] %vm2281, %v2658
        %2733 = vst.msk [vmem:[%s204 + $0x72] sm:$0x1] %vm2281, %v2660
        %2734 = vst.msk [vmem:[%s204 + $0x82] sm:$0x1] %vm2281, %v2684
        %2735 = vst.msk [vmem:[%s204 + $0x92] sm:$0x1] %vm2281, %v2698
        %2736 = vst.msk [vmem:[%s204 + $0xa2] sm:$0x1] %vm2281, %v2706
        %2737 = vst.msk [vmem:[%s204 + $0xb2] sm:$0x1] %vm2281, %v2708
        %2738 = vst.msk [vmem:[%s204 + $0xc2] sm:$0x1] %vm2281, %v2691
        %2739 = vst.msk [vmem:[%s204 + $0xd2] sm:$0x1] %vm2281, %v2705
        %2740 = vst.msk [vmem:[%s204 + $0xe2] sm:$0x1] %vm2281, %v2707
        %2741 = vst.msk [vmem:[%s204 + $0xf2] sm:$0x1] %vm2281, %v2709
        %v2742 = vrot.slane %v2023, 3
        %v2743 = vrot.slane %v2025, 2
        %v2744 = vsel %vm2062, %v2743, %v2742
        %v2745 = vrot.slane %v2027, 1
        %v2746 = vsel %vm2065, %v2745, %v2744
        %v2747 = vsel %vm2068, %v2029, %v2746
        %v2748 = vrot.slane %v2031, 7
        %v2749 = vsel %vm2071, %v2748, %v2747
        %v2750 = vrot.slane %v2033, 6
        %v2751 = vsel %vm2074, %v2750, %v2749
        %v2752 = vrot.slane %v2035, 5
        %v2753 = vsel %vm2077, %v2752, %v2751
        %v2754 = vrot.slane %v2037, 4
        %v2755 = vsel %vm2080, %v2754, %v2753
        %2757 = vmatprep.subr.mxu0 0.0
        %2758 = vmatpush1.msra.mxu0 %v2755
        %2759 = vmatprep.subr.mxu0 0.0
        %2760 = vmatpush1.msra.mxu0 0.0
        %2761 = vmatprep.subr.mxu0 0.0
        %2762 = vmatpush1.msra.mxu0 0.0
        %2763 = vmatprep.subr.mxu0 0.0
        %2764 = vmatpush1.msra.mxu0 0.0
        %2765 = vmatprep.subr.mxu0 0.0
        %2766 = vmatpush1.msra.mxu0 0.0
        %2767 = vmatprep.subr.mxu0 0.0
        %2768 = vmatpush1.msra.mxu0 0.0
        %2769 = vmatprep.subr.mxu0 0.0
        %2770 = vmatpush1.msra.mxu0 0.0
        %2771 = vmatprep.subr.mxu0 0.0
        %2772 = vmatpush1.msra.mxu0 0.0
        %2773 = vmatprep.subr.mxu0 0.0
        %2774 = vmatpush1.msra.mxu0 0.0
        %2775 = vmatprep.subr.mxu0 0.0
        %2776 = vmatpush1.msra.mxu0 0.0
        %2777 = vmatprep.subr.mxu0 0.0
        %2778 = vmatpush1.msra.mxu0 0.0
        %2779 = vmatprep.subr.mxu0 0.0
        %2780 = vmatpush1.msra.mxu0 0.0
        %2781 = vmatprep.subr.mxu0 0.0
        %2782 = vmatpush1.msra.mxu0 0.0
        %2783 = vmatprep.subr.mxu0 0.0
        %2784 = vmatpush1.msra.mxu0 0.0
        %2785 = vmatprep.subr.mxu0 0.0
        %2786 = vmatpush1.msra.mxu0 0.0
        %2787 = vmatprep.subr.mxu0 0.0
        %2788 = vmatpush1.msra.mxu0 0.0
        %2789 = vmatprep.subr.mxu0 0.0
        %2790 = vmatpush1.msra.mxu0 0.0
        %2791 = vmatprep.subr.mxu0 0.0
        %2792 = vmatpush1.msra.mxu0 0.0
        %2793 = vmatprep.subr.mxu0 0.0
        %2794 = vmatpush1.msra.mxu0 0.0
        %2795 = vmatprep.subr.mxu0 0.0
        %2796 = vmatpush1.msra.mxu0 0.0
        %2797 = vmatprep.subr.mxu0 0.0
        %2798 = vmatpush1.msra.mxu0 0.0
        %2799 = vmatprep.subr.mxu0 0.0
        %2800 = vmatpush1.msra.mxu0 0.0
        %2801 = vmatprep.subr.mxu0 0.0
        %2802 = vmatpush1.msra.mxu0 0.0
        %2803 = vmatprep.subr.mxu0 0.0
        %2804 = vmatpush1.msra.mxu0 0.0
        %2805 = vmatprep.subr.mxu0 0.0
        %2806 = vmatpush1.msra.mxu0 0.0
        %2807 = vmatprep.subr.mxu0 0.0
        %2808 = vmatpush1.msra.mxu0 0.0
        %2809 = vmatprep.subr.mxu0 0.0
        %2810 = vmatpush1.msra.mxu0 0.0
        %2811 = vmatprep.subr.mxu0 0.0
        %2812 = vmatpush1.msra.mxu0 0.0
        %2813 = vmatprep.subr.mxu0 0.0
        %2814 = vmatpush1.msra.mxu0 0.0
        %2815 = vmatprep.subr.mxu0 0.0
        %2816 = vmatpush1.msra.mxu0 0.0
        %2817 = vmatprep.subr.mxu0 0.0
        %2818 = vmatpush1.msra.mxu0 0.0
        %2819 = vmatprep.subr.mxu0 0.0
        %2820 = vmatpush1.msra.mxu0 0.0
        %2821 = vmatprep.mubr.f32.mxu0 0.0
        %2822 = vmatmul.mubr.f32.gmra.mrb[0].mxu0 %v2085
        %v2823 = vpop.f32.mrb[0].mxu0
        %v2824 = vadd.f32 %v2046, %v2823
        %v2825 = vpop.f32.mrb[0].mxu0
        %2826 = vmatprep.mubr.f32.mxu0 0.0
        %2827 = vmatmul.mubr.f32.gmra.mrb[0].mxu0 %v2088
        %v2828 = vpop.f32.mrb[0].mxu0
        %v2829 = vadd.f32 %v2051, %v2828
        %v2830 = vpop.f32.mrb[0].mxu0
        %2831 = vdwg.mxu0
        %v2834 = vcombine.high %v2824, %v2824
        %v2836 = vunpack.c.l.s4 1966171168
        %v2837 = vunpack.c.0.s8 %v2836
        %v2838 = vlaneseq
        %v2839 = vshrl.u32 %v2838, 7
        %v2840 = vsub.s32 %v2837, %v2839
        %v2841 = vrot.slane %v2824, %v2840
        %v2843 = vunpack.c.l.s4 1966171168
        %v2844 = vunpack.c.0.s8 %v2843
        %v2845 = vlaneseq
        %v2846 = vshrl.u32 %v2845, 7
        %v2847 = vsub.s32 %v2844, %v2846
        %v2848 = vrot.slane %v2834, %v2847
        %v2849 = vcombine.high %v2841, %v2841
        %v2850 = vcombine.high %v2848, %v2848
        %v2852 = vunpack.c.l.s4 1966171168
        %v2853 = vunpack.c.0.s8 %v2852
        %v2854 = vlaneseq
        %v2855 = vshrl.u32 %v2854, 7
        %v2856 = vsub.s32 %v2853, %v2855
        %v2857 = vrot.slane %v2841, %v2856
        %v2859 = vunpack.c.l.s4 1966171168
        %v2860 = vunpack.c.0.s8 %v2859
        %v2861 = vlaneseq
        %v2862 = vshrl.u32 %v2861, 7
        %v2863 = vsub.s32 %v2860, %v2862
        %v2864 = vrot.slane %v2848, %v2863
        %v2866 = vunpack.c.l.s4 1966171168
        %v2867 = vunpack.c.0.s8 %v2866
        %v2868 = vlaneseq
        %v2869 = vshrl.u32 %v2868, 7
        %v2870 = vsub.s32 %v2867, %v2869
        %v2871 = vrot.slane %v2849, %v2870
        %v2873 = vunpack.c.l.s4 1966171168
        %v2874 = vunpack.c.0.s8 %v2873
        %v2875 = vlaneseq
        %v2876 = vshrl.u32 %v2875, 7
        %v2877 = vsub.s32 %v2874, %v2876
        %v2878 = vrot.slane %v2850, %v2877
        %v2879 = vcombine.high %v2857, %v2857
        %v2880 = vcombine.high %v2864, %v2864
        %v2881 = vcombine.high %v2871, %v2871
        %v2882 = vcombine.high %v2878, %v2878
        %v2883 = vcombine.high %v2829, %v2829
        %v2885 = vunpack.c.l.s4 1966171168
        %v2886 = vunpack.c.0.s8 %v2885
        %v2887 = vlaneseq
        %v2888 = vshrl.u32 %v2887, 7
        %v2889 = vsub.s32 %v2886, %v2888
        %v2890 = vrot.slane %v2829, %v2889
        %v2892 = vunpack.c.l.s4 1966171168
        %v2893 = vunpack.c.0.s8 %v2892
        %v2894 = vlaneseq
        %v2895 = vshrl.u32 %v2894, 7
        %v2896 = vsub.s32 %v2893, %v2895
        %v2897 = vrot.slane %v2883, %v2896
        %v2898 = vcombine.high %v2890, %v2890
        %v2899 = vcombine.high %v2897, %v2897
        %v2901 = vunpack.c.l.s4 1966171168
        %v2902 = vunpack.c.0.s8 %v2901
        %v2903 = vlaneseq
        %v2904 = vshrl.u32 %v2903, 7
        %v2905 = vsub.s32 %v2902, %v2904
        %v2906 = vrot.slane %v2890, %v2905
        %v2908 = vunpack.c.l.s4 1966171168
        %v2909 = vunpack.c.0.s8 %v2908
        %v2910 = vlaneseq
        %v2911 = vshrl.u32 %v2910, 7
        %v2912 = vsub.s32 %v2909, %v2911
        %v2913 = vrot.slane %v2897, %v2912
        %v2915 = vunpack.c.l.s4 1966171168
        %v2916 = vunpack.c.0.s8 %v2915
        %v2917 = vlaneseq
        %v2918 = vshrl.u32 %v2917, 7
        %v2919 = vsub.s32 %v2916, %v2918
        %v2920 = vrot.slane %v2898, %v2919
        %v2922 = vunpack.c.l.s4 1966171168
        %v2923 = vunpack.c.0.s8 %v2922
        %v2924 = vlaneseq
        %v2925 = vshrl.u32 %v2924, 7
        %v2926 = vsub.s32 %v2923, %v2925
        %v2927 = vrot.slane %v2899, %v2926
        %v2928 = vcombine.high %v2906, %v2906
        %v2929 = vcombine.high %v2913, %v2913
        %v2930 = vcombine.high %v2920, %v2920
        %v2931 = vcombine.high %v2927, %v2927
        %2948 = vst.msk [vmem:[%s204 + $0x3] sm:$0x1] %vm2281, %v2857
        %2949 = vst.msk [vmem:[%s204 + $0x13] sm:$0x1] %vm2281, %v2871
        %2950 = vst.msk [vmem:[%s204 + $0x23] sm:$0x1] %vm2281, %v2879
        %2951 = vst.msk [vmem:[%s204 + $0x33] sm:$0x1] %vm2281, %v2881
        %2952 = vst.msk [vmem:[%s204 + $0x43] sm:$0x1] %vm2281, %v2864
        %2953 = vst.msk [vmem:[%s204 + $0x53] sm:$0x1] %vm2281, %v2878
        %2954 = vst.msk [vmem:[%s204 + $0x63] sm:$0x1] %vm2281, %v2880
        %2955 = vst.msk [vmem:[%s204 + $0x73] sm:$0x1] %vm2281, %v2882
        %2956 = vst.msk [vmem:[%s204 + $0x83] sm:$0x1] %vm2281, %v2906
        %2957 = vst.msk [vmem:[%s204 + $0x93] sm:$0x1] %vm2281, %v2920
        %2958 = vst.msk [vmem:[%s204 + $0xa3] sm:$0x1] %vm2281, %v2928
        %2959 = vst.msk [vmem:[%s204 + $0xb3] sm:$0x1] %vm2281, %v2930
        %2960 = vst.msk [vmem:[%s204 + $0xc3] sm:$0x1] %vm2281, %v2913
        %2961 = vst.msk [vmem:[%s204 + $0xd3] sm:$0x1] %vm2281, %v2927
        %2962 = vst.msk [vmem:[%s204 + $0xe3] sm:$0x1] %vm2281, %v2929
        %2963 = vst.msk [vmem:[%s204 + $0xf3] sm:$0x1] %vm2281, %v2931
        %v2964 = vrot.slane %v2023, 4
        %v2965 = vrot.slane %v2025, 3
        %v2966 = vsel %vm2062, %v2965, %v2964
        %v2967 = vrot.slane %v2027, 2
        %v2968 = vsel %vm2065, %v2967, %v2966
        %v2969 = vrot.slane %v2029, 1
        %v2970 = vsel %vm2068, %v2969, %v2968
        %v2971 = vsel %vm2071, %v2031, %v2970
        %v2972 = vrot.slane %v2033, 7
        %v2973 = vsel %vm2074, %v2972, %v2971
        %v2974 = vrot.slane %v2035, 6
        %v2975 = vsel %vm2077, %v2974, %v2973
        %v2976 = vrot.slane %v2037, 5
        %v2977 = vsel %vm2080, %v2976, %v2975
        %2979 = vmatprep.subr.mxu0 0.0
        %2980 = vmatpush1.msra.mxu0 %v2977
        %2981 = vmatprep.subr.mxu0 0.0
        %2982 = vmatpush1.msra.mxu0 0.0
        %2983 = vmatprep.subr.mxu0 0.0
        %2984 = vmatpush1.msra.mxu0 0.0
        %2985 = vmatprep.subr.mxu0 0.0
        %2986 = vmatpush1.msra.mxu0 0.0
        %2987 = vmatprep.subr.mxu0 0.0
        %2988 = vmatpush1.msra.mxu0 0.0
        %2989 = vmatprep.subr.mxu0 0.0
        %2990 = vmatpush1.msra.mxu0 0.0
        %2991 = vmatprep.subr.mxu0 0.0
        %2992 = vmatpush1.msra.mxu0 0.0
        %2993 = vmatprep.subr.mxu0 0.0
        %2994 = vmatpush1.msra.mxu0 0.0
        %2995 = vmatprep.subr.mxu0 0.0
        %2996 = vmatpush1.msra.mxu0 0.0
        %2997 = vmatprep.subr.mxu0 0.0
        %2998 = vmatpush1.msra.mxu0 0.0
        %2999 = vmatprep.subr.mxu0 0.0
        %3000 = vmatpush1.msra.mxu0 0.0
        %3001 = vmatprep.subr.mxu0 0.0
        %3002 = vmatpush1.msra.mxu0 0.0
        %3003 = vmatprep.subr.mxu0 0.0
        %3004 = vmatpush1.msra.mxu0 0.0
        %3005 = vmatprep.subr.mxu0 0.0
        %3006 = vmatpush1.msra.mxu0 0.0
        %3007 = vmatprep.subr.mxu0 0.0
        %3008 = vmatpush1.msra.mxu0 0.0
        %3009 = vmatprep.subr.mxu0 0.0
        %3010 = vmatpush1.msra.mxu0 0.0
        %3011 = vmatprep.subr.mxu0 0.0
        %3012 = vmatpush1.msra.mxu0 0.0
        %3013 = vmatprep.subr.mxu0 0.0
        %3014 = vmatpush1.msra.mxu0 0.0
        %3015 = vmatprep.subr.mxu0 0.0
        %3016 = vmatpush1.msra.mxu0 0.0
        %3017 = vmatprep.subr.mxu0 0.0
        %3018 = vmatpush1.msra.mxu0 0.0
        %3019 = vmatprep.subr.mxu0 0.0
        %3020 = vmatpush1.msra.mxu0 0.0
        %3021 = vmatprep.subr.mxu0 0.0
        %3022 = vmatpush1.msra.mxu0 0.0
        %3023 = vmatprep.subr.mxu0 0.0
        %3024 = vmatpush1.msra.mxu0 0.0
        %3025 = vmatprep.subr.mxu0 0.0
        %3026 = vmatpush1.msra.mxu0 0.0
        %3027 = vmatprep.subr.mxu0 0.0
        %3028 = vmatpush1.msra.mxu0 0.0
        %3029 = vmatprep.subr.mxu0 0.0
        %3030 = vmatpush1.msra.mxu0 0.0
        %3031 = vmatprep.subr.mxu0 0.0
        %3032 = vmatpush1.msra.mxu0 0.0
        %3033 = vmatprep.subr.mxu0 0.0
        %3034 = vmatpush1.msra.mxu0 0.0
        %3035 = vmatprep.subr.mxu0 0.0
        %3036 = vmatpush1.msra.mxu0 0.0
        %3037 = vmatprep.subr.mxu0 0.0
        %3038 = vmatpush1.msra.mxu0 0.0
        %3039 = vmatprep.subr.mxu0 0.0
        %3040 = vmatpush1.msra.mxu0 0.0
        %3041 = vmatprep.subr.mxu0 0.0
        %3042 = vmatpush1.msra.mxu0 0.0
        %3043 = vmatprep.mubr.f32.mxu0 0.0
        %3044 = vmatmul.mubr.f32.gmra.mrb[0].mxu0 %v2085
        %v3045 = vpop.f32.mrb[0].mxu0
        %v3046 = vadd.f32 %v2046, %v3045
        %v3047 = vpop.f32.mrb[0].mxu0
        %3048 = vmatprep.mubr.f32.mxu0 0.0
        %3049 = vmatmul.mubr.f32.gmra.mrb[0].mxu0 %v2088
        %v3050 = vpop.f32.mrb[0].mxu0
        %v3051 = vadd.f32 %v2051, %v3050
        %v3052 = vpop.f32.mrb[0].mxu0
        %3053 = vdwg.mxu0
        %v3056 = vcombine.high %v3046, %v3046
        %v3058 = vunpack.c.l.s4 1966171168
        %v3059 = vunpack.c.0.s8 %v3058
        %v3060 = vlaneseq
        %v3061 = vshrl.u32 %v3060, 7
        %v3062 = vsub.s32 %v3059, %v3061
        %v3063 = vrot.slane %v3046, %v3062
        %v3065 = vunpack.c.l.s4 1966171168
        %v3066 = vunpack.c.0.s8 %v3065
        %v3067 = vlaneseq
        %v3068 = vshrl.u32 %v3067, 7
        %v3069 = vsub.s32 %v3066, %v3068
        %v3070 = vrot.slane %v3056, %v3069
        %v3071 = vcombine.high %v3063, %v3063
        %v3072 = vcombine.high %v3070, %v3070
        %v3074 = vunpack.c.l.s4 1966171168
        %v3075 = vunpack.c.0.s8 %v3074
        %v3076 = vlaneseq
        %v3077 = vshrl.u32 %v3076, 7
        %v3078 = vsub.s32 %v3075, %v3077
        %v3079 = vrot.slane %v3063, %v3078
        %v3081 = vunpack.c.l.s4 1966171168
        %v3082 = vunpack.c.0.s8 %v3081
        %v3083 = vlaneseq
        %v3084 = vshrl.u32 %v3083, 7
        %v3085 = vsub.s32 %v3082, %v3084
        %v3086 = vrot.slane %v3070, %v3085
        %v3088 = vunpack.c.l.s4 1966171168
        %v3089 = vunpack.c.0.s8 %v3088
        %v3090 = vlaneseq
        %v3091 = vshrl.u32 %v3090, 7
        %v3092 = vsub.s32 %v3089, %v3091
        %v3093 = vrot.slane %v3071, %v3092
        %v3095 = vunpack.c.l.s4 1966171168
        %v3096 = vunpack.c.0.s8 %v3095
        %v3097 = vlaneseq
        %v3098 = vshrl.u32 %v3097, 7
        %v3099 = vsub.s32 %v3096, %v3098
        %v3100 = vrot.slane %v3072, %v3099
        %v3101 = vcombine.high %v3079, %v3079
        %v3102 = vcombine.high %v3086, %v3086
        %v3103 = vcombine.high %v3093, %v3093
        %v3104 = vcombine.high %v3100, %v3100
        %v3105 = vcombine.high %v3051, %v3051
        %v3107 = vunpack.c.l.s4 1966171168
        %v3108 = vunpack.c.0.s8 %v3107
        %v3109 = vlaneseq
        %v3110 = vshrl.u32 %v3109, 7
        %v3111 = vsub.s32 %v3108, %v3110
        %v3112 = vrot.slane %v3051, %v3111
        %v3114 = vunpack.c.l.s4 1966171168
        %v3115 = vunpack.c.0.s8 %v3114
        %v3116 = vlaneseq
        %v3117 = vshrl.u32 %v3116, 7
        %v3118 = vsub.s32 %v3115, %v3117
        %v3119 = vrot.slane %v3105, %v3118
        %v3120 = vcombine.high %v3112, %v3112
        %v3121 = vcombine.high %v3119, %v3119
        %v3123 = vunpack.c.l.s4 1966171168
        %v3124 = vunpack.c.0.s8 %v3123
        %v3125 = vlaneseq
        %v3126 = vshrl.u32 %v3125, 7
        %v3127 = vsub.s32 %v3124, %v3126
        %v3128 = vrot.slane %v3112, %v3127
        %v3130 = vunpack.c.l.s4 1966171168
        %v3131 = vunpack.c.0.s8 %v3130
        %v3132 = vlaneseq
        %v3133 = vshrl.u32 %v3132, 7
        %v3134 = vsub.s32 %v3131, %v3133
        %v3135 = vrot.slane %v3119, %v3134
        %v3137 = vunpack.c.l.s4 1966171168
        %v3138 = vunpack.c.0.s8 %v3137
        %v3139 = vlaneseq
        %v3140 = vshrl.u32 %v3139, 7
        %v3141 = vsub.s32 %v3138, %v3140
        %v3142 = vrot.slane %v3120, %v3141
        %v3144 = vunpack.c.l.s4 1966171168
        %v3145 = vunpack.c.0.s8 %v3144
        %v3146 = vlaneseq
        %v3147 = vshrl.u32 %v3146, 7
        %v3148 = vsub.s32 %v3145, %v3147
        %v3149 = vrot.slane %v3121, %v3148
        %v3150 = vcombine.high %v3128, %v3128
        %v3151 = vcombine.high %v3135, %v3135
        %v3152 = vcombine.high %v3142, %v3142
        %v3153 = vcombine.high %v3149, %v3149
        %3170 = vst.msk [vmem:[%s204 + $0x4] sm:$0x1] %vm2281, %v3079
        %3171 = vst.msk [vmem:[%s204 + $0x14] sm:$0x1] %vm2281, %v3093
        %3172 = vst.msk [vmem:[%s204 + $0x24] sm:$0x1] %vm2281, %v3101
        %3173 = vst.msk [vmem:[%s204 + $0x34] sm:$0x1] %vm2281, %v3103
        %3174 = vst.msk [vmem:[%s204 + $0x44] sm:$0x1] %vm2281, %v3086
        %3175 = vst.msk [vmem:[%s204 + $0x54] sm:$0x1] %vm2281, %v3100
        %3176 = vst.msk [vmem:[%s204 + $0x64] sm:$0x1] %vm2281, %v3102
        %3177 = vst.msk [vmem:[%s204 + $0x74] sm:$0x1] %vm2281, %v3104
        %3178 = vst.msk [vmem:[%s204 + $0x84] sm:$0x1] %vm2281, %v3128
        %3179 = vst.msk [vmem:[%s204 + $0x94] sm:$0x1] %vm2281, %v3142
        %3180 = vst.msk [vmem:[%s204 + $0xa4] sm:$0x1] %vm2281, %v3150
        %3181 = vst.msk [vmem:[%s204 + $0xb4] sm:$0x1] %vm2281, %v3152
        %3182 = vst.msk [vmem:[%s204 + $0xc4] sm:$0x1] %vm2281, %v3135
        %3183 = vst.msk [vmem:[%s204 + $0xd4] sm:$0x1] %vm2281, %v3149
        %3184 = vst.msk [vmem:[%s204 + $0xe4] sm:$0x1] %vm2281, %v3151
        %3185 = vst.msk [vmem:[%s204 + $0xf4] sm:$0x1] %vm2281, %v3153
        %v3186 = vrot.slane %v2023, 5
        %v3187 = vrot.slane %v2025, 4
        %v3188 = vsel %vm2062, %v3187, %v3186
        %v3189 = vrot.slane %v2027, 3
        %v3190 = vsel %vm2065, %v3189, %v3188
        %v3191 = vrot.slane %v2029, 2
        %v3192 = vsel %vm2068, %v3191, %v3190
        %v3193 = vrot.slane %v2031, 1
        %v3194 = vsel %vm2071, %v3193, %v3192
        %v3195 = vsel %vm2074, %v2033, %v3194
        %v3196 = vrot.slane %v2035, 7
        %v3197 = vsel %vm2077, %v3196, %v3195
        %v3198 = vrot.slane %v2037, 6
        %v3199 = vsel %vm2080, %v3198, %v3197
        %3201 = vmatprep.subr.mxu0 0.0
        %3202 = vmatpush1.msra.mxu0 %v3199
        %3203 = vmatprep.subr.mxu0 0.0
        %3204 = vmatpush1.msra.mxu0 0.0
        %3205 = vmatprep.subr.mxu0 0.0
        %3206 = vmatpush1.msra.mxu0 0.0
        %3207 = vmatprep.subr.mxu0 0.0
        %3208 = vmatpush1.msra.mxu0 0.0
        %3209 = vmatprep.subr.mxu0 0.0
        %3210 = vmatpush1.msra.mxu0 0.0
        %3211 = vmatprep.subr.mxu0 0.0
        %3212 = vmatpush1.msra.mxu0 0.0
        %3213 = vmatprep.subr.mxu0 0.0
        %3214 = vmatpush1.msra.mxu0 0.0
        %3215 = vmatprep.subr.mxu0 0.0
        %3216 = vmatpush1.msra.mxu0 0.0
        %3217 = vmatprep.subr.mxu0 0.0
        %3218 = vmatpush1.msra.mxu0 0.0
        %3219 = vmatprep.subr.mxu0 0.0
        %3220 = vmatpush1.msra.mxu0 0.0
        %3221 = vmatprep.subr.mxu0 0.0
        %3222 = vmatpush1.msra.mxu0 0.0
        %3223 = vmatprep.subr.mxu0 0.0
        %3224 = vmatpush1.msra.mxu0 0.0
        %3225 = vmatprep.subr.mxu0 0.0
        %3226 = vmatpush1.msra.mxu0 0.0
        %3227 = vmatprep.subr.mxu0 0.0
        %3228 = vmatpush1.msra.mxu0 0.0
        %3229 = vmatprep.subr.mxu0 0.0
        %3230 = vmatpush1.msra.mxu0 0.0
        %3231 = vmatprep.subr.mxu0 0.0
        %3232 = vmatpush1.msra.mxu0 0.0
        %3233 = vmatprep.subr.mxu0 0.0
        %3234 = vmatpush1.msra.mxu0 0.0
        %3235 = vmatprep.subr.mxu0 0.0
        %3236 = vmatpush1.msra.mxu0 0.0
        %3237 = vmatprep.subr.mxu0 0.0
        %3238 = vmatpush1.msra.mxu0 0.0
        %3239 = vmatprep.subr.mxu0 0.0
        %3240 = vmatpush1.msra.mxu0 0.0
        %3241 = vmatprep.subr.mxu0 0.0
        %3242 = vmatpush1.msra.mxu0 0.0
        %3243 = vmatprep.subr.mxu0 0.0
        %3244 = vmatpush1.msra.mxu0 0.0
        %3245 = vmatprep.subr.mxu0 0.0
        %3246 = vmatpush1.msra.mxu0 0.0
        %3247 = vmatprep.subr.mxu0 0.0
        %3248 = vmatpush1.msra.mxu0 0.0
        %3249 = vmatprep.subr.mxu0 0.0
        %3250 = vmatpush1.msra.mxu0 0.0
        %3251 = vmatprep.subr.mxu0 0.0
        %3252 = vmatpush1.msra.mxu0 0.0
        %3253 = vmatprep.subr.mxu0 0.0
        %3254 = vmatpush1.msra.mxu0 0.0
        %3255 = vmatprep.subr.mxu0 0.0
        %3256 = vmatpush1.msra.mxu0 0.0
        %3257 = vmatprep.subr.mxu0 0.0
        %3258 = vmatpush1.msra.mxu0 0.0
        %3259 = vmatprep.subr.mxu0 0.0
        %3260 = vmatpush1.msra.mxu0 0.0
        %3261 = vmatprep.subr.mxu0 0.0
        %3262 = vmatpush1.msra.mxu0 0.0
        %3263 = vmatprep.subr.mxu0 0.0
        %3264 = vmatpush1.msra.mxu0 0.0
        %3265 = vmatprep.mubr.f32.mxu0 0.0
        %3266 = vmatmul.mubr.f32.gmra.mrb[0].mxu0 %v2085
        %v3267 = vpop.f32.mrb[0].mxu0
        %v3268 = vadd.f32 %v2046, %v3267
        %v3269 = vpop.f32.mrb[0].mxu0
        %3270 = vmatprep.mubr.f32.mxu0 0.0
        %3271 = vmatmul.mubr.f32.gmra.mrb[0].mxu0 %v2088
        %v3272 = vpop.f32.mrb[0].mxu0
        %v3273 = vadd.f32 %v2051, %v3272
        %v3274 = vpop.f32.mrb[0].mxu0
        %3275 = vdwg.mxu0
        %v3278 = vcombine.high %v3268, %v3268
        %v3280 = vunpack.c.l.s4 1966171168
        %v3281 = vunpack.c.0.s8 %v3280
        %v3282 = vlaneseq
        %v3283 = vshrl.u32 %v3282, 7
        %v3284 = vsub.s32 %v3281, %v3283
        %v3285 = vrot.slane %v3268, %v3284
        %v3287 = vunpack.c.l.s4 1966171168
        %v3288 = vunpack.c.0.s8 %v3287
        %v3289 = vlaneseq
        %v3290 = vshrl.u32 %v3289, 7
        %v3291 = vsub.s32 %v3288, %v3290
        %v3292 = vrot.slane %v3278, %v3291
        %v3293 = vcombine.high %v3285, %v3285
        %v3294 = vcombine.high %v3292, %v3292
        %v3296 = vunpack.c.l.s4 1966171168
        %v3297 = vunpack.c.0.s8 %v3296
        %v3298 = vlaneseq
        %v3299 = vshrl.u32 %v3298, 7
        %v3300 = vsub.s32 %v3297, %v3299
        %v3301 = vrot.slane %v3285, %v3300
        %v3303 = vunpack.c.l.s4 1966171168
        %v3304 = vunpack.c.0.s8 %v3303
        %v3305 = vlaneseq
        %v3306 = vshrl.u32 %v3305, 7
        %v3307 = vsub.s32 %v3304, %v3306
        %v3308 = vrot.slane %v3292, %v3307
        %v3310 = vunpack.c.l.s4 1966171168
        %v3311 = vunpack.c.0.s8 %v3310
        %v3312 = vlaneseq
        %v3313 = vshrl.u32 %v3312, 7
        %v3314 = vsub.s32 %v3311, %v3313
        %v3315 = vrot.slane %v3293, %v3314
        %v3317 = vunpack.c.l.s4 1966171168
        %v3318 = vunpack.c.0.s8 %v3317
        %v3319 = vlaneseq
        %v3320 = vshrl.u32 %v3319, 7
        %v3321 = vsub.s32 %v3318, %v3320
        %v3322 = vrot.slane %v3294, %v3321
        %v3323 = vcombine.high %v3301, %v3301
        %v3324 = vcombine.high %v3308, %v3308
        %v3325 = vcombine.high %v3315, %v3315
        %v3326 = vcombine.high %v3322, %v3322
        %v3327 = vcombine.high %v3273, %v3273
        %v3329 = vunpack.c.l.s4 1966171168
        %v3330 = vunpack.c.0.s8 %v3329
        %v3331 = vlaneseq
        %v3332 = vshrl.u32 %v3331, 7
        %v3333 = vsub.s32 %v3330, %v3332
        %v3334 = vrot.slane %v3273, %v3333
        %v3336 = vunpack.c.l.s4 1966171168
        %v3337 = vunpack.c.0.s8 %v3336
        %v3338 = vlaneseq
        %v3339 = vshrl.u32 %v3338, 7
        %v3340 = vsub.s32 %v3337, %v3339
        %v3341 = vrot.slane %v3327, %v3340
        %v3342 = vcombine.high %v3334, %v3334
        %v3343 = vcombine.high %v3341, %v3341
        %v3345 = vunpack.c.l.s4 1966171168
        %v3346 = vunpack.c.0.s8 %v3345
        %v3347 = vlaneseq
        %v3348 = vshrl.u32 %v3347, 7
        %v3349 = vsub.s32 %v3346, %v3348
        %v3350 = vrot.slane %v3334, %v3349
        %v3352 = vunpack.c.l.s4 1966171168
        %v3353 = vunpack.c.0.s8 %v3352
        %v3354 = vlaneseq
        %v3355 = vshrl.u32 %v3354, 7
        %v3356 = vsub.s32 %v3353, %v3355
        %v3357 = vrot.slane %v3341, %v3356
        %v3359 = vunpack.c.l.s4 1966171168
        %v3360 = vunpack.c.0.s8 %v3359
        %v3361 = vlaneseq
        %v3362 = vshrl.u32 %v3361, 7
        %v3363 = vsub.s32 %v3360, %v3362
        %v3364 = vrot.slane %v3342, %v3363
        %v3366 = vunpack.c.l.s4 1966171168
        %v3367 = vunpack.c.0.s8 %v3366
        %v3368 = vlaneseq
        %v3369 = vshrl.u32 %v3368, 7
        %v3370 = vsub.s32 %v3367, %v3369
        %v3371 = vrot.slane %v3343, %v3370
        %v3372 = vcombine.high %v3350, %v3350
        %v3373 = vcombine.high %v3357, %v3357
        %v3374 = vcombine.high %v3364, %v3364
        %v3375 = vcombine.high %v3371, %v3371
        %3392 = vst.msk [vmem:[%s204 + $0x5] sm:$0x1] %vm2281, %v3301
        %3393 = vst.msk [vmem:[%s204 + $0x15] sm:$0x1] %vm2281, %v3315
        %3394 = vst.msk [vmem:[%s204 + $0x25] sm:$0x1] %vm2281, %v3323
        %3395 = vst.msk [vmem:[%s204 + $0x35] sm:$0x1] %vm2281, %v3325
        %3396 = vst.msk [vmem:[%s204 + $0x45] sm:$0x1] %vm2281, %v3308
        %3397 = vst.msk [vmem:[%s204 + $0x55] sm:$0x1] %vm2281, %v3322
        %3398 = vst.msk [vmem:[%s204 + $0x65] sm:$0x1] %vm2281, %v3324
        %3399 = vst.msk [vmem:[%s204 + $0x75] sm:$0x1] %vm2281, %v3326
        %3400 = vst.msk [vmem:[%s204 + $0x85] sm:$0x1] %vm2281, %v3350
        %3401 = vst.msk [vmem:[%s204 + $0x95] sm:$0x1] %vm2281, %v3364
        %3402 = vst.msk [vmem:[%s204 + $0xa5] sm:$0x1] %vm2281, %v3372
        %3403 = vst.msk [vmem:[%s204 + $0xb5] sm:$0x1] %vm2281, %v3374
        %3404 = vst.msk [vmem:[%s204 + $0xc5] sm:$0x1] %vm2281, %v3357
        %3405 = vst.msk [vmem:[%s204 + $0xd5] sm:$0x1] %vm2281, %v3371
        %3406 = vst.msk [vmem:[%s204 + $0xe5] sm:$0x1] %vm2281, %v3373
        %3407 = vst.msk [vmem:[%s204 + $0xf5] sm:$0x1] %vm2281, %v3375
        %v3408 = vrot.slane %v2023, 6
        %v3409 = vrot.slane %v2025, 5
        %v3410 = vsel %vm2062, %v3409, %v3408
        %v3411 = vrot.slane %v2027, 4
        %v3412 = vsel %vm2065, %v3411, %v3410
        %v3413 = vrot.slane %v2029, 3
        %v3414 = vsel %vm2068, %v3413, %v3412
        %v3415 = vrot.slane %v2031, 2
        %v3416 = vsel %vm2071, %v3415, %v3414
        %v3417 = vrot.slane %v2033, 1
        %v3418 = vsel %vm2074, %v3417, %v3416
        %v3419 = vsel %vm2077, %v2035, %v3418
        %v3420 = vrot.slane %v2037, 7
        %v3421 = vsel %vm2080, %v3420, %v3419
        %3423 = vmatprep.subr.mxu0 0.0
        %3424 = vmatpush1.msra.mxu0 %v3421
        %3425 = vmatprep.subr.mxu0 0.0
        %3426 = vmatpush1.msra.mxu0 0.0
        %3427 = vmatprep.subr.mxu0 0.0
        %3428 = vmatpush1.msra.mxu0 0.0
        %3429 = vmatprep.subr.mxu0 0.0
        %3430 = vmatpush1.msra.mxu0 0.0
        %3431 = vmatprep.subr.mxu0 0.0
        %3432 = vmatpush1.msra.mxu0 0.0
        %3433 = vmatprep.subr.mxu0 0.0
        %3434 = vmatpush1.msra.mxu0 0.0
        %3435 = vmatprep.subr.mxu0 0.0
        %3436 = vmatpush1.msra.mxu0 0.0
        %3437 = vmatprep.subr.mxu0 0.0
        %3438 = vmatpush1.msra.mxu0 0.0
        %3439 = vmatprep.subr.mxu0 0.0
        %3440 = vmatpush1.msra.mxu0 0.0
        %3441 = vmatprep.subr.mxu0 0.0
        %3442 = vmatpush1.msra.mxu0 0.0
        %3443 = vmatprep.subr.mxu0 0.0
        %3444 = vmatpush1.msra.mxu0 0.0
        %3445 = vmatprep.subr.mxu0 0.0
        %3446 = vmatpush1.msra.mxu0 0.0
        %3447 = vmatprep.subr.mxu0 0.0
        %3448 = vmatpush1.msra.mxu0 0.0
        %3449 = vmatprep.subr.mxu0 0.0
        %3450 = vmatpush1.msra.mxu0 0.0
        %3451 = vmatprep.subr.mxu0 0.0
        %3452 = vmatpush1.msra.mxu0 0.0
        %3453 = vmatprep.subr.mxu0 0.0
        %3454 = vmatpush1.msra.mxu0 0.0
        %3455 = vmatprep.subr.mxu0 0.0
        %3456 = vmatpush1.msra.mxu0 0.0
        %3457 = vmatprep.subr.mxu0 0.0
        %3458 = vmatpush1.msra.mxu0 0.0
        %3459 = vmatprep.subr.mxu0 0.0
        %3460 = vmatpush1.msra.mxu0 0.0
        %3461 = vmatprep.subr.mxu0 0.0
        %3462 = vmatpush1.msra.mxu0 0.0
        %3463 = vmatprep.subr.mxu0 0.0
        %3464 = vmatpush1.msra.mxu0 0.0
        %3465 = vmatprep.subr.mxu0 0.0
        %3466 = vmatpush1.msra.mxu0 0.0
        %3467 = vmatprep.subr.mxu0 0.0
        %3468 = vmatpush1.msra.mxu0 0.0
        %3469 = vmatprep.subr.mxu0 0.0
        %3470 = vmatpush1.msra.mxu0 0.0
        %3471 = vmatprep.subr.mxu0 0.0
        %3472 = vmatpush1.msra.mxu0 0.0
        %3473 = vmatprep.subr.mxu0 0.0
        %3474 = vmatpush1.msra.mxu0 0.0
        %3475 = vmatprep.subr.mxu0 0.0
        %3476 = vmatpush1.msra.mxu0 0.0
        %3477 = vmatprep.subr.mxu0 0.0
        %3478 = vmatpush1.msra.mxu0 0.0
        %3479 = vmatprep.subr.mxu0 0.0
        %3480 = vmatpush1.msra.mxu0 0.0
        %3481 = vmatprep.subr.mxu0 0.0
        %3482 = vmatpush1.msra.mxu0 0.0
        %3483 = vmatprep.subr.mxu0 0.0
        %3484 = vmatpush1.msra.mxu0 0.0
        %3485 = vmatprep.subr.mxu0 0.0
        %3486 = vmatpush1.msra.mxu0 0.0
        %3487 = vmatprep.mubr.f32.mxu0 0.0
        %3488 = vmatmul.mubr.f32.gmra.mrb[0].mxu0 %v2085
        %v3489 = vpop.f32.mrb[0].mxu0
        %v3490 = vadd.f32 %v2046, %v3489
        %v3491 = vpop.f32.mrb[0].mxu0
        %3492 = vmatprep.mubr.f32.mxu0 0.0
        %3493 = vmatmul.mubr.f32.gmra.mrb[0].mxu0 %v2088
        %v3494 = vpop.f32.mrb[0].mxu0
        %v3495 = vadd.f32 %v2051, %v3494
        %v3496 = vpop.f32.mrb[0].mxu0
        %3497 = vdwg.mxu0
        %v3500 = vcombine.high %v3490, %v3490
        %v3502 = vunpack.c.l.s4 1966171168
        %v3503 = vunpack.c.0.s8 %v3502
        %v3504 = vlaneseq
        %v3505 = vshrl.u32 %v3504, 7
        %v3506 = vsub.s32 %v3503, %v3505
        %v3507 = vrot.slane %v3490, %v3506
        %v3509 = vunpack.c.l.s4 1966171168
        %v3510 = vunpack.c.0.s8 %v3509
        %v3511 = vlaneseq
        %v3512 = vshrl.u32 %v3511, 7
        %v3513 = vsub.s32 %v3510, %v3512
        %v3514 = vrot.slane %v3500, %v3513
        %v3515 = vcombine.high %v3507, %v3507
        %v3516 = vcombine.high %v3514, %v3514
        %v3518 = vunpack.c.l.s4 1966171168
        %v3519 = vunpack.c.0.s8 %v3518
        %v3520 = vlaneseq
        %v3521 = vshrl.u32 %v3520, 7
        %v3522 = vsub.s32 %v3519, %v3521
        %v3523 = vrot.slane %v3507, %v3522
        %v3525 = vunpack.c.l.s4 1966171168
        %v3526 = vunpack.c.0.s8 %v3525
        %v3527 = vlaneseq
        %v3528 = vshrl.u32 %v3527, 7
        %v3529 = vsub.s32 %v3526, %v3528
        %v3530 = vrot.slane %v3514, %v3529
        %v3532 = vunpack.c.l.s4 1966171168
        %v3533 = vunpack.c.0.s8 %v3532
        %v3534 = vlaneseq
        %v3535 = vshrl.u32 %v3534, 7
        %v3536 = vsub.s32 %v3533, %v3535
        %v3537 = vrot.slane %v3515, %v3536
        %v3539 = vunpack.c.l.s4 1966171168
        %v3540 = vunpack.c.0.s8 %v3539
        %v3541 = vlaneseq
        %v3542 = vshrl.u32 %v3541, 7
        %v3543 = vsub.s32 %v3540, %v3542
        %v3544 = vrot.slane %v3516, %v3543
        %v3545 = vcombine.high %v3523, %v3523
        %v3546 = vcombine.high %v3530, %v3530
        %v3547 = vcombine.high %v3537, %v3537
        %v3548 = vcombine.high %v3544, %v3544
        %v3549 = vcombine.high %v3495, %v3495
        %v3551 = vunpack.c.l.s4 1966171168
        %v3552 = vunpack.c.0.s8 %v3551
        %v3553 = vlaneseq
        %v3554 = vshrl.u32 %v3553, 7
        %v3555 = vsub.s32 %v3552, %v3554
        %v3556 = vrot.slane %v3495, %v3555
        %v3558 = vunpack.c.l.s4 1966171168
        %v3559 = vunpack.c.0.s8 %v3558
        %v3560 = vlaneseq
        %v3561 = vshrl.u32 %v3560, 7
        %v3562 = vsub.s32 %v3559, %v3561
        %v3563 = vrot.slane %v3549, %v3562
        %v3564 = vcombine.high %v3556, %v3556
        %v3565 = vcombine.high %v3563, %v3563
        %v3567 = vunpack.c.l.s4 1966171168
        %v3568 = vunpack.c.0.s8 %v3567
        %v3569 = vlaneseq
        %v3570 = vshrl.u32 %v3569, 7
        %v3571 = vsub.s32 %v3568, %v3570
        %v3572 = vrot.slane %v3556, %v3571
        %v3574 = vunpack.c.l.s4 1966171168
        %v3575 = vunpack.c.0.s8 %v3574
        %v3576 = vlaneseq
        %v3577 = vshrl.u32 %v3576, 7
        %v3578 = vsub.s32 %v3575, %v3577
        %v3579 = vrot.slane %v3563, %v3578
        %v3581 = vunpack.c.l.s4 1966171168
        %v3582 = vunpack.c.0.s8 %v3581
        %v3583 = vlaneseq
        %v3584 = vshrl.u32 %v3583, 7
        %v3585 = vsub.s32 %v3582, %v3584
        %v3586 = vrot.slane %v3564, %v3585
        %v3588 = vunpack.c.l.s4 1966171168
        %v3589 = vunpack.c.0.s8 %v3588
        %v3590 = vlaneseq
        %v3591 = vshrl.u32 %v3590, 7
        %v3592 = vsub.s32 %v3589, %v3591
        %v3593 = vrot.slane %v3565, %v3592
        %v3594 = vcombine.high %v3572, %v3572
        %v3595 = vcombine.high %v3579, %v3579
        %v3596 = vcombine.high %v3586, %v3586
        %v3597 = vcombine.high %v3593, %v3593
        %3614 = vst.msk [vmem:[%s204 + $0x6] sm:$0x1] %vm2281, %v3523
        %3615 = vst.msk [vmem:[%s204 + $0x16] sm:$0x1] %vm2281, %v3537
        %3616 = vst.msk [vmem:[%s204 + $0x26] sm:$0x1] %vm2281, %v3545
        %3617 = vst.msk [vmem:[%s204 + $0x36] sm:$0x1] %vm2281, %v3547
        %3618 = vst.msk [vmem:[%s204 + $0x46] sm:$0x1] %vm2281, %v3530
        %3619 = vst.msk [vmem:[%s204 + $0x56] sm:$0x1] %vm2281, %v3544
        %3620 = vst.msk [vmem:[%s204 + $0x66] sm:$0x1] %vm2281, %v3546
        %3621 = vst.msk [vmem:[%s204 + $0x76] sm:$0x1] %vm2281, %v3548
        %3622 = vst.msk [vmem:[%s204 + $0x86] sm:$0x1] %vm2281, %v3572
        %3623 = vst.msk [vmem:[%s204 + $0x96] sm:$0x1] %vm2281, %v3586
        %3624 = vst.msk [vmem:[%s204 + $0xa6] sm:$0x1] %vm2281, %v3594
        %3625 = vst.msk [vmem:[%s204 + $0xb6] sm:$0x1] %vm2281, %v3596
        %3626 = vst.msk [vmem:[%s204 + $0xc6] sm:$0x1] %vm2281, %v3579
        %3627 = vst.msk [vmem:[%s204 + $0xd6] sm:$0x1] %vm2281, %v3593
        %3628 = vst.msk [vmem:[%s204 + $0xe6] sm:$0x1] %vm2281, %v3595
        %3629 = vst.msk [vmem:[%s204 + $0xf6] sm:$0x1] %vm2281, %v3597
        %v3630 = vrot.slane %v2023, 7
        %v3631 = vrot.slane %v2025, 6
        %v3632 = vsel %vm2062, %v3631, %v3630
        %v3633 = vrot.slane %v2027, 5
        %v3634 = vsel %vm2065, %v3633, %v3632
        %v3635 = vrot.slane %v2029, 4
        %v3636 = vsel %vm2068, %v3635, %v3634
        %v3637 = vrot.slane %v2031, 3
        %v3638 = vsel %vm2071, %v3637, %v3636
        %v3639 = vrot.slane %v2033, 2
        %v3640 = vsel %vm2074, %v3639, %v3638
        %v3641 = vrot.slane %v2035, 1
        %v3642 = vsel %vm2077, %v3641, %v3640
        %v3643 = vsel %vm2080, %v2037, %v3642
        %3645 = vmatprep.subr.mxu0 0.0
        %3646 = vmatpush1.msra.mxu0 %v3643
        %3647 = vmatprep.subr.mxu0 0.0
        %3648 = vmatpush1.msra.mxu0 0.0
        %3649 = vmatprep.subr.mxu0 0.0
        %3650 = vmatpush1.msra.mxu0 0.0
        %3651 = vmatprep.subr.mxu0 0.0
        %3652 = vmatpush1.msra.mxu0 0.0
        %3653 = vmatprep.subr.mxu0 0.0
        %3654 = vmatpush1.msra.mxu0 0.0
        %3655 = vmatprep.subr.mxu0 0.0
        %3656 = vmatpush1.msra.mxu0 0.0
        %3657 = vmatprep.subr.mxu0 0.0
        %3658 = vmatpush1.msra.mxu0 0.0
        %3659 = vmatprep.subr.mxu0 0.0
        %3660 = vmatpush1.msra.mxu0 0.0
        %3661 = vmatprep.subr.mxu0 0.0
        %3662 = vmatpush1.msra.mxu0 0.0
        %3663 = vmatprep.subr.mxu0 0.0
        %3664 = vmatpush1.msra.mxu0 0.0
        %3665 = vmatprep.subr.mxu0 0.0
        %3666 = vmatpush1.msra.mxu0 0.0
        %3667 = vmatprep.subr.mxu0 0.0
        %3668 = vmatpush1.msra.mxu0 0.0
        %3669 = vmatprep.subr.mxu0 0.0
        %3670 = vmatpush1.msra.mxu0 0.0
        %3671 = vmatprep.subr.mxu0 0.0
        %3672 = vmatpush1.msra.mxu0 0.0
        %3673 = vmatprep.subr.mxu0 0.0
        %3674 = vmatpush1.msra.mxu0 0.0
        %3675 = vmatprep.subr.mxu0 0.0
        %3676 = vmatpush1.msra.mxu0 0.0
        %3677 = vmatprep.subr.mxu0 0.0
        %3678 = vmatpush1.msra.mxu0 0.0
        %3679 = vmatprep.subr.mxu0 0.0
        %3680 = vmatpush1.msra.mxu0 0.0
        %3681 = vmatprep.subr.mxu0 0.0
        %3682 = vmatpush1.msra.mxu0 0.0
        %3683 = vmatprep.subr.mxu0 0.0
        %3684 = vmatpush1.msra.mxu0 0.0
        %3685 = vmatprep.subr.mxu0 0.0
        %3686 = vmatpush1.msra.mxu0 0.0
        %3687 = vmatprep.subr.mxu0 0.0
        %3688 = vmatpush1.msra.mxu0 0.0
        %3689 = vmatprep.subr.mxu0 0.0
        %3690 = vmatpush1.msra.mxu0 0.0
        %3691 = vmatprep.subr.mxu0 0.0
        %3692 = vmatpush1.msra.mxu0 0.0
        %3693 = vmatprep.subr.mxu0 0.0
        %3694 = vmatpush1.msra.mxu0 0.0
        %3695 = vmatprep.subr.mxu0 0.0
        %3696 = vmatpush1.msra.mxu0 0.0
        %3697 = vmatprep.subr.mxu0 0.0
        %3698 = vmatpush1.msra.mxu0 0.0
        %3699 = vmatprep.subr.mxu0 0.0
        %3700 = vmatpush1.msra.mxu0 0.0
        %3701 = vmatprep.subr.mxu0 0.0
        %3702 = vmatpush1.msra.mxu0 0.0
        %3703 = vmatprep.subr.mxu0 0.0
        %3704 = vmatpush1.msra.mxu0 0.0
        %3705 = vmatprep.subr.mxu0 0.0
        %3706 = vmatpush1.msra.mxu0 0.0
        %3707 = vmatprep.subr.mxu0 0.0
        %3708 = vmatpush1.msra.mxu0 0.0
        %3709 = vmatprep.mubr.f32.mxu0 0.0
        %3710 = vmatmul.mubr.f32.gmra.mrb[0].mxu0 %v2085
        %v3711 = vpop.f32.mrb[0].mxu0
        %v3712 = vadd.f32 %v2046, %v3711
        %v3713 = vpop.f32.mrb[0].mxu0
        %3714 = vmatprep.mubr.f32.mxu0 0.0
        %3715 = vmatmul.mubr.f32.gmra.mrb[0].mxu0 %v2088
        %v3716 = vpop.f32.mrb[0].mxu0
        %v3717 = vadd.f32 %v2051, %v3716
        %v3718 = vpop.f32.mrb[0].mxu0
        %3719 = vdwg.mxu0
        %v3722 = vcombine.high %v3712, %v3712
        %v3724 = vunpack.c.l.s4 1966171168
        %v3725 = vunpack.c.0.s8 %v3724
        %v3726 = vlaneseq
        %v3727 = vshrl.u32 %v3726, 7
        %v3728 = vsub.s32 %v3725, %v3727
        %v3729 = vrot.slane %v3712, %v3728
        %v3731 = vunpack.c.l.s4 1966171168
        %v3732 = vunpack.c.0.s8 %v3731
        %v3733 = vlaneseq
        %v3734 = vshrl.u32 %v3733, 7
        %v3735 = vsub.s32 %v3732, %v3734
        %v3736 = vrot.slane %v3722, %v3735
        %v3737 = vcombine.high %v3729, %v3729
        %v3738 = vcombine.high %v3736, %v3736
        %v3740 = vunpack.c.l.s4 1966171168
        %v3741 = vunpack.c.0.s8 %v3740
        %v3742 = vlaneseq
        %v3743 = vshrl.u32 %v3742, 7
        %v3744 = vsub.s32 %v3741, %v3743
        %v3745 = vrot.slane %v3729, %v3744
        %v3747 = vunpack.c.l.s4 1966171168
        %v3748 = vunpack.c.0.s8 %v3747
        %v3749 = vlaneseq
        %v3750 = vshrl.u32 %v3749, 7
        %v3751 = vsub.s32 %v3748, %v3750
        %v3752 = vrot.slane %v3736, %v3751
        %v3754 = vunpack.c.l.s4 1966171168
        %v3755 = vunpack.c.0.s8 %v3754
        %v3756 = vlaneseq
        %v3757 = vshrl.u32 %v3756, 7
        %v3758 = vsub.s32 %v3755, %v3757
        %v3759 = vrot.slane %v3737, %v3758
        %v3761 = vunpack.c.l.s4 1966171168
        %v3762 = vunpack.c.0.s8 %v3761
        %v3763 = vlaneseq
        %v3764 = vshrl.u32 %v3763, 7
        %v3765 = vsub.s32 %v3762, %v3764
        %v3766 = vrot.slane %v3738, %v3765
        %v3767 = vcombine.high %v3745, %v3745
        %v3768 = vcombine.high %v3752, %v3752
        %v3769 = vcombine.high %v3759, %v3759
        %v3770 = vcombine.high %v3766, %v3766
        %v3771 = vcombine.high %v3717, %v3717
        %v3773 = vunpack.c.l.s4 1966171168
        %v3774 = vunpack.c.0.s8 %v3773
        %v3775 = vlaneseq
        %v3776 = vshrl.u32 %v3775, 7
        %v3777 = vsub.s32 %v3774, %v3776
        %v3778 = vrot.slane %v3717, %v3777
        %v3780 = vunpack.c.l.s4 1966171168
        %v3781 = vunpack.c.0.s8 %v3780
        %v3782 = vlaneseq
        %v3783 = vshrl.u32 %v3782, 7
        %v3784 = vsub.s32 %v3781, %v3783
        %v3785 = vrot.slane %v3771, %v3784
        %v3786 = vcombine.high %v3778, %v3778
        %v3787 = vcombine.high %v3785, %v3785
        %v3789 = vunpack.c.l.s4 1966171168
        %v3790 = vunpack.c.0.s8 %v3789
        %v3791 = vlaneseq
        %v3792 = vshrl.u32 %v3791, 7
        %v3793 = vsub.s32 %v3790, %v3792
        %v3794 = vrot.slane %v3778, %v3793
        %v3796 = vunpack.c.l.s4 1966171168
        %v3797 = vunpack.c.0.s8 %v3796
        %v3798 = vlaneseq
        %v3799 = vshrl.u32 %v3798, 7
        %v3800 = vsub.s32 %v3797, %v3799
        %v3801 = vrot.slane %v3785, %v3800
        %v3803 = vunpack.c.l.s4 1966171168
        %v3804 = vunpack.c.0.s8 %v3803
        %v3805 = vlaneseq
        %v3806 = vshrl.u32 %v3805, 7
        %v3807 = vsub.s32 %v3804, %v3806
        %v3808 = vrot.slane %v3786, %v3807
        %v3810 = vunpack.c.l.s4 1966171168
        %v3811 = vunpack.c.0.s8 %v3810
        %v3812 = vlaneseq
        %v3813 = vshrl.u32 %v3812, 7
        %v3814 = vsub.s32 %v3811, %v3813
        %v3815 = vrot.slane %v3787, %v3814
        %v3816 = vcombine.high %v3794, %v3794
        %v3817 = vcombine.high %v3801, %v3801
        %v3818 = vcombine.high %v3808, %v3808
        %v3819 = vcombine.high %v3815, %v3815
        %3836 = vst.msk [vmem:[%s204 + $0x7] sm:$0x1] %vm2281, %v3745
        %3837 = vst.msk [vmem:[%s204 + $0x17] sm:$0x1] %vm2281, %v3759
        %3838 = vst.msk [vmem:[%s204 + $0x27] sm:$0x1] %vm2281, %v3767
        %3839 = vst.msk [vmem:[%s204 + $0x37] sm:$0x1] %vm2281, %v3769
        %3840 = vst.msk [vmem:[%s204 + $0x47] sm:$0x1] %vm2281, %v3752
        %3841 = vst.msk [vmem:[%s204 + $0x57] sm:$0x1] %vm2281, %v3766
        %3842 = vst.msk [vmem:[%s204 + $0x67] sm:$0x1] %vm2281, %v3768
        %3843 = vst.msk [vmem:[%s204 + $0x77] sm:$0x1] %vm2281, %v3770
        %3844 = vst.msk [vmem:[%s204 + $0x87] sm:$0x1] %vm2281, %v3794
        %3845 = vst.msk [vmem:[%s204 + $0x97] sm:$0x1] %vm2281, %v3808
        %3846 = vst.msk [vmem:[%s204 + $0xa7] sm:$0x1] %vm2281, %v3816
        %3847 = vst.msk [vmem:[%s204 + $0xb7] sm:$0x1] %vm2281, %v3818
        %3848 = vst.msk [vmem:[%s204 + $0xc7] sm:$0x1] %vm2281, %v3801
        %3849 = vst.msk [vmem:[%s204 + $0xd7] sm:$0x1] %vm2281, %v3815
        %3850 = vst.msk [vmem:[%s204 + $0xe7] sm:$0x1] %vm2281, %v3817
        %3851 = vst.msk [vmem:[%s204 + $0xf7] sm:$0x1] %vm2281, %v3819
        %v3860 = vrot.slane %v2026, 7
        %v3861 = vsel %vm2062, %v3860, %v2024
        %v3862 = vrot.slane %v2028, 6
        %v3863 = vsel %vm2065, %v3862, %v3861
        %v3864 = vrot.slane %v2030, 5
        %v3865 = vsel %vm2068, %v3864, %v3863
        %v3866 = vrot.slane %v2032, 4
        %v3867 = vsel %vm2071, %v3866, %v3865
        %v3868 = vrot.slane %v2034, 3
        %v3869 = vsel %vm2074, %v3868, %v3867
        %v3870 = vrot.slane %v2036, 2
        %v3871 = vsel %vm2077, %v3870, %v3869
        %v3872 = vrot.slane %v2038, 1
        %v3873 = vsel %vm2080, %v3872, %v3871
        %3875 = vmatprep.subr.mxu0 0.0
        %3876 = vmatpush1.msra.mxu0 %v3873
        %3877 = vmatprep.subr.mxu0 0.0
        %3878 = vmatpush1.msra.mxu0 0.0
        %3879 = vmatprep.subr.mxu0 0.0
        %3880 = vmatpush1.msra.mxu0 0.0
        %3881 = vmatprep.subr.mxu0 0.0
        %3882 = vmatpush1.msra.mxu0 0.0
        %3883 = vmatprep.subr.mxu0 0.0
        %3884 = vmatpush1.msra.mxu0 0.0
        %3885 = vmatprep.subr.mxu0 0.0
        %3886 = vmatpush1.msra.mxu0 0.0
        %3887 = vmatprep.subr.mxu0 0.0
        %3888 = vmatpush1.msra.mxu0 0.0
        %3889 = vmatprep.subr.mxu0 0.0
        %3890 = vmatpush1.msra.mxu0 0.0
        %3891 = vmatprep.subr.mxu0 0.0
        %3892 = vmatpush1.msra.mxu0 0.0
        %3893 = vmatprep.subr.mxu0 0.0
        %3894 = vmatpush1.msra.mxu0 0.0
        %3895 = vmatprep.subr.mxu0 0.0
        %3896 = vmatpush1.msra.mxu0 0.0
        %3897 = vmatprep.subr.mxu0 0.0
        %3898 = vmatpush1.msra.mxu0 0.0
        %3899 = vmatprep.subr.mxu0 0.0
        %3900 = vmatpush1.msra.mxu0 0.0
        %3901 = vmatprep.subr.mxu0 0.0
        %3902 = vmatpush1.msra.mxu0 0.0
        %3903 = vmatprep.subr.mxu0 0.0
        %3904 = vmatpush1.msra.mxu0 0.0
        %3905 = vmatprep.subr.mxu0 0.0
        %3906 = vmatpush1.msra.mxu0 0.0
        %3907 = vmatprep.subr.mxu0 0.0
        %3908 = vmatpush1.msra.mxu0 0.0
        %3909 = vmatprep.subr.mxu0 0.0
        %3910 = vmatpush1.msra.mxu0 0.0
        %3911 = vmatprep.subr.mxu0 0.0
        %3912 = vmatpush1.msra.mxu0 0.0
        %3913 = vmatprep.subr.mxu0 0.0
        %3914 = vmatpush1.msra.mxu0 0.0
        %3915 = vmatprep.subr.mxu0 0.0
        %3916 = vmatpush1.msra.mxu0 0.0
        %3917 = vmatprep.subr.mxu0 0.0
        %3918 = vmatpush1.msra.mxu0 0.0
        %3919 = vmatprep.subr.mxu0 0.0
        %3920 = vmatpush1.msra.mxu0 0.0
        %3921 = vmatprep.subr.mxu0 0.0
        %3922 = vmatpush1.msra.mxu0 0.0
        %3923 = vmatprep.subr.mxu0 0.0
        %3924 = vmatpush1.msra.mxu0 0.0
        %3925 = vmatprep.subr.mxu0 0.0
        %3926 = vmatpush1.msra.mxu0 0.0
        %3927 = vmatprep.subr.mxu0 0.0
        %3928 = vmatpush1.msra.mxu0 0.0
        %3929 = vmatprep.subr.mxu0 0.0
        %3930 = vmatpush1.msra.mxu0 0.0
        %3931 = vmatprep.subr.mxu0 0.0
        %3932 = vmatpush1.msra.mxu0 0.0
        %3933 = vmatprep.subr.mxu0 0.0
        %3934 = vmatpush1.msra.mxu0 0.0
        %3935 = vmatprep.subr.mxu0 0.0
        %3936 = vmatpush1.msra.mxu0 0.0
        %3937 = vmatprep.subr.mxu0 0.0
        %3938 = vmatpush1.msra.mxu0 0.0
        %3939 = vmatprep.mubr.f32.mxu0 0.0
        %3940 = vmatmul.mubr.f32.gmra.mrb[0].mxu0 %v2085
        %v3941 = vpop.f32.mrb[0].mxu0
        %v3942 = vadd.f32 %v2046, %v3941
        %v3943 = vpop.f32.mrb[0].mxu0
        %3944 = vmatprep.mubr.f32.mxu0 0.0
        %3945 = vmatmul.mubr.f32.gmra.mrb[0].mxu0 %v2088
        %v3946 = vpop.f32.mrb[0].mxu0
        %v3947 = vadd.f32 %v2051, %v3946
        %v3948 = vpop.f32.mrb[0].mxu0
        %3949 = vdwg.mxu0
        %v3952 = vcombine.high %v3942, %v3942
        %v3954 = vunpack.c.l.s4 1966171168
        %v3955 = vunpack.c.0.s8 %v3954
        %v3956 = vlaneseq
        %v3957 = vshrl.u32 %v3956, 7
        %v3958 = vsub.s32 %v3955, %v3957
        %v3959 = vrot.slane %v3942, %v3958
        %v3961 = vunpack.c.l.s4 1966171168
        %v3962 = vunpack.c.0.s8 %v3961
        %v3963 = vlaneseq
        %v3964 = vshrl.u32 %v3963, 7
        %v3965 = vsub.s32 %v3962, %v3964
        %v3966 = vrot.slane %v3952, %v3965
        %v3967 = vcombine.high %v3959, %v3959
        %v3968 = vcombine.high %v3966, %v3966
        %v3970 = vunpack.c.l.s4 1966171168
        %v3971 = vunpack.c.0.s8 %v3970
        %v3972 = vlaneseq
        %v3973 = vshrl.u32 %v3972, 7
        %v3974 = vsub.s32 %v3971, %v3973
        %v3975 = vrot.slane %v3959, %v3974
        %v3977 = vunpack.c.l.s4 1966171168
        %v3978 = vunpack.c.0.s8 %v3977
        %v3979 = vlaneseq
        %v3980 = vshrl.u32 %v3979, 7
        %v3981 = vsub.s32 %v3978, %v3980
        %v3982 = vrot.slane %v3966, %v3981
        %v3984 = vunpack.c.l.s4 1966171168
        %v3985 = vunpack.c.0.s8 %v3984
        %v3986 = vlaneseq
        %v3987 = vshrl.u32 %v3986, 7
        %v3988 = vsub.s32 %v3985, %v3987
        %v3989 = vrot.slane %v3967, %v3988
        %v3991 = vunpack.c.l.s4 1966171168
        %v3992 = vunpack.c.0.s8 %v3991
        %v3993 = vlaneseq
        %v3994 = vshrl.u32 %v3993, 7
        %v3995 = vsub.s32 %v3992, %v3994
        %v3996 = vrot.slane %v3968, %v3995
        %v3997 = vcombine.high %v3975, %v3975
        %v3998 = vcombine.high %v3982, %v3982
        %v3999 = vcombine.high %v3989, %v3989
        %v4000 = vcombine.high %v3996, %v3996
        %v4001 = vcombine.high %v3947, %v3947
        %v4003 = vunpack.c.l.s4 1966171168
        %v4004 = vunpack.c.0.s8 %v4003
        %v4005 = vlaneseq
        %v4006 = vshrl.u32 %v4005, 7
        %v4007 = vsub.s32 %v4004, %v4006
        %v4008 = vrot.slane %v3947, %v4007
        %v4010 = vunpack.c.l.s4 1966171168
        %v4011 = vunpack.c.0.s8 %v4010
        %v4012 = vlaneseq
        %v4013 = vshrl.u32 %v4012, 7
        %v4014 = vsub.s32 %v4011, %v4013
        %v4015 = vrot.slane %v4001, %v4014
        %v4016 = vcombine.high %v4008, %v4008
        %v4017 = vcombine.high %v4015, %v4015
        %v4019 = vunpack.c.l.s4 1966171168
        %v4020 = vunpack.c.0.s8 %v4019
        %v4021 = vlaneseq
        %v4022 = vshrl.u32 %v4021, 7
        %v4023 = vsub.s32 %v4020, %v4022
        %v4024 = vrot.slane %v4008, %v4023
        %v4026 = vunpack.c.l.s4 1966171168
        %v4027 = vunpack.c.0.s8 %v4026
        %v4028 = vlaneseq
        %v4029 = vshrl.u32 %v4028, 7
        %v4030 = vsub.s32 %v4027, %v4029
        %v4031 = vrot.slane %v4015, %v4030
        %v4033 = vunpack.c.l.s4 1966171168
        %v4034 = vunpack.c.0.s8 %v4033
        %v4035 = vlaneseq
        %v4036 = vshrl.u32 %v4035, 7
        %v4037 = vsub.s32 %v4034, %v4036
        %v4038 = vrot.slane %v4016, %v4037
        %v4040 = vunpack.c.l.s4 1966171168
        %v4041 = vunpack.c.0.s8 %v4040
        %v4042 = vlaneseq
        %v4043 = vshrl.u32 %v4042, 7
        %v4044 = vsub.s32 %v4041, %v4043
        %v4045 = vrot.slane %v4017, %v4044
        %v4046 = vcombine.high %v4024, %v4024
        %v4047 = vcombine.high %v4031, %v4031
        %v4048 = vcombine.high %v4038, %v4038
        %v4049 = vcombine.high %v4045, %v4045
        %4066 = vst.msk [vmem:[%s204 + $0x8] sm:$0x1] %vm2281, %v3975
        %4067 = vst.msk [vmem:[%s204 + $0x18] sm:$0x1] %vm2281, %v3989
        %4068 = vst.msk [vmem:[%s204 + $0x28] sm:$0x1] %vm2281, %v3997
        %4069 = vst.msk [vmem:[%s204 + $0x38] sm:$0x1] %vm2281, %v3999
        %4070 = vst.msk [vmem:[%s204 + $0x48] sm:$0x1] %vm2281, %v3982
        %4071 = vst.msk [vmem:[%s204 + $0x58] sm:$0x1] %vm2281, %v3996
        %4072 = vst.msk [vmem:[%s204 + $0x68] sm:$0x1] %vm2281, %v3998
        %4073 = vst.msk [vmem:[%s204 + $0x78] sm:$0x1] %vm2281, %v4000
        %4074 = vst.msk [vmem:[%s204 + $0x88] sm:$0x1] %vm2281, %v4024
        %4075 = vst.msk [vmem:[%s204 + $0x98] sm:$0x1] %vm2281, %v4038
        %4076 = vst.msk [vmem:[%s204 + $0xa8] sm:$0x1] %vm2281, %v4046
        %4077 = vst.msk [vmem:[%s204 + $0xb8] sm:$0x1] %vm2281, %v4048
        %4078 = vst.msk [vmem:[%s204 + $0xc8] sm:$0x1] %vm2281, %v4031
        %4079 = vst.msk [vmem:[%s204 + $0xd8] sm:$0x1] %vm2281, %v4045
        %4080 = vst.msk [vmem:[%s204 + $0xe8] sm:$0x1] %vm2281, %v4047
        %4081 = vst.msk [vmem:[%s204 + $0xf8] sm:$0x1] %vm2281, %v4049
        %v4082 = vrot.slane %v2024, 1
        %v4083 = vsel %vm2062, %v2026, %v4082
        %v4084 = vrot.slane %v2028, 7
        %v4085 = vsel %vm2065, %v4084, %v4083
        %v4086 = vrot.slane %v2030, 6
        %v4087 = vsel %vm2068, %v4086, %v4085
        %v4088 = vrot.slane %v2032, 5
        %v4089 = vsel %vm2071, %v4088, %v4087
        %v4090 = vrot.slane %v2034, 4
        %v4091 = vsel %vm2074, %v4090, %v4089
        %v4092 = vrot.slane %v2036, 3
        %v4093 = vsel %vm2077, %v4092, %v4091
        %v4094 = vrot.slane %v2038, 2
        %v4095 = vsel %vm2080, %v4094, %v4093
        %4097 = vmatprep.subr.mxu0 0.0
        %4098 = vmatpush1.msra.mxu0 %v4095
        %4099 = vmatprep.subr.mxu0 0.0
        %4100 = vmatpush1.msra.mxu0 0.0
        %4101 = vmatprep.subr.mxu0 0.0
        %4102 = vmatpush1.msra.mxu0 0.0
        %4103 = vmatprep.subr.mxu0 0.0
        %4104 = vmatpush1.msra.mxu0 0.0
        %4105 = vmatprep.subr.mxu0 0.0
        %4106 = vmatpush1.msra.mxu0 0.0
        %4107 = vmatprep.subr.mxu0 0.0
        %4108 = vmatpush1.msra.mxu0 0.0
        %4109 = vmatprep.subr.mxu0 0.0
        %4110 = vmatpush1.msra.mxu0 0.0
        %4111 = vmatprep.subr.mxu0 0.0
        %4112 = vmatpush1.msra.mxu0 0.0
        %4113 = vmatprep.subr.mxu0 0.0
        %4114 = vmatpush1.msra.mxu0 0.0
        %4115 = vmatprep.subr.mxu0 0.0
        %4116 = vmatpush1.msra.mxu0 0.0
        %4117 = vmatprep.subr.mxu0 0.0
        %4118 = vmatpush1.msra.mxu0 0.0
        %4119 = vmatprep.subr.mxu0 0.0
        %4120 = vmatpush1.msra.mxu0 0.0
        %4121 = vmatprep.subr.mxu0 0.0
        %4122 = vmatpush1.msra.mxu0 0.0
        %4123 = vmatprep.subr.mxu0 0.0
        %4124 = vmatpush1.msra.mxu0 0.0
        %4125 = vmatprep.subr.mxu0 0.0
        %4126 = vmatpush1.msra.mxu0 0.0
        %4127 = vmatprep.subr.mxu0 0.0
        %4128 = vmatpush1.msra.mxu0 0.0
        %4129 = vmatprep.subr.mxu0 0.0
        %4130 = vmatpush1.msra.mxu0 0.0
        %4131 = vmatprep.subr.mxu0 0.0
        %4132 = vmatpush1.msra.mxu0 0.0
        %4133 = vmatprep.subr.mxu0 0.0
        %4134 = vmatpush1.msra.mxu0 0.0
        %4135 = vmatprep.subr.mxu0 0.0
        %4136 = vmatpush1.msra.mxu0 0.0
        %4137 = vmatprep.subr.mxu0 0.0
        %4138 = vmatpush1.msra.mxu0 0.0
        %4139 = vmatprep.subr.mxu0 0.0
        %4140 = vmatpush1.msra.mxu0 0.0
        %4141 = vmatprep.subr.mxu0 0.0
        %4142 = vmatpush1.msra.mxu0 0.0
        %4143 = vmatprep.subr.mxu0 0.0
        %4144 = vmatpush1.msra.mxu0 0.0
        %4145 = vmatprep.subr.mxu0 0.0
        %4146 = vmatpush1.msra.mxu0 0.0
        %4147 = vmatprep.subr.mxu0 0.0
        %4148 = vmatpush1.msra.mxu0 0.0
        %4149 = vmatprep.subr.mxu0 0.0
        %4150 = vmatpush1.msra.mxu0 0.0
        %4151 = vmatprep.subr.mxu0 0.0
        %4152 = vmatpush1.msra.mxu0 0.0
        %4153 = vmatprep.subr.mxu0 0.0
        %4154 = vmatpush1.msra.mxu0 0.0
        %4155 = vmatprep.subr.mxu0 0.0
        %4156 = vmatpush1.msra.mxu0 0.0
        %4157 = vmatprep.subr.mxu0 0.0
        %4158 = vmatpush1.msra.mxu0 0.0
        %4159 = vmatprep.subr.mxu0 0.0
        %4160 = vmatpush1.msra.mxu0 0.0
        %4161 = vmatprep.mubr.f32.mxu0 0.0
        %4162 = vmatmul.mubr.f32.gmra.mrb[0].mxu0 %v2085
        %v4163 = vpop.f32.mrb[0].mxu0
        %v4164 = vadd.f32 %v2046, %v4163
        %v4165 = vpop.f32.mrb[0].mxu0
        %4166 = vmatprep.mubr.f32.mxu0 0.0
        %4167 = vmatmul.mubr.f32.gmra.mrb[0].mxu0 %v2088
        %v4168 = vpop.f32.mrb[0].mxu0
        %v4169 = vadd.f32 %v2051, %v4168
        %v4170 = vpop.f32.mrb[0].mxu0
        %4171 = vdwg.mxu0
        %v4174 = vcombine.high %v4164, %v4164
        %v4176 = vunpack.c.l.s4 1966171168
        %v4177 = vunpack.c.0.s8 %v4176
        %v4178 = vlaneseq
        %v4179 = vshrl.u32 %v4178, 7
        %v4180 = vsub.s32 %v4177, %v4179
        %v4181 = vrot.slane %v4164, %v4180
        %v4183 = vunpack.c.l.s4 1966171168
        %v4184 = vunpack.c.0.s8 %v4183
        %v4185 = vlaneseq
        %v4186 = vshrl.u32 %v4185, 7
        %v4187 = vsub.s32 %v4184, %v4186
        %v4188 = vrot.slane %v4174, %v4187
        %v4189 = vcombine.high %v4181, %v4181
        %v4190 = vcombine.high %v4188, %v4188
        %v4192 = vunpack.c.l.s4 1966171168
        %v4193 = vunpack.c.0.s8 %v4192
        %v4194 = vlaneseq
        %v4195 = vshrl.u32 %v4194, 7
        %v4196 = vsub.s32 %v4193, %v4195
        %v4197 = vrot.slane %v4181, %v4196
        %v4199 = vunpack.c.l.s4 1966171168
        %v4200 = vunpack.c.0.s8 %v4199
        %v4201 = vlaneseq
        %v4202 = vshrl.u32 %v4201, 7
        %v4203 = vsub.s32 %v4200, %v4202
        %v4204 = vrot.slane %v4188, %v4203
        %v4206 = vunpack.c.l.s4 1966171168
        %v4207 = vunpack.c.0.s8 %v4206
        %v4208 = vlaneseq
        %v4209 = vshrl.u32 %v4208, 7
        %v4210 = vsub.s32 %v4207, %v4209
        %v4211 = vrot.slane %v4189, %v4210
        %v4213 = vunpack.c.l.s4 1966171168
        %v4214 = vunpack.c.0.s8 %v4213
        %v4215 = vlaneseq
        %v4216 = vshrl.u32 %v4215, 7
        %v4217 = vsub.s32 %v4214, %v4216
        %v4218 = vrot.slane %v4190, %v4217
        %v4219 = vcombine.high %v4197, %v4197
        %v4220 = vcombine.high %v4204, %v4204
        %v4221 = vcombine.high %v4211, %v4211
        %v4222 = vcombine.high %v4218, %v4218
        %v4223 = vcombine.high %v4169, %v4169
        %v4225 = vunpack.c.l.s4 1966171168
        %v4226 = vunpack.c.0.s8 %v4225
        %v4227 = vlaneseq
        %v4228 = vshrl.u32 %v4227, 7
        %v4229 = vsub.s32 %v4226, %v4228
        %v4230 = vrot.slane %v4169, %v4229
        %v4232 = vunpack.c.l.s4 1966171168
        %v4233 = vunpack.c.0.s8 %v4232
        %v4234 = vlaneseq
        %v4235 = vshrl.u32 %v4234, 7
        %v4236 = vsub.s32 %v4233, %v4235
        %v4237 = vrot.slane %v4223, %v4236
        %v4238 = vcombine.high %v4230, %v4230
        %v4239 = vcombine.high %v4237, %v4237
        %v4241 = vunpack.c.l.s4 1966171168
        %v4242 = vunpack.c.0.s8 %v4241
        %v4243 = vlaneseq
        %v4244 = vshrl.u32 %v4243, 7
        %v4245 = vsub.s32 %v4242, %v4244
        %v4246 = vrot.slane %v4230, %v4245
        %v4248 = vunpack.c.l.s4 1966171168
        %v4249 = vunpack.c.0.s8 %v4248
        %v4250 = vlaneseq
        %v4251 = vshrl.u32 %v4250, 7
        %v4252 = vsub.s32 %v4249, %v4251
        %v4253 = vrot.slane %v4237, %v4252
        %v4255 = vunpack.c.l.s4 1966171168
        %v4256 = vunpack.c.0.s8 %v4255
        %v4257 = vlaneseq
        %v4258 = vshrl.u32 %v4257, 7
        %v4259 = vsub.s32 %v4256, %v4258
        %v4260 = vrot.slane %v4238, %v4259
        %v4262 = vunpack.c.l.s4 1966171168
        %v4263 = vunpack.c.0.s8 %v4262
        %v4264 = vlaneseq
        %v4265 = vshrl.u32 %v4264, 7
        %v4266 = vsub.s32 %v4263, %v4265
        %v4267 = vrot.slane %v4239, %v4266
        %v4268 = vcombine.high %v4246, %v4246
        %v4269 = vcombine.high %v4253, %v4253
        %v4270 = vcombine.high %v4260, %v4260
        %v4271 = vcombine.high %v4267, %v4267
        %4288 = vst.msk [vmem:[%s204 + $0x9] sm:$0x1] %vm2281, %v4197
        %4289 = vst.msk [vmem:[%s204 + $0x19] sm:$0x1] %vm2281, %v4211
        %4290 = vst.msk [vmem:[%s204 + $0x29] sm:$0x1] %vm2281, %v4219
        %4291 = vst.msk [vmem:[%s204 + $0x39] sm:$0x1] %vm2281, %v4221
        %4292 = vst.msk [vmem:[%s204 + $0x49] sm:$0x1] %vm2281, %v4204
        %4293 = vst.msk [vmem:[%s204 + $0x59] sm:$0x1] %vm2281, %v4218
        %4294 = vst.msk [vmem:[%s204 + $0x69] sm:$0x1] %vm2281, %v4220
        %4295 = vst.msk [vmem:[%s204 + $0x79] sm:$0x1] %vm2281, %v4222
        %4296 = vst.msk [vmem:[%s204 + $0x89] sm:$0x1] %vm2281, %v4246
        %4297 = vst.msk [vmem:[%s204 + $0x99] sm:$0x1] %vm2281, %v4260
        %4298 = vst.msk [vmem:[%s204 + $0xa9] sm:$0x1] %vm2281, %v4268
        %4299 = vst.msk [vmem:[%s204 + $0xb9] sm:$0x1] %vm2281, %v4270
        %4300 = vst.msk [vmem:[%s204 + $0xc9] sm:$0x1] %vm2281, %v4253
        %4301 = vst.msk [vmem:[%s204 + $0xd9] sm:$0x1] %vm2281, %v4267
        %4302 = vst.msk [vmem:[%s204 + $0xe9] sm:$0x1] %vm2281, %v4269
        %4303 = vst.msk [vmem:[%s204 + $0xf9] sm:$0x1] %vm2281, %v4271
        %v4304 = vrot.slane %v2024, 2
        %v4305 = vrot.slane %v2026, 1
        %v4306 = vsel %vm2062, %v4305, %v4304
        %v4307 = vsel %vm2065, %v2028, %v4306
        %v4308 = vrot.slane %v2030, 7
        %v4309 = vsel %vm2068, %v4308, %v4307
        %v4310 = vrot.slane %v2032, 6
        %v4311 = vsel %vm2071, %v4310, %v4309
        %v4312 = vrot.slane %v2034, 5
        %v4313 = vsel %vm2074, %v4312, %v4311
        %v4314 = vrot.slane %v2036, 4
        %v4315 = vsel %vm2077, %v4314, %v4313
        %v4316 = vrot.slane %v2038, 3
        %v4317 = vsel %vm2080, %v4316, %v4315
        %4319 = vmatprep.subr.mxu0 0.0
        %4320 = vmatpush1.msra.mxu0 %v4317
        %4321 = vmatprep.subr.mxu0 0.0
        %4322 = vmatpush1.msra.mxu0 0.0
        %4323 = vmatprep.subr.mxu0 0.0
        %4324 = vmatpush1.msra.mxu0 0.0
        %4325 = vmatprep.subr.mxu0 0.0
        %4326 = vmatpush1.msra.mxu0 0.0
        %4327 = vmatprep.subr.mxu0 0.0
        %4328 = vmatpush1.msra.mxu0 0.0
        %4329 = vmatprep.subr.mxu0 0.0
        %4330 = vmatpush1.msra.mxu0 0.0
        %4331 = vmatprep.subr.mxu0 0.0
        %4332 = vmatpush1.msra.mxu0 0.0
        %4333 = vmatprep.subr.mxu0 0.0
        %4334 = vmatpush1.msra.mxu0 0.0
        %4335 = vmatprep.subr.mxu0 0.0
        %4336 = vmatpush1.msra.mxu0 0.0
        %4337 = vmatprep.subr.mxu0 0.0
        %4338 = vmatpush1.msra.mxu0 0.0
        %4339 = vmatprep.subr.mxu0 0.0
        %4340 = vmatpush1.msra.mxu0 0.0
        %4341 = vmatprep.subr.mxu0 0.0
        %4342 = vmatpush1.msra.mxu0 0.0
        %4343 = vmatprep.subr.mxu0 0.0
        %4344 = vmatpush1.msra.mxu0 0.0
        %4345 = vmatprep.subr.mxu0 0.0
        %4346 = vmatpush1.msra.mxu0 0.0
        %4347 = vmatprep.subr.mxu0 0.0
        %4348 = vmatpush1.msra.mxu0 0.0
        %4349 = vmatprep.subr.mxu0 0.0
        %4350 = vmatpush1.msra.mxu0 0.0
        %4351 = vmatprep.subr.mxu0 0.0
        %4352 = vmatpush1.msra.mxu0 0.0
        %4353 = vmatprep.subr.mxu0 0.0
        %4354 = vmatpush1.msra.mxu0 0.0
        %4355 = vmatprep.subr.mxu0 0.0
        %4356 = vmatpush1.msra.mxu0 0.0
        %4357 = vmatprep.subr.mxu0 0.0
        %4358 = vmatpush1.msra.mxu0 0.0
        %4359 = vmatprep.subr.mxu0 0.0
        %4360 = vmatpush1.msra.mxu0 0.0
        %4361 = vmatprep.subr.mxu0 0.0
        %4362 = vmatpush1.msra.mxu0 0.0
        %4363 = vmatprep.subr.mxu0 0.0
        %4364 = vmatpush1.msra.mxu0 0.0
        %4365 = vmatprep.subr.mxu0 0.0
        %4366 = vmatpush1.msra.mxu0 0.0
        %4367 = vmatprep.subr.mxu0 0.0
        %4368 = vmatpush1.msra.mxu0 0.0
        %4369 = vmatprep.subr.mxu0 0.0
        %4370 = vmatpush1.msra.mxu0 0.0
        %4371 = vmatprep.subr.mxu0 0.0
        %4372 = vmatpush1.msra.mxu0 0.0
        %4373 = vmatprep.subr.mxu0 0.0
        %4374 = vmatpush1.msra.mxu0 0.0
        %4375 = vmatprep.subr.mxu0 0.0
        %4376 = vmatpush1.msra.mxu0 0.0
        %4377 = vmatprep.subr.mxu0 0.0
        %4378 = vmatpush1.msra.mxu0 0.0
        %4379 = vmatprep.subr.mxu0 0.0
        %4380 = vmatpush1.msra.mxu0 0.0
        %4381 = vmatprep.subr.mxu0 0.0
        %4382 = vmatpush1.msra.mxu0 0.0
        %4383 = vmatprep.mubr.f32.mxu0 0.0
        %4384 = vmatmul.mubr.f32.gmra.mrb[0].mxu0 %v2085
        %v4385 = vpop.f32.mrb[0].mxu0
        %v4386 = vadd.f32 %v2046, %v4385
        %v4387 = vpop.f32.mrb[0].mxu0
        %4388 = vmatprep.mubr.f32.mxu0 0.0
        %4389 = vmatmul.mubr.f32.gmra.mrb[0].mxu0 %v2088
        %v4390 = vpop.f32.mrb[0].mxu0
        %v4391 = vadd.f32 %v2051, %v4390
        %v4392 = vpop.f32.mrb[0].mxu0
        %4393 = vdwg.mxu0
        %v4396 = vcombine.high %v4386, %v4386
        %v4398 = vunpack.c.l.s4 1966171168
        %v4399 = vunpack.c.0.s8 %v4398
        %v4400 = vlaneseq
        %v4401 = vshrl.u32 %v4400, 7
        %v4402 = vsub.s32 %v4399, %v4401
        %v4403 = vrot.slane %v4386, %v4402
        %v4405 = vunpack.c.l.s4 1966171168
        %v4406 = vunpack.c.0.s8 %v4405
        %v4407 = vlaneseq
        %v4408 = vshrl.u32 %v4407, 7
        %v4409 = vsub.s32 %v4406, %v4408
        %v4410 = vrot.slane %v4396, %v4409
        %v4411 = vcombine.high %v4403, %v4403
        %v4412 = vcombine.high %v4410, %v4410
        %v4414 = vunpack.c.l.s4 1966171168
        %v4415 = vunpack.c.0.s8 %v4414
        %v4416 = vlaneseq
        %v4417 = vshrl.u32 %v4416, 7
        %v4418 = vsub.s32 %v4415, %v4417
        %v4419 = vrot.slane %v4403, %v4418
        %v4421 = vunpack.c.l.s4 1966171168
        %v4422 = vunpack.c.0.s8 %v4421
        %v4423 = vlaneseq
        %v4424 = vshrl.u32 %v4423, 7
        %v4425 = vsub.s32 %v4422, %v4424
        %v4426 = vrot.slane %v4410, %v4425
        %v4428 = vunpack.c.l.s4 1966171168
        %v4429 = vunpack.c.0.s8 %v4428
        %v4430 = vlaneseq
        %v4431 = vshrl.u32 %v4430, 7
        %v4432 = vsub.s32 %v4429, %v4431
        %v4433 = vrot.slane %v4411, %v4432
        %v4435 = vunpack.c.l.s4 1966171168
        %v4436 = vunpack.c.0.s8 %v4435
        %v4437 = vlaneseq
        %v4438 = vshrl.u32 %v4437, 7
        %v4439 = vsub.s32 %v4436, %v4438
        %v4440 = vrot.slane %v4412, %v4439
        %v4441 = vcombine.high %v4419, %v4419
        %v4442 = vcombine.high %v4426, %v4426
        %v4443 = vcombine.high %v4433, %v4433
        %v4444 = vcombine.high %v4440, %v4440
        %v4445 = vcombine.high %v4391, %v4391
        %v4447 = vunpack.c.l.s4 1966171168
        %v4448 = vunpack.c.0.s8 %v4447
        %v4449 = vlaneseq
        %v4450 = vshrl.u32 %v4449, 7
        %v4451 = vsub.s32 %v4448, %v4450
        %v4452 = vrot.slane %v4391, %v4451
        %v4454 = vunpack.c.l.s4 1966171168
        %v4455 = vunpack.c.0.s8 %v4454
        %v4456 = vlaneseq
        %v4457 = vshrl.u32 %v4456, 7
        %v4458 = vsub.s32 %v4455, %v4457
        %v4459 = vrot.slane %v4445, %v4458
        %v4460 = vcombine.high %v4452, %v4452
        %v4461 = vcombine.high %v4459, %v4459
        %v4463 = vunpack.c.l.s4 1966171168
        %v4464 = vunpack.c.0.s8 %v4463
        %v4465 = vlaneseq
        %v4466 = vshrl.u32 %v4465, 7
        %v4467 = vsub.s32 %v4464, %v4466
        %v4468 = vrot.slane %v4452, %v4467
        %v4470 = vunpack.c.l.s4 1966171168
        %v4471 = vunpack.c.0.s8 %v4470
        %v4472 = vlaneseq
        %v4473 = vshrl.u32 %v4472, 7
        %v4474 = vsub.s32 %v4471, %v4473
        %v4475 = vrot.slane %v4459, %v4474
        %v4477 = vunpack.c.l.s4 1966171168
        %v4478 = vunpack.c.0.s8 %v4477
        %v4479 = vlaneseq
        %v4480 = vshrl.u32 %v4479, 7
        %v4481 = vsub.s32 %v4478, %v4480
        %v4482 = vrot.slane %v4460, %v4481
        %v4484 = vunpack.c.l.s4 1966171168
        %v4485 = vunpack.c.0.s8 %v4484
        %v4486 = vlaneseq
        %v4487 = vshrl.u32 %v4486, 7
        %v4488 = vsub.s32 %v4485, %v4487
        %v4489 = vrot.slane %v4461, %v4488
        %v4490 = vcombine.high %v4468, %v4468
        %v4491 = vcombine.high %v4475, %v4475
        %v4492 = vcombine.high %v4482, %v4482
        %v4493 = vcombine.high %v4489, %v4489
        %4510 = vst.msk [vmem:[%s204 + $0xa] sm:$0x1] %vm2281, %v4419
        %4511 = vst.msk [vmem:[%s204 + $0x1a] sm:$0x1] %vm2281, %v4433
        %4512 = vst.msk [vmem:[%s204 + $0x2a] sm:$0x1] %vm2281, %v4441
        %4513 = vst.msk [vmem:[%s204 + $0x3a] sm:$0x1] %vm2281, %v4443
        %4514 = vst.msk [vmem:[%s204 + $0x4a] sm:$0x1] %vm2281, %v4426
        %4515 = vst.msk [vmem:[%s204 + $0x5a] sm:$0x1] %vm2281, %v4440
        %4516 = vst.msk [vmem:[%s204 + $0x6a] sm:$0x1] %vm2281, %v4442
        %4517 = vst.msk [vmem:[%s204 + $0x7a] sm:$0x1] %vm2281, %v4444
        %4518 = vst.msk [vmem:[%s204 + $0x8a] sm:$0x1] %vm2281, %v4468
        %4519 = vst.msk [vmem:[%s204 + $0x9a] sm:$0x1] %vm2281, %v4482
        %4520 = vst.msk [vmem:[%s204 + $0xaa] sm:$0x1] %vm2281, %v4490
        %4521 = vst.msk [vmem:[%s204 + $0xba] sm:$0x1] %vm2281, %v4492
        %4522 = vst.msk [vmem:[%s204 + $0xca] sm:$0x1] %vm2281, %v4475
        %4523 = vst.msk [vmem:[%s204 + $0xda] sm:$0x1] %vm2281, %v4489
        %4524 = vst.msk [vmem:[%s204 + $0xea] sm:$0x1] %vm2281, %v4491
        %4525 = vst.msk [vmem:[%s204 + $0xfa] sm:$0x1] %vm2281, %v4493
        %v4526 = vrot.slane %v2024, 3
        %v4527 = vrot.slane %v2026, 2
        %v4528 = vsel %vm2062, %v4527, %v4526
        %v4529 = vrot.slane %v2028, 1
        %v4530 = vsel %vm2065, %v4529, %v4528
        %v4531 = vsel %vm2068, %v2030, %v4530
        %v4532 = vrot.slane %v2032, 7
        %v4533 = vsel %vm2071, %v4532, %v4531
        %v4534 = vrot.slane %v2034, 6
        %v4535 = vsel %vm2074, %v4534, %v4533
        %v4536 = vrot.slane %v2036, 5
        %v4537 = vsel %vm2077, %v4536, %v4535
        %v4538 = vrot.slane %v2038, 4
        %v4539 = vsel %vm2080, %v4538, %v4537
        %4541 = vmatprep.subr.mxu0 0.0
        %4542 = vmatpush1.msra.mxu0 %v4539
        %4543 = vmatprep.subr.mxu0 0.0
        %4544 = vmatpush1.msra.mxu0 0.0
        %4545 = vmatprep.subr.mxu0 0.0
        %4546 = vmatpush1.msra.mxu0 0.0
        %4547 = vmatprep.subr.mxu0 0.0
        %4548 = vmatpush1.msra.mxu0 0.0
        %4549 = vmatprep.subr.mxu0 0.0
        %4550 = vmatpush1.msra.mxu0 0.0
        %4551 = vmatprep.subr.mxu0 0.0
        %4552 = vmatpush1.msra.mxu0 0.0
        %4553 = vmatprep.subr.mxu0 0.0
        %4554 = vmatpush1.msra.mxu0 0.0
        %4555 = vmatprep.subr.mxu0 0.0
        %4556 = vmatpush1.msra.mxu0 0.0
        %4557 = vmatprep.subr.mxu0 0.0
        %4558 = vmatpush1.msra.mxu0 0.0
        %4559 = vmatprep.subr.mxu0 0.0
        %4560 = vmatpush1.msra.mxu0 0.0
        %4561 = vmatprep.subr.mxu0 0.0
        %4562 = vmatpush1.msra.mxu0 0.0
        %4563 = vmatprep.subr.mxu0 0.0
        %4564 = vmatpush1.msra.mxu0 0.0
        %4565 = vmatprep.subr.mxu0 0.0
        %4566 = vmatpush1.msra.mxu0 0.0
        %4567 = vmatprep.subr.mxu0 0.0
        %4568 = vmatpush1.msra.mxu0 0.0
        %4569 = vmatprep.subr.mxu0 0.0
        %4570 = vmatpush1.msra.mxu0 0.0
        %4571 = vmatprep.subr.mxu0 0.0
        %4572 = vmatpush1.msra.mxu0 0.0
        %4573 = vmatprep.subr.mxu0 0.0
        %4574 = vmatpush1.msra.mxu0 0.0
        %4575 = vmatprep.subr.mxu0 0.0
        %4576 = vmatpush1.msra.mxu0 0.0
        %4577 = vmatprep.subr.mxu0 0.0
        %4578 = vmatpush1.msra.mxu0 0.0
        %4579 = vmatprep.subr.mxu0 0.0
        %4580 = vmatpush1.msra.mxu0 0.0
        %4581 = vmatprep.subr.mxu0 0.0
        %4582 = vmatpush1.msra.mxu0 0.0
        %4583 = vmatprep.subr.mxu0 0.0
        %4584 = vmatpush1.msra.mxu0 0.0
        %4585 = vmatprep.subr.mxu0 0.0
        %4586 = vmatpush1.msra.mxu0 0.0
        %4587 = vmatprep.subr.mxu0 0.0
        %4588 = vmatpush1.msra.mxu0 0.0
        %4589 = vmatprep.subr.mxu0 0.0
        %4590 = vmatpush1.msra.mxu0 0.0
        %4591 = vmatprep.subr.mxu0 0.0
        %4592 = vmatpush1.msra.mxu0 0.0
        %4593 = vmatprep.subr.mxu0 0.0
        %4594 = vmatpush1.msra.mxu0 0.0
        %4595 = vmatprep.subr.mxu0 0.0
        %4596 = vmatpush1.msra.mxu0 0.0
        %4597 = vmatprep.subr.mxu0 0.0
        %4598 = vmatpush1.msra.mxu0 0.0
        %4599 = vmatprep.subr.mxu0 0.0
        %4600 = vmatpush1.msra.mxu0 0.0
        %4601 = vmatprep.subr.mxu0 0.0
        %4602 = vmatpush1.msra.mxu0 0.0
        %4603 = vmatprep.subr.mxu0 0.0
        %4604 = vmatpush1.msra.mxu0 0.0
        %4605 = vmatprep.mubr.f32.mxu0 0.0
        %4606 = vmatmul.mubr.f32.gmra.mrb[0].mxu0 %v2085
        %v4607 = vpop.f32.mrb[0].mxu0
        %v4608 = vadd.f32 %v2046, %v4607
        %v4609 = vpop.f32.mrb[0].mxu0
        %4610 = vmatprep.mubr.f32.mxu0 0.0
        %4611 = vmatmul.mubr.f32.gmra.mrb[0].mxu0 %v2088
        %v4612 = vpop.f32.mrb[0].mxu0
        %v4613 = vadd.f32 %v2051, %v4612
        %v4614 = vpop.f32.mrb[0].mxu0
        %4615 = vdwg.mxu0
        %v4618 = vcombine.high %v4608, %v4608
        %v4620 = vunpack.c.l.s4 1966171168
        %v4621 = vunpack.c.0.s8 %v4620
        %v4622 = vlaneseq
        %v4623 = vshrl.u32 %v4622, 7
        %v4624 = vsub.s32 %v4621, %v4623
        %v4625 = vrot.slane %v4608, %v4624
        %v4627 = vunpack.c.l.s4 1966171168
        %v4628 = vunpack.c.0.s8 %v4627
        %v4629 = vlaneseq
        %v4630 = vshrl.u32 %v4629, 7
        %v4631 = vsub.s32 %v4628, %v4630
        %v4632 = vrot.slane %v4618, %v4631
        %v4633 = vcombine.high %v4625, %v4625
        %v4634 = vcombine.high %v4632, %v4632
        %v4636 = vunpack.c.l.s4 1966171168
        %v4637 = vunpack.c.0.s8 %v4636
        %v4638 = vlaneseq
        %v4639 = vshrl.u32 %v4638, 7
        %v4640 = vsub.s32 %v4637, %v4639
        %v4641 = vrot.slane %v4625, %v4640
        %v4643 = vunpack.c.l.s4 1966171168
        %v4644 = vunpack.c.0.s8 %v4643
        %v4645 = vlaneseq
        %v4646 = vshrl.u32 %v4645, 7
        %v4647 = vsub.s32 %v4644, %v4646
        %v4648 = vrot.slane %v4632, %v4647
        %v4650 = vunpack.c.l.s4 1966171168
        %v4651 = vunpack.c.0.s8 %v4650
        %v4652 = vlaneseq
        %v4653 = vshrl.u32 %v4652, 7
        %v4654 = vsub.s32 %v4651, %v4653
        %v4655 = vrot.slane %v4633, %v4654
        %v4657 = vunpack.c.l.s4 1966171168
        %v4658 = vunpack.c.0.s8 %v4657
        %v4659 = vlaneseq
        %v4660 = vshrl.u32 %v4659, 7
        %v4661 = vsub.s32 %v4658, %v4660
        %v4662 = vrot.slane %v4634, %v4661
        %v4663 = vcombine.high %v4641, %v4641
        %v4664 = vcombine.high %v4648, %v4648
        %v4665 = vcombine.high %v4655, %v4655
        %v4666 = vcombine.high %v4662, %v4662
        %v4667 = vcombine.high %v4613, %v4613
        %v4669 = vunpack.c.l.s4 1966171168
        %v4670 = vunpack.c.0.s8 %v4669
        %v4671 = vlaneseq
        %v4672 = vshrl.u32 %v4671, 7
        %v4673 = vsub.s32 %v4670, %v4672
        %v4674 = vrot.slane %v4613, %v4673
        %v4676 = vunpack.c.l.s4 1966171168
        %v4677 = vunpack.c.0.s8 %v4676
        %v4678 = vlaneseq
        %v4679 = vshrl.u32 %v4678, 7
        %v4680 = vsub.s32 %v4677, %v4679
        %v4681 = vrot.slane %v4667, %v4680
        %v4682 = vcombine.high %v4674, %v4674
        %v4683 = vcombine.high %v4681, %v4681
        %v4685 = vunpack.c.l.s4 1966171168
        %v4686 = vunpack.c.0.s8 %v4685
        %v4687 = vlaneseq
        %v4688 = vshrl.u32 %v4687, 7
        %v4689 = vsub.s32 %v4686, %v4688
        %v4690 = vrot.slane %v4674, %v4689
        %v4692 = vunpack.c.l.s4 1966171168
        %v4693 = vunpack.c.0.s8 %v4692
        %v4694 = vlaneseq
        %v4695 = vshrl.u32 %v4694, 7
        %v4696 = vsub.s32 %v4693, %v4695
        %v4697 = vrot.slane %v4681, %v4696
        %v4699 = vunpack.c.l.s4 1966171168
        %v4700 = vunpack.c.0.s8 %v4699
        %v4701 = vlaneseq
        %v4702 = vshrl.u32 %v4701, 7
        %v4703 = vsub.s32 %v4700, %v4702
        %v4704 = vrot.slane %v4682, %v4703
        %v4706 = vunpack.c.l.s4 1966171168
        %v4707 = vunpack.c.0.s8 %v4706
        %v4708 = vlaneseq
        %v4709 = vshrl.u32 %v4708, 7
        %v4710 = vsub.s32 %v4707, %v4709
        %v4711 = vrot.slane %v4683, %v4710
        %v4712 = vcombine.high %v4690, %v4690
        %v4713 = vcombine.high %v4697, %v4697
        %v4714 = vcombine.high %v4704, %v4704
        %v4715 = vcombine.high %v4711, %v4711
        %4732 = vst.msk [vmem:[%s204 + $0xb] sm:$0x1] %vm2281, %v4641
        %4733 = vst.msk [vmem:[%s204 + $0x1b] sm:$0x1] %vm2281, %v4655
        %4734 = vst.msk [vmem:[%s204 + $0x2b] sm:$0x1] %vm2281, %v4663
        %4735 = vst.msk [vmem:[%s204 + $0x3b] sm:$0x1] %vm2281, %v4665
        %4736 = vst.msk [vmem:[%s204 + $0x4b] sm:$0x1] %vm2281, %v4648
        %4737 = vst.msk [vmem:[%s204 + $0x5b] sm:$0x1] %vm2281, %v4662
        %4738 = vst.msk [vmem:[%s204 + $0x6b] sm:$0x1] %vm2281, %v4664
        %4739 = vst.msk [vmem:[%s204 + $0x7b] sm:$0x1] %vm2281, %v4666
        %4740 = vst.msk [vmem:[%s204 + $0x8b] sm:$0x1] %vm2281, %v4690
        %4741 = vst.msk [vmem:[%s204 + $0x9b] sm:$0x1] %vm2281, %v4704
        %4742 = vst.msk [vmem:[%s204 + $0xab] sm:$0x1] %vm2281, %v4712
        %4743 = vst.msk [vmem:[%s204 + $0xbb] sm:$0x1] %vm2281, %v4714
        %4744 = vst.msk [vmem:[%s204 + $0xcb] sm:$0x1] %vm2281, %v4697
        %4745 = vst.msk [vmem:[%s204 + $0xdb] sm:$0x1] %vm2281, %v4711
        %4746 = vst.msk [vmem:[%s204 + $0xeb] sm:$0x1] %vm2281, %v4713
        %4747 = vst.msk [vmem:[%s204 + $0xfb] sm:$0x1] %vm2281, %v4715
        %v4748 = vrot.slane %v2024, 4
        %v4749 = vrot.slane %v2026, 3
        %v4750 = vsel %vm2062, %v4749, %v4748
        %v4751 = vrot.slane %v2028, 2
        %v4752 = vsel %vm2065, %v4751, %v4750
        %v4753 = vrot.slane %v2030, 1
        %v4754 = vsel %vm2068, %v4753, %v4752
        %v4755 = vsel %vm2071, %v2032, %v4754
        %v4756 = vrot.slane %v2034, 7
        %v4757 = vsel %vm2074, %v4756, %v4755
        %v4758 = vrot.slane %v2036, 6
        %v4759 = vsel %vm2077, %v4758, %v4757
        %v4760 = vrot.slane %v2038, 5
        %v4761 = vsel %vm2080, %v4760, %v4759
        %4763 = vmatprep.subr.mxu0 0.0
        %4764 = vmatpush1.msra.mxu0 %v4761
        %4765 = vmatprep.subr.mxu0 0.0
        %4766 = vmatpush1.msra.mxu0 0.0
        %4767 = vmatprep.subr.mxu0 0.0
        %4768 = vmatpush1.msra.mxu0 0.0
        %4769 = vmatprep.subr.mxu0 0.0
        %4770 = vmatpush1.msra.mxu0 0.0
        %4771 = vmatprep.subr.mxu0 0.0
        %4772 = vmatpush1.msra.mxu0 0.0
        %4773 = vmatprep.subr.mxu0 0.0
        %4774 = vmatpush1.msra.mxu0 0.0
        %4775 = vmatprep.subr.mxu0 0.0
        %4776 = vmatpush1.msra.mxu0 0.0
        %4777 = vmatprep.subr.mxu0 0.0
        %4778 = vmatpush1.msra.mxu0 0.0
        %4779 = vmatprep.subr.mxu0 0.0
        %4780 = vmatpush1.msra.mxu0 0.0
        %4781 = vmatprep.subr.mxu0 0.0
        %4782 = vmatpush1.msra.mxu0 0.0
        %4783 = vmatprep.subr.mxu0 0.0
        %4784 = vmatpush1.msra.mxu0 0.0
        %4785 = vmatprep.subr.mxu0 0.0
        %4786 = vmatpush1.msra.mxu0 0.0
        %4787 = vmatprep.subr.mxu0 0.0
        %4788 = vmatpush1.msra.mxu0 0.0
        %4789 = vmatprep.subr.mxu0 0.0
        %4790 = vmatpush1.msra.mxu0 0.0
        %4791 = vmatprep.subr.mxu0 0.0
        %4792 = vmatpush1.msra.mxu0 0.0
        %4793 = vmatprep.subr.mxu0 0.0
        %4794 = vmatpush1.msra.mxu0 0.0
        %4795 = vmatprep.subr.mxu0 0.0
        %4796 = vmatpush1.msra.mxu0 0.0
        %4797 = vmatprep.subr.mxu0 0.0
        %4798 = vmatpush1.msra.mxu0 0.0
        %4799 = vmatprep.subr.mxu0 0.0
        %4800 = vmatpush1.msra.mxu0 0.0
        %4801 = vmatprep.subr.mxu0 0.0
        %4802 = vmatpush1.msra.mxu0 0.0
        %4803 = vmatprep.subr.mxu0 0.0
        %4804 = vmatpush1.msra.mxu0 0.0
        %4805 = vmatprep.subr.mxu0 0.0
        %4806 = vmatpush1.msra.mxu0 0.0
        %4807 = vmatprep.subr.mxu0 0.0
        %4808 = vmatpush1.msra.mxu0 0.0
        %4809 = vmatprep.subr.mxu0 0.0
        %4810 = vmatpush1.msra.mxu0 0.0
        %4811 = vmatprep.subr.mxu0 0.0
        %4812 = vmatpush1.msra.mxu0 0.0
        %4813 = vmatprep.subr.mxu0 0.0
        %4814 = vmatpush1.msra.mxu0 0.0
        %4815 = vmatprep.subr.mxu0 0.0
        %4816 = vmatpush1.msra.mxu0 0.0
        %4817 = vmatprep.subr.mxu0 0.0
        %4818 = vmatpush1.msra.mxu0 0.0
        %4819 = vmatprep.subr.mxu0 0.0
        %4820 = vmatpush1.msra.mxu0 0.0
        %4821 = vmatprep.subr.mxu0 0.0
        %4822 = vmatpush1.msra.mxu0 0.0
        %4823 = vmatprep.subr.mxu0 0.0
        %4824 = vmatpush1.msra.mxu0 0.0
        %4825 = vmatprep.subr.mxu0 0.0
        %4826 = vmatpush1.msra.mxu0 0.0
        %4827 = vmatprep.mubr.f32.mxu0 0.0
        %4828 = vmatmul.mubr.f32.gmra.mrb[0].mxu0 %v2085
        %v4829 = vpop.f32.mrb[0].mxu0
        %v4830 = vadd.f32 %v2046, %v4829
        %v4831 = vpop.f32.mrb[0].mxu0
        %4832 = vmatprep.mubr.f32.mxu0 0.0
        %4833 = vmatmul.mubr.f32.gmra.mrb[0].mxu0 %v2088
        %v4834 = vpop.f32.mrb[0].mxu0
        %v4835 = vadd.f32 %v2051, %v4834
        %v4836 = vpop.f32.mrb[0].mxu0
        %4837 = vdwg.mxu0
        %v4840 = vcombine.high %v4830, %v4830
        %v4842 = vunpack.c.l.s4 1966171168
        %v4843 = vunpack.c.0.s8 %v4842
        %v4844 = vlaneseq
        %v4845 = vshrl.u32 %v4844, 7
        %v4846 = vsub.s32 %v4843, %v4845
        %v4847 = vrot.slane %v4830, %v4846
        %v4849 = vunpack.c.l.s4 1966171168
        %v4850 = vunpack.c.0.s8 %v4849
        %v4851 = vlaneseq
        %v4852 = vshrl.u32 %v4851, 7
        %v4853 = vsub.s32 %v4850, %v4852
        %v4854 = vrot.slane %v4840, %v4853
        %v4855 = vcombine.high %v4847, %v4847
        %v4856 = vcombine.high %v4854, %v4854
        %v4858 = vunpack.c.l.s4 1966171168
        %v4859 = vunpack.c.0.s8 %v4858
        %v4860 = vlaneseq
        %v4861 = vshrl.u32 %v4860, 7
        %v4862 = vsub.s32 %v4859, %v4861
        %v4863 = vrot.slane %v4847, %v4862
        %v4865 = vunpack.c.l.s4 1966171168
        %v4866 = vunpack.c.0.s8 %v4865
        %v4867 = vlaneseq
        %v4868 = vshrl.u32 %v4867, 7
        %v4869 = vsub.s32 %v4866, %v4868
        %v4870 = vrot.slane %v4854, %v4869
        %v4872 = vunpack.c.l.s4 1966171168
        %v4873 = vunpack.c.0.s8 %v4872
        %v4874 = vlaneseq
        %v4875 = vshrl.u32 %v4874, 7
        %v4876 = vsub.s32 %v4873, %v4875
        %v4877 = vrot.slane %v4855, %v4876
        %v4879 = vunpack.c.l.s4 1966171168
        %v4880 = vunpack.c.0.s8 %v4879
        %v4881 = vlaneseq
        %v4882 = vshrl.u32 %v4881, 7
        %v4883 = vsub.s32 %v4880, %v4882
        %v4884 = vrot.slane %v4856, %v4883
        %v4885 = vcombine.high %v4863, %v4863
        %v4886 = vcombine.high %v4870, %v4870
        %v4887 = vcombine.high %v4877, %v4877
        %v4888 = vcombine.high %v4884, %v4884
        %v4889 = vcombine.high %v4835, %v4835
        %v4891 = vunpack.c.l.s4 1966171168
        %v4892 = vunpack.c.0.s8 %v4891
        %v4893 = vlaneseq
        %v4894 = vshrl.u32 %v4893, 7
        %v4895 = vsub.s32 %v4892, %v4894
        %v4896 = vrot.slane %v4835, %v4895
        %v4898 = vunpack.c.l.s4 1966171168
        %v4899 = vunpack.c.0.s8 %v4898
        %v4900 = vlaneseq
        %v4901 = vshrl.u32 %v4900, 7
        %v4902 = vsub.s32 %v4899, %v4901
        %v4903 = vrot.slane %v4889, %v4902
        %v4904 = vcombine.high %v4896, %v4896
        %v4905 = vcombine.high %v4903, %v4903
        %v4907 = vunpack.c.l.s4 1966171168
        %v4908 = vunpack.c.0.s8 %v4907
        %v4909 = vlaneseq
        %v4910 = vshrl.u32 %v4909, 7
        %v4911 = vsub.s32 %v4908, %v4910
        %v4912 = vrot.slane %v4896, %v4911
        %v4914 = vunpack.c.l.s4 1966171168
        %v4915 = vunpack.c.0.s8 %v4914
        %v4916 = vlaneseq
        %v4917 = vshrl.u32 %v4916, 7
        %v4918 = vsub.s32 %v4915, %v4917
        %v4919 = vrot.slane %v4903, %v4918
        %v4921 = vunpack.c.l.s4 1966171168
        %v4922 = vunpack.c.0.s8 %v4921
        %v4923 = vlaneseq
        %v4924 = vshrl.u32 %v4923, 7
        %v4925 = vsub.s32 %v4922, %v4924
        %v4926 = vrot.slane %v4904, %v4925
        %v4928 = vunpack.c.l.s4 1966171168
        %v4929 = vunpack.c.0.s8 %v4928
        %v4930 = vlaneseq
        %v4931 = vshrl.u32 %v4930, 7
        %v4932 = vsub.s32 %v4929, %v4931
        %v4933 = vrot.slane %v4905, %v4932
        %v4934 = vcombine.high %v4912, %v4912
        %v4935 = vcombine.high %v4919, %v4919
        %v4936 = vcombine.high %v4926, %v4926
        %v4937 = vcombine.high %v4933, %v4933
        %4954 = vst.msk [vmem:[%s204 + $0xc] sm:$0x1] %vm2281, %v4863
        %4955 = vst.msk [vmem:[%s204 + $0x1c] sm:$0x1] %vm2281, %v4877
        %4956 = vst.msk [vmem:[%s204 + $0x2c] sm:$0x1] %vm2281, %v4885
        %4957 = vst.msk [vmem:[%s204 + $0x3c] sm:$0x1] %vm2281, %v4887
        %4958 = vst.msk [vmem:[%s204 + $0x4c] sm:$0x1] %vm2281, %v4870
        %4959 = vst.msk [vmem:[%s204 + $0x5c] sm:$0x1] %vm2281, %v4884
        %4960 = vst.msk [vmem:[%s204 + $0x6c] sm:$0x1] %vm2281, %v4886
        %4961 = vst.msk [vmem:[%s204 + $0x7c] sm:$0x1] %vm2281, %v4888
        %4962 = vst.msk [vmem:[%s204 + $0x8c] sm:$0x1] %vm2281, %v4912
        %4963 = vst.msk [vmem:[%s204 + $0x9c] sm:$0x1] %vm2281, %v4926
        %4964 = vst.msk [vmem:[%s204 + $0xac] sm:$0x1] %vm2281, %v4934
        %4965 = vst.msk [vmem:[%s204 + $0xbc] sm:$0x1] %vm2281, %v4936
        %4966 = vst.msk [vmem:[%s204 + $0xcc] sm:$0x1] %vm2281, %v4919
        %4967 = vst.msk [vmem:[%s204 + $0xdc] sm:$0x1] %vm2281, %v4933
        %4968 = vst.msk [vmem:[%s204 + $0xec] sm:$0x1] %vm2281, %v4935
        %4969 = vst.msk [vmem:[%s204 + $0xfc] sm:$0x1] %vm2281, %v4937
        %v4970 = vrot.slane %v2024, 5
        %v4971 = vrot.slane %v2026, 4
        %v4972 = vsel %vm2062, %v4971, %v4970
        %v4973 = vrot.slane %v2028, 3
        %v4974 = vsel %vm2065, %v4973, %v4972
        %v4975 = vrot.slane %v2030, 2
        %v4976 = vsel %vm2068, %v4975, %v4974
        %v4977 = vrot.slane %v2032, 1
        %v4978 = vsel %vm2071, %v4977, %v4976
        %v4979 = vsel %vm2074, %v2034, %v4978
        %v4980 = vrot.slane %v2036, 7
        %v4981 = vsel %vm2077, %v4980, %v4979
        %v4982 = vrot.slane %v2038, 6
        %v4983 = vsel %vm2080, %v4982, %v4981
        %4985 = vmatprep.subr.mxu0 0.0
        %4986 = vmatpush1.msra.mxu0 %v4983
        %4987 = vmatprep.subr.mxu0 0.0
        %4988 = vmatpush1.msra.mxu0 0.0
        %4989 = vmatprep.subr.mxu0 0.0
        %4990 = vmatpush1.msra.mxu0 0.0
        %4991 = vmatprep.subr.mxu0 0.0
        %4992 = vmatpush1.msra.mxu0 0.0
        %4993 = vmatprep.subr.mxu0 0.0
        %4994 = vmatpush1.msra.mxu0 0.0
        %4995 = vmatprep.subr.mxu0 0.0
        %4996 = vmatpush1.msra.mxu0 0.0
        %4997 = vmatprep.subr.mxu0 0.0
        %4998 = vmatpush1.msra.mxu0 0.0
        %4999 = vmatprep.subr.mxu0 0.0
        %5000 = vmatpush1.msra.mxu0 0.0
        %5001 = vmatprep.subr.mxu0 0.0
        %5002 = vmatpush1.msra.mxu0 0.0
        %5003 = vmatprep.subr.mxu0 0.0
        %5004 = vmatpush1.msra.mxu0 0.0
        %5005 = vmatprep.subr.mxu0 0.0
        %5006 = vmatpush1.msra.mxu0 0.0
        %5007 = vmatprep.subr.mxu0 0.0
        %5008 = vmatpush1.msra.mxu0 0.0
        %5009 = vmatprep.subr.mxu0 0.0
        %5010 = vmatpush1.msra.mxu0 0.0
        %5011 = vmatprep.subr.mxu0 0.0
        %5012 = vmatpush1.msra.mxu0 0.0
        %5013 = vmatprep.subr.mxu0 0.0
        %5014 = vmatpush1.msra.mxu0 0.0
        %5015 = vmatprep.subr.mxu0 0.0
        %5016 = vmatpush1.msra.mxu0 0.0
        %5017 = vmatprep.subr.mxu0 0.0
        %5018 = vmatpush1.msra.mxu0 0.0
        %5019 = vmatprep.subr.mxu0 0.0
        %5020 = vmatpush1.msra.mxu0 0.0
        %5021 = vmatprep.subr.mxu0 0.0
        %5022 = vmatpush1.msra.mxu0 0.0
        %5023 = vmatprep.subr.mxu0 0.0
        %5024 = vmatpush1.msra.mxu0 0.0
        %5025 = vmatprep.subr.mxu0 0.0
        %5026 = vmatpush1.msra.mxu0 0.0
        %5027 = vmatprep.subr.mxu0 0.0
        %5028 = vmatpush1.msra.mxu0 0.0
        %5029 = vmatprep.subr.mxu0 0.0
        %5030 = vmatpush1.msra.mxu0 0.0
        %5031 = vmatprep.subr.mxu0 0.0
        %5032 = vmatpush1.msra.mxu0 0.0
        %5033 = vmatprep.subr.mxu0 0.0
        %5034 = vmatpush1.msra.mxu0 0.0
        %5035 = vmatprep.subr.mxu0 0.0
        %5036 = vmatpush1.msra.mxu0 0.0
        %5037 = vmatprep.subr.mxu0 0.0
        %5038 = vmatpush1.msra.mxu0 0.0
        %5039 = vmatprep.subr.mxu0 0.0
        %5040 = vmatpush1.msra.mxu0 0.0
        %5041 = vmatprep.subr.mxu0 0.0
        %5042 = vmatpush1.msra.mxu0 0.0
        %5043 = vmatprep.subr.mxu0 0.0
        %5044 = vmatpush1.msra.mxu0 0.0
        %5045 = vmatprep.subr.mxu0 0.0
        %5046 = vmatpush1.msra.mxu0 0.0
        %5047 = vmatprep.subr.mxu0 0.0
        %5048 = vmatpush1.msra.mxu0 0.0
        %5049 = vmatprep.mubr.f32.mxu0 0.0
        %5050 = vmatmul.mubr.f32.gmra.mrb[0].mxu0 %v2085
        %v5051 = vpop.f32.mrb[0].mxu0
        %v5052 = vadd.f32 %v2046, %v5051
        %v5053 = vpop.f32.mrb[0].mxu0
        %5054 = vmatprep.mubr.f32.mxu0 0.0
        %5055 = vmatmul.mubr.f32.gmra.mrb[0].mxu0 %v2088
        %v5056 = vpop.f32.mrb[0].mxu0
        %v5057 = vadd.f32 %v2051, %v5056
        %v5058 = vpop.f32.mrb[0].mxu0
        %5059 = vdwg.mxu0
        %v5062 = vcombine.high %v5052, %v5052
        %v5064 = vunpack.c.l.s4 1966171168
        %v5065 = vunpack.c.0.s8 %v5064
        %v5066 = vlaneseq
        %v5067 = vshrl.u32 %v5066, 7
        %v5068 = vsub.s32 %v5065, %v5067
        %v5069 = vrot.slane %v5052, %v5068
        %v5071 = vunpack.c.l.s4 1966171168
        %v5072 = vunpack.c.0.s8 %v5071
        %v5073 = vlaneseq
        %v5074 = vshrl.u32 %v5073, 7
        %v5075 = vsub.s32 %v5072, %v5074
        %v5076 = vrot.slane %v5062, %v5075
        %v5077 = vcombine.high %v5069, %v5069
        %v5078 = vcombine.high %v5076, %v5076
        %v5080 = vunpack.c.l.s4 1966171168
        %v5081 = vunpack.c.0.s8 %v5080
        %v5082 = vlaneseq
        %v5083 = vshrl.u32 %v5082, 7
        %v5084 = vsub.s32 %v5081, %v5083
        %v5085 = vrot.slane %v5069, %v5084
        %v5087 = vunpack.c.l.s4 1966171168
        %v5088 = vunpack.c.0.s8 %v5087
        %v5089 = vlaneseq
        %v5090 = vshrl.u32 %v5089, 7
        %v5091 = vsub.s32 %v5088, %v5090
        %v5092 = vrot.slane %v5076, %v5091
        %v5094 = vunpack.c.l.s4 1966171168
        %v5095 = vunpack.c.0.s8 %v5094
        %v5096 = vlaneseq
        %v5097 = vshrl.u32 %v5096, 7
        %v5098 = vsub.s32 %v5095, %v5097
        %v5099 = vrot.slane %v5077, %v5098
        %v5101 = vunpack.c.l.s4 1966171168
        %v5102 = vunpack.c.0.s8 %v5101
        %v5103 = vlaneseq
        %v5104 = vshrl.u32 %v5103, 7
        %v5105 = vsub.s32 %v5102, %v5104
        %v5106 = vrot.slane %v5078, %v5105
        %v5107 = vcombine.high %v5085, %v5085
        %v5108 = vcombine.high %v5092, %v5092
        %v5109 = vcombine.high %v5099, %v5099
        %v5110 = vcombine.high %v5106, %v5106
        %v5111 = vcombine.high %v5057, %v5057
        %v5113 = vunpack.c.l.s4 1966171168
        %v5114 = vunpack.c.0.s8 %v5113
        %v5115 = vlaneseq
        %v5116 = vshrl.u32 %v5115, 7
        %v5117 = vsub.s32 %v5114, %v5116
        %v5118 = vrot.slane %v5057, %v5117
        %v5120 = vunpack.c.l.s4 1966171168
        %v5121 = vunpack.c.0.s8 %v5120
        %v5122 = vlaneseq
        %v5123 = vshrl.u32 %v5122, 7
        %v5124 = vsub.s32 %v5121, %v5123
        %v5125 = vrot.slane %v5111, %v5124
        %v5126 = vcombine.high %v5118, %v5118
        %v5127 = vcombine.high %v5125, %v5125
        %v5129 = vunpack.c.l.s4 1966171168
        %v5130 = vunpack.c.0.s8 %v5129
        %v5131 = vlaneseq
        %v5132 = vshrl.u32 %v5131, 7
        %v5133 = vsub.s32 %v5130, %v5132
        %v5134 = vrot.slane %v5118, %v5133
        %v5136 = vunpack.c.l.s4 1966171168
        %v5137 = vunpack.c.0.s8 %v5136
        %v5138 = vlaneseq
        %v5139 = vshrl.u32 %v5138, 7
        %v5140 = vsub.s32 %v5137, %v5139
        %v5141 = vrot.slane %v5125, %v5140
        %v5143 = vunpack.c.l.s4 1966171168
        %v5144 = vunpack.c.0.s8 %v5143
        %v5145 = vlaneseq
        %v5146 = vshrl.u32 %v5145, 7
        %v5147 = vsub.s32 %v5144, %v5146
        %v5148 = vrot.slane %v5126, %v5147
        %v5150 = vunpack.c.l.s4 1966171168
        %v5151 = vunpack.c.0.s8 %v5150
        %v5152 = vlaneseq
        %v5153 = vshrl.u32 %v5152, 7
        %v5154 = vsub.s32 %v5151, %v5153
        %v5155 = vrot.slane %v5127, %v5154
        %v5156 = vcombine.high %v5134, %v5134
        %v5157 = vcombine.high %v5141, %v5141
        %v5158 = vcombine.high %v5148, %v5148
        %v5159 = vcombine.high %v5155, %v5155
        %5176 = vst.msk [vmem:[%s204 + $0xd] sm:$0x1] %vm2281, %v5085
        %5177 = vst.msk [vmem:[%s204 + $0x1d] sm:$0x1] %vm2281, %v5099
        %5178 = vst.msk [vmem:[%s204 + $0x2d] sm:$0x1] %vm2281, %v5107
        %5179 = vst.msk [vmem:[%s204 + $0x3d] sm:$0x1] %vm2281, %v5109
        %5180 = vst.msk [vmem:[%s204 + $0x4d] sm:$0x1] %vm2281, %v5092
        %5181 = vst.msk [vmem:[%s204 + $0x5d] sm:$0x1] %vm2281, %v5106
        %5182 = vst.msk [vmem:[%s204 + $0x6d] sm:$0x1] %vm2281, %v5108
        %5183 = vst.msk [vmem:[%s204 + $0x7d] sm:$0x1] %vm2281, %v5110
        %5184 = vst.msk [vmem:[%s204 + $0x8d] sm:$0x1] %vm2281, %v5134
        %5185 = vst.msk [vmem:[%s204 + $0x9d] sm:$0x1] %vm2281, %v5148
        %5186 = vst.msk [vmem:[%s204 + $0xad] sm:$0x1] %vm2281, %v5156
        %5187 = vst.msk [vmem:[%s204 + $0xbd] sm:$0x1] %vm2281, %v5158
        %5188 = vst.msk [vmem:[%s204 + $0xcd] sm:$0x1] %vm2281, %v5141
        %5189 = vst.msk [vmem:[%s204 + $0xdd] sm:$0x1] %vm2281, %v5155
        %5190 = vst.msk [vmem:[%s204 + $0xed] sm:$0x1] %vm2281, %v5157
        %5191 = vst.msk [vmem:[%s204 + $0xfd] sm:$0x1] %vm2281, %v5159
        %v5192 = vrot.slane %v2024, 6
        %v5193 = vrot.slane %v2026, 5
        %v5194 = vsel %vm2062, %v5193, %v5192
        %v5195 = vrot.slane %v2028, 4
        %v5196 = vsel %vm2065, %v5195, %v5194
        %v5197 = vrot.slane %v2030, 3
        %v5198 = vsel %vm2068, %v5197, %v5196
        %v5199 = vrot.slane %v2032, 2
        %v5200 = vsel %vm2071, %v5199, %v5198
        %v5201 = vrot.slane %v2034, 1
        %v5202 = vsel %vm2074, %v5201, %v5200
        %v5203 = vsel %vm2077, %v2036, %v5202
        %v5204 = vrot.slane %v2038, 7
        %v5205 = vsel %vm2080, %v5204, %v5203
        %5207 = vmatprep.subr.mxu0 0.0
        %5208 = vmatpush1.msra.mxu0 %v5205
        %5209 = vmatprep.subr.mxu0 0.0
        %5210 = vmatpush1.msra.mxu0 0.0
        %5211 = vmatprep.subr.mxu0 0.0
        %5212 = vmatpush1.msra.mxu0 0.0
        %5213 = vmatprep.subr.mxu0 0.0
        %5214 = vmatpush1.msra.mxu0 0.0
        %5215 = vmatprep.subr.mxu0 0.0
        %5216 = vmatpush1.msra.mxu0 0.0
        %5217 = vmatprep.subr.mxu0 0.0
        %5218 = vmatpush1.msra.mxu0 0.0
        %5219 = vmatprep.subr.mxu0 0.0
        %5220 = vmatpush1.msra.mxu0 0.0
        %5221 = vmatprep.subr.mxu0 0.0
        %5222 = vmatpush1.msra.mxu0 0.0
        %5223 = vmatprep.subr.mxu0 0.0
        %5224 = vmatpush1.msra.mxu0 0.0
        %5225 = vmatprep.subr.mxu0 0.0
        %5226 = vmatpush1.msra.mxu0 0.0
        %5227 = vmatprep.subr.mxu0 0.0
        %5228 = vmatpush1.msra.mxu0 0.0
        %5229 = vmatprep.subr.mxu0 0.0
        %5230 = vmatpush1.msra.mxu0 0.0
        %5231 = vmatprep.subr.mxu0 0.0
        %5232 = vmatpush1.msra.mxu0 0.0
        %5233 = vmatprep.subr.mxu0 0.0
        %5234 = vmatpush1.msra.mxu0 0.0
        %5235 = vmatprep.subr.mxu0 0.0
        %5236 = vmatpush1.msra.mxu0 0.0
        %5237 = vmatprep.subr.mxu0 0.0
        %5238 = vmatpush1.msra.mxu0 0.0
        %5239 = vmatprep.subr.mxu0 0.0
        %5240 = vmatpush1.msra.mxu0 0.0
        %5241 = vmatprep.subr.mxu0 0.0
        %5242 = vmatpush1.msra.mxu0 0.0
        %5243 = vmatprep.subr.mxu0 0.0
        %5244 = vmatpush1.msra.mxu0 0.0
        %5245 = vmatprep.subr.mxu0 0.0
        %5246 = vmatpush1.msra.mxu0 0.0
        %5247 = vmatprep.subr.mxu0 0.0
        %5248 = vmatpush1.msra.mxu0 0.0
        %5249 = vmatprep.subr.mxu0 0.0
        %5250 = vmatpush1.msra.mxu0 0.0
        %5251 = vmatprep.subr.mxu0 0.0
        %5252 = vmatpush1.msra.mxu0 0.0
        %5253 = vmatprep.subr.mxu0 0.0
        %5254 = vmatpush1.msra.mxu0 0.0
        %5255 = vmatprep.subr.mxu0 0.0
        %5256 = vmatpush1.msra.mxu0 0.0
        %5257 = vmatprep.subr.mxu0 0.0
        %5258 = vmatpush1.msra.mxu0 0.0
        %5259 = vmatprep.subr.mxu0 0.0
        %5260 = vmatpush1.msra.mxu0 0.0
        %5261 = vmatprep.subr.mxu0 0.0
        %5262 = vmatpush1.msra.mxu0 0.0
        %5263 = vmatprep.subr.mxu0 0.0
        %5264 = vmatpush1.msra.mxu0 0.0
        %5265 = vmatprep.subr.mxu0 0.0
        %5266 = vmatpush1.msra.mxu0 0.0
        %5267 = vmatprep.subr.mxu0 0.0
        %5268 = vmatpush1.msra.mxu0 0.0
        %5269 = vmatprep.subr.mxu0 0.0
        %5270 = vmatpush1.msra.mxu0 0.0
        %5271 = vmatprep.mubr.f32.mxu0 0.0
        %5272 = vmatmul.mubr.f32.gmra.mrb[0].mxu0 %v2085
        %v5273 = vpop.f32.mrb[0].mxu0
        %v5274 = vadd.f32 %v2046, %v5273
        %v5275 = vpop.f32.mrb[0].mxu0
        %5276 = vmatprep.mubr.f32.mxu0 0.0
        %5277 = vmatmul.mubr.f32.gmra.mrb[0].mxu0 %v2088
        %v5278 = vpop.f32.mrb[0].mxu0
        %v5279 = vadd.f32 %v2051, %v5278
        %v5280 = vpop.f32.mrb[0].mxu0
        %5281 = vdwg.mxu0
        %v5284 = vcombine.high %v5274, %v5274
        %v5286 = vunpack.c.l.s4 1966171168
        %v5287 = vunpack.c.0.s8 %v5286
        %v5288 = vlaneseq
        %v5289 = vshrl.u32 %v5288, 7
        %v5290 = vsub.s32 %v5287, %v5289
        %v5291 = vrot.slane %v5274, %v5290
        %v5293 = vunpack.c.l.s4 1966171168
        %v5294 = vunpack.c.0.s8 %v5293
        %v5295 = vlaneseq
        %v5296 = vshrl.u32 %v5295, 7
        %v5297 = vsub.s32 %v5294, %v5296
        %v5298 = vrot.slane %v5284, %v5297
        %v5299 = vcombine.high %v5291, %v5291
        %v5300 = vcombine.high %v5298, %v5298
        %v5302 = vunpack.c.l.s4 1966171168
        %v5303 = vunpack.c.0.s8 %v5302
        %v5304 = vlaneseq
        %v5305 = vshrl.u32 %v5304, 7
        %v5306 = vsub.s32 %v5303, %v5305
        %v5307 = vrot.slane %v5291, %v5306
        %v5309 = vunpack.c.l.s4 1966171168
        %v5310 = vunpack.c.0.s8 %v5309
        %v5311 = vlaneseq
        %v5312 = vshrl.u32 %v5311, 7
        %v5313 = vsub.s32 %v5310, %v5312
        %v5314 = vrot.slane %v5298, %v5313
        %v5316 = vunpack.c.l.s4 1966171168
        %v5317 = vunpack.c.0.s8 %v5316
        %v5318 = vlaneseq
        %v5319 = vshrl.u32 %v5318, 7
        %v5320 = vsub.s32 %v5317, %v5319
        %v5321 = vrot.slane %v5299, %v5320
        %v5323 = vunpack.c.l.s4 1966171168
        %v5324 = vunpack.c.0.s8 %v5323
        %v5325 = vlaneseq
        %v5326 = vshrl.u32 %v5325, 7
        %v5327 = vsub.s32 %v5324, %v5326
        %v5328 = vrot.slane %v5300, %v5327
        %v5329 = vcombine.high %v5307, %v5307
        %v5330 = vcombine.high %v5314, %v5314
        %v5331 = vcombine.high %v5321, %v5321
        %v5332 = vcombine.high %v5328, %v5328
        %v5333 = vcombine.high %v5279, %v5279
        %v5335 = vunpack.c.l.s4 1966171168
        %v5336 = vunpack.c.0.s8 %v5335
        %v5337 = vlaneseq
        %v5338 = vshrl.u32 %v5337, 7
        %v5339 = vsub.s32 %v5336, %v5338
        %v5340 = vrot.slane %v5279, %v5339
        %v5342 = vunpack.c.l.s4 1966171168
        %v5343 = vunpack.c.0.s8 %v5342
        %v5344 = vlaneseq
        %v5345 = vshrl.u32 %v5344, 7
        %v5346 = vsub.s32 %v5343, %v5345
        %v5347 = vrot.slane %v5333, %v5346
        %v5348 = vcombine.high %v5340, %v5340
        %v5349 = vcombine.high %v5347, %v5347
        %v5351 = vunpack.c.l.s4 1966171168
        %v5352 = vunpack.c.0.s8 %v5351
        %v5353 = vlaneseq
        %v5354 = vshrl.u32 %v5353, 7
        %v5355 = vsub.s32 %v5352, %v5354
        %v5356 = vrot.slane %v5340, %v5355
        %v5358 = vunpack.c.l.s4 1966171168
        %v5359 = vunpack.c.0.s8 %v5358
        %v5360 = vlaneseq
        %v5361 = vshrl.u32 %v5360, 7
        %v5362 = vsub.s32 %v5359, %v5361
        %v5363 = vrot.slane %v5347, %v5362
        %v5365 = vunpack.c.l.s4 1966171168
        %v5366 = vunpack.c.0.s8 %v5365
        %v5367 = vlaneseq
        %v5368 = vshrl.u32 %v5367, 7
        %v5369 = vsub.s32 %v5366, %v5368
        %v5370 = vrot.slane %v5348, %v5369
        %v5372 = vunpack.c.l.s4 1966171168
        %v5373 = vunpack.c.0.s8 %v5372
        %v5374 = vlaneseq
        %v5375 = vshrl.u32 %v5374, 7
        %v5376 = vsub.s32 %v5373, %v5375
        %v5377 = vrot.slane %v5349, %v5376
        %v5378 = vcombine.high %v5356, %v5356
        %v5379 = vcombine.high %v5363, %v5363
        %v5380 = vcombine.high %v5370, %v5370
        %v5381 = vcombine.high %v5377, %v5377
        %5398 = vst.msk [vmem:[%s204 + $0xe] sm:$0x1] %vm2281, %v5307
        %5399 = vst.msk [vmem:[%s204 + $0x1e] sm:$0x1] %vm2281, %v5321
        %5400 = vst.msk [vmem:[%s204 + $0x2e] sm:$0x1] %vm2281, %v5329
        %5401 = vst.msk [vmem:[%s204 + $0x3e] sm:$0x1] %vm2281, %v5331
        %5402 = vst.msk [vmem:[%s204 + $0x4e] sm:$0x1] %vm2281, %v5314
        %5403 = vst.msk [vmem:[%s204 + $0x5e] sm:$0x1] %vm2281, %v5328
        %5404 = vst.msk [vmem:[%s204 + $0x6e] sm:$0x1] %vm2281, %v5330
        %5405 = vst.msk [vmem:[%s204 + $0x7e] sm:$0x1] %vm2281, %v5332
        %5406 = vst.msk [vmem:[%s204 + $0x8e] sm:$0x1] %vm2281, %v5356
        %5407 = vst.msk [vmem:[%s204 + $0x9e] sm:$0x1] %vm2281, %v5370
        %5408 = vst.msk [vmem:[%s204 + $0xae] sm:$0x1] %vm2281, %v5378
        %5409 = vst.msk [vmem:[%s204 + $0xbe] sm:$0x1] %vm2281, %v5380
        %5410 = vst.msk [vmem:[%s204 + $0xce] sm:$0x1] %vm2281, %v5363
        %5411 = vst.msk [vmem:[%s204 + $0xde] sm:$0x1] %vm2281, %v5377
        %5412 = vst.msk [vmem:[%s204 + $0xee] sm:$0x1] %vm2281, %v5379
        %5413 = vst.msk [vmem:[%s204 + $0xfe] sm:$0x1] %vm2281, %v5381
        %v5414 = vrot.slane %v2024, 7
        %v5415 = vrot.slane %v2026, 6
        %v5416 = vsel %vm2062, %v5415, %v5414
        %v5417 = vrot.slane %v2028, 5
        %v5418 = vsel %vm2065, %v5417, %v5416
        %v5419 = vrot.slane %v2030, 4
        %v5420 = vsel %vm2068, %v5419, %v5418
        %v5421 = vrot.slane %v2032, 3
        %v5422 = vsel %vm2071, %v5421, %v5420
        %v5423 = vrot.slane %v2034, 2
        %v5424 = vsel %vm2074, %v5423, %v5422
        %v5425 = vrot.slane %v2036, 1
        %v5426 = vsel %vm2077, %v5425, %v5424
        %v5427 = vsel %vm2080, %v2038, %v5426
        %5429 = vmatprep.subr.mxu0 0.0
        %5430 = vmatpush1.msra.mxu0 %v5427
        %5431 = vmatprep.subr.mxu0 0.0
        %5432 = vmatpush1.msra.mxu0 0.0
        %5433 = vmatprep.subr.mxu0 0.0
        %5434 = vmatpush1.msra.mxu0 0.0
        %5435 = vmatprep.subr.mxu0 0.0
        %5436 = vmatpush1.msra.mxu0 0.0
        %5437 = vmatprep.subr.mxu0 0.0
        %5438 = vmatpush1.msra.mxu0 0.0
        %5439 = vmatprep.subr.mxu0 0.0
        %5440 = vmatpush1.msra.mxu0 0.0
        %5441 = vmatprep.subr.mxu0 0.0
        %5442 = vmatpush1.msra.mxu0 0.0
        %5443 = vmatprep.subr.mxu0 0.0
        %5444 = vmatpush1.msra.mxu0 0.0
        %5445 = vmatprep.subr.mxu0 0.0
        %5446 = vmatpush1.msra.mxu0 0.0
        %5447 = vmatprep.subr.mxu0 0.0
        %5448 = vmatpush1.msra.mxu0 0.0
        %5449 = vmatprep.subr.mxu0 0.0
        %5450 = vmatpush1.msra.mxu0 0.0
        %5451 = vmatprep.subr.mxu0 0.0
        %5452 = vmatpush1.msra.mxu0 0.0
        %5453 = vmatprep.subr.mxu0 0.0
        %5454 = vmatpush1.msra.mxu0 0.0
        %5455 = vmatprep.subr.mxu0 0.0
        %5456 = vmatpush1.msra.mxu0 0.0
        %5457 = vmatprep.subr.mxu0 0.0
        %5458 = vmatpush1.msra.mxu0 0.0
        %5459 = vmatprep.subr.mxu0 0.0
        %5460 = vmatpush1.msra.mxu0 0.0
        %5461 = vmatprep.subr.mxu0 0.0
        %5462 = vmatpush1.msra.mxu0 0.0
        %5463 = vmatprep.subr.mxu0 0.0
        %5464 = vmatpush1.msra.mxu0 0.0
        %5465 = vmatprep.subr.mxu0 0.0
        %5466 = vmatpush1.msra.mxu0 0.0
        %5467 = vmatprep.subr.mxu0 0.0
        %5468 = vmatpush1.msra.mxu0 0.0
        %5469 = vmatprep.subr.mxu0 0.0
        %5470 = vmatpush1.msra.mxu0 0.0
        %5471 = vmatprep.subr.mxu0 0.0
        %5472 = vmatpush1.msra.mxu0 0.0
        %5473 = vmatprep.subr.mxu0 0.0
        %5474 = vmatpush1.msra.mxu0 0.0
        %5475 = vmatprep.subr.mxu0 0.0
        %5476 = vmatpush1.msra.mxu0 0.0
        %5477 = vmatprep.subr.mxu0 0.0
        %5478 = vmatpush1.msra.mxu0 0.0
        %5479 = vmatprep.subr.mxu0 0.0
        %5480 = vmatpush1.msra.mxu0 0.0
        %5481 = vmatprep.subr.mxu0 0.0
        %5482 = vmatpush1.msra.mxu0 0.0
        %5483 = vmatprep.subr.mxu0 0.0
        %5484 = vmatpush1.msra.mxu0 0.0
        %5485 = vmatprep.subr.mxu0 0.0
        %5486 = vmatpush1.msra.mxu0 0.0
        %5487 = vmatprep.subr.mxu0 0.0
        %5488 = vmatpush1.msra.mxu0 0.0
        %5489 = vmatprep.subr.mxu0 0.0
        %5490 = vmatpush1.msra.mxu0 0.0
        %5491 = vmatprep.subr.mxu0 0.0
        %5492 = vmatpush1.msra.mxu0 0.0
        %5493 = vmatprep.mubr.f32.mxu0 0.0
        %5494 = vmatmul.mubr.f32.gmra.mrb[0].mxu0 %v2085
        %v5495 = vpop.f32.mrb[0].mxu0
        %v5496 = vadd.f32 %v2046, %v5495
        %v5497 = vpop.f32.mrb[0].mxu0
        %5498 = vmatprep.mubr.f32.mxu0 0.0
        %5499 = vmatmul.mubr.f32.gmra.mrb[0].mxu0 %v2088
        %v5500 = vpop.f32.mrb[0].mxu0
        %v5501 = vadd.f32 %v2051, %v5500
        %v5502 = vpop.f32.mrb[0].mxu0
        %5503 = vdwg.mxu0
        %v5506 = vcombine.high %v5496, %v5496
        %v5508 = vunpack.c.l.s4 1966171168
        %v5509 = vunpack.c.0.s8 %v5508
        %v5510 = vlaneseq
        %v5511 = vshrl.u32 %v5510, 7
        %v5512 = vsub.s32 %v5509, %v5511
        %v5513 = vrot.slane %v5496, %v5512
        %v5515 = vunpack.c.l.s4 1966171168
        %v5516 = vunpack.c.0.s8 %v5515
        %v5517 = vlaneseq
        %v5518 = vshrl.u32 %v5517, 7
        %v5519 = vsub.s32 %v5516, %v5518
        %v5520 = vrot.slane %v5506, %v5519
        %v5521 = vcombine.high %v5513, %v5513
        %v5522 = vcombine.high %v5520, %v5520
        %v5524 = vunpack.c.l.s4 1966171168
        %v5525 = vunpack.c.0.s8 %v5524
        %v5526 = vlaneseq
        %v5527 = vshrl.u32 %v5526, 7
        %v5528 = vsub.s32 %v5525, %v5527
        %v5529 = vrot.slane %v5513, %v5528
        %v5531 = vunpack.c.l.s4 1966171168
        %v5532 = vunpack.c.0.s8 %v5531
        %v5533 = vlaneseq
        %v5534 = vshrl.u32 %v5533, 7
        %v5535 = vsub.s32 %v5532, %v5534
        %v5536 = vrot.slane %v5520, %v5535
        %v5538 = vunpack.c.l.s4 1966171168
        %v5539 = vunpack.c.0.s8 %v5538
        %v5540 = vlaneseq
        %v5541 = vshrl.u32 %v5540, 7
        %v5542 = vsub.s32 %v5539, %v5541
        %v5543 = vrot.slane %v5521, %v5542
        %v5545 = vunpack.c.l.s4 1966171168
        %v5546 = vunpack.c.0.s8 %v5545
        %v5547 = vlaneseq
        %v5548 = vshrl.u32 %v5547, 7
        %v5549 = vsub.s32 %v5546, %v5548
        %v5550 = vrot.slane %v5522, %v5549
        %v5551 = vcombine.high %v5529, %v5529
        %v5552 = vcombine.high %v5536, %v5536
        %v5553 = vcombine.high %v5543, %v5543
        %v5554 = vcombine.high %v5550, %v5550
        %v5555 = vcombine.high %v5501, %v5501
        %v5557 = vunpack.c.l.s4 1966171168
        %v5558 = vunpack.c.0.s8 %v5557
        %v5559 = vlaneseq
        %v5560 = vshrl.u32 %v5559, 7
        %v5561 = vsub.s32 %v5558, %v5560
        %v5562 = vrot.slane %v5501, %v5561
        %v5564 = vunpack.c.l.s4 1966171168
        %v5565 = vunpack.c.0.s8 %v5564
        %v5566 = vlaneseq
        %v5567 = vshrl.u32 %v5566, 7
        %v5568 = vsub.s32 %v5565, %v5567
        %v5569 = vrot.slane %v5555, %v5568
        %v5570 = vcombine.high %v5562, %v5562
        %v5571 = vcombine.high %v5569, %v5569
        %v5573 = vunpack.c.l.s4 1966171168
        %v5574 = vunpack.c.0.s8 %v5573
        %v5575 = vlaneseq
        %v5576 = vshrl.u32 %v5575, 7
        %v5577 = vsub.s32 %v5574, %v5576
        %v5578 = vrot.slane %v5562, %v5577
        %v5580 = vunpack.c.l.s4 1966171168
        %v5581 = vunpack.c.0.s8 %v5580
        %v5582 = vlaneseq
        %v5583 = vshrl.u32 %v5582, 7
        %v5584 = vsub.s32 %v5581, %v5583
        %v5585 = vrot.slane %v5569, %v5584
        %v5587 = vunpack.c.l.s4 1966171168
        %v5588 = vunpack.c.0.s8 %v5587
        %v5589 = vlaneseq
        %v5590 = vshrl.u32 %v5589, 7
        %v5591 = vsub.s32 %v5588, %v5590
        %v5592 = vrot.slane %v5570, %v5591
        %v5594 = vunpack.c.l.s4 1966171168
        %v5595 = vunpack.c.0.s8 %v5594
        %v5596 = vlaneseq
        %v5597 = vshrl.u32 %v5596, 7
        %v5598 = vsub.s32 %v5595, %v5597
        %v5599 = vrot.slane %v5571, %v5598
        %v5600 = vcombine.high %v5578, %v5578
        %v5601 = vcombine.high %v5585, %v5585
        %v5602 = vcombine.high %v5592, %v5592
        %v5603 = vcombine.high %v5599, %v5599
        %5620 = vst.msk [vmem:[%s204 + $0xf] sm:$0x1] %vm2281, %v5529
        %5621 = vst.msk [vmem:[%s204 + $0x1f] sm:$0x1] %vm2281, %v5543
        %5622 = vst.msk [vmem:[%s204 + $0x2f] sm:$0x1] %vm2281, %v5551
        %5623 = vst.msk [vmem:[%s204 + $0x3f] sm:$0x1] %vm2281, %v5553
        %5624 = vst.msk [vmem:[%s204 + $0x4f] sm:$0x1] %vm2281, %v5536
        %5625 = vst.msk [vmem:[%s204 + $0x5f] sm:$0x1] %vm2281, %v5550
        %5626 = vst.msk [vmem:[%s204 + $0x6f] sm:$0x1] %vm2281, %v5552
        %5627 = vst.msk [vmem:[%s204 + $0x7f] sm:$0x1] %vm2281, %v5554
        %5628 = vst.msk [vmem:[%s204 + $0x8f] sm:$0x1] %vm2281, %v5578
        %5629 = vst.msk [vmem:[%s204 + $0x9f] sm:$0x1] %vm2281, %v5592
        %5630 = vst.msk [vmem:[%s204 + $0xaf] sm:$0x1] %vm2281, %v5600
        %5631 = vst.msk [vmem:[%s204 + $0xbf] sm:$0x1] %vm2281, %v5602
        %5632 = vst.msk [vmem:[%s204 + $0xcf] sm:$0x1] %vm2281, %v5585
        %5633 = vst.msk [vmem:[%s204 + $0xdf] sm:$0x1] %vm2281, %v5599
        %5634 = vst.msk [vmem:[%s204 + $0xef] sm:$0x1] %vm2281, %v5601
        %5635 = vst.msk [vmem:[%s204 + $0xff] sm:$0x1] %vm2281, %v5603
        %s5636 = sand.u32 %s129, 1
        %s5637 = scalar_lea.sflag [#allocation3], %s5636
        %s5638 = sand.u32 %s129, 1
        %s5639 = smul.addr %s5638, 256
        %s5640 = scalar_lea.vmem [#allocation2], %s5639
        // Predicated region
        $region37: #{tpu_custom_call.1} parent=35 // pred_check
          %p5641 = pneg %p139
        $region38: #{tpu_custom_call.1} parent=35 // pred_check_branch
          %5643 = sbr.rel (%p5641) target = $region40
        $region39: #{tpu_custom_call.1} parent=35 // pred_region
          #allocation5 [shape = 'u32[6]{0}', space=smem, size = 0x18, scoped, tag = 'DMA stride descriptor']
          %s5644 = smul.u32 2, %s23
          %s5646 = ssub.s32 4096, 4096
          %5647 = vsyncadd %s5637, %s5646
          %s5648 = smul.addr %s22, 64
          %s5649 = sadd.s32 %s5644, %s5648
          %s5650 = smul.addr %s5649, 128
          %s5651 = scalar_lea.hbm %s4, %s5650
          %s5653 = sshll.u32 1, 14
          %s5654 = sxor.u32 4294967295, %s5653
          %s5657 = sshll.u32 7, 18
          %s5658 = sxor.u32 4294967295, %s5657
          %s5659 = sand.u32 0, %s5658
          %s5661 = sor.u32 %s5659, 0
          %s5663 = sshll.u32 3, 24
          %s5664 = sxor.u32 4294967295, %s5663
          %s5665 = sand.u32 %s5661, %s5664
          %s5667 = sor.u32 %s5665, 0
          %s5668 = sshll.u32 %s5640, 4
          %s5669 = int_to_ptr.vmem [resolvable:$true] %s5668
          %5675 = sst [smem:[#allocation5]] 256
          %s5676 = scalar_lea.smem [#allocation5], 1
          %5677 = sst [smem:[%s5676]] 512
          %s5678 = scalar_lea.smem [#allocation5], 2
          %5679 = sst [smem:[%s5678]] 2
          %s5680 = scalar_lea.smem [#allocation5], 3
          %5681 = sst [smem:[%s5680]] 128
          %s5682 = scalar_lea.smem [#allocation5], 4
          %5683 = sst [smem:[%s5682]] 128
          %s5684 = scalar_lea.smem [#allocation5], 5
          %5685 = sst [smem:[%s5684]] 8
          %5687 = dma.general %s5669, 4096, %s5651, %s5637, [#allocation4], [#allocation5], %s5667, 0
        $region40: #{tpu_custom_call.1} parent=35 // pred_fallthru
          _
      $region36: #{tpu_custom_call.1} parent=5 // pred_fallthru
        _
      %p5688 = scmp.le.s32.totalorder 2, %s13
      // Predicated region
      $region41: #{tpu_custom_call.1} parent=5 // pred_check
        %p5689 = pneg %p5688
      $region42: #{tpu_custom_call.1} parent=5 // pred_check_branch
        %5691 = sbr.rel (%p5689) target = $region44
      $region43: #{tpu_custom_call.1} parent=5 // pred_region
        %s5692 = ssub.s32 %s13, 2
        // Predicated region
        $region45: #{tpu_custom_call.1} parent=43 // pred_check
          %p5693 = pneg %p145
        $region46: #{tpu_custom_call.1} parent=43 // pred_check_branch
          %5695 = sbr.rel (%p5693) target = $region48
        $region47: #{tpu_custom_call.1} parent=43 // pred_region
          %s5696 = sand.u32 %s130, 1
          %s5697 = scalar_lea.sflag [#allocation3], %s5696
          %s5698 = sand.u32 %s130, 1
          %s5699 = smul.addr %s5698, 256
          %s5700 = scalar_lea.vmem [#allocation2], %s5699
          %5701 = dma.done %s5697, 4096
        $region48: #{tpu_custom_call.1} parent=43 // pred_fallthru
          _
      $region44: #{tpu_custom_call.1} parent=5 // pred_fallthru
        _
    $region6: #{tpu_custom_call.1} parent=1 // loop_footer
      %s17 = sadd.s32 1, %s13
    $region7: #{tpu_custom_call.1} parent=1 // loop_footer_branch
      %12 = sbr.rel target = $region3
    $region8: #{tpu_custom_call.1} parent=1 // loop_exit
      _
    %5702 = vsyncpa [#allocation3], 1
    %s5703 = scalar_lea.sflag [#allocation3], 1
    %5704 = vsyncpa %s5703, 1

</llo_original>
